<compile_context>
chip_gen: v6e
topology: v6e:2x2x1
jax: 0.10.0
libtpu: 0.0.40
codegen_flags: <defaults>
</compile_context>

<pallas_src>
import numpy as np
import jax
import jax.numpy as jnp
from jax import lax
from jax.experimental import pallas as pl
from jax.experimental.pallas import tpu as pltpu


# ----------------------------- parameter glue ------------------------------

def _bn_params(key, c):
    kg, kb, km, kv = jax.random.split(key, 4)
    gamma = 1.0 + 0.1 * jax.random.normal(kg, (c,), jnp.float32)
    beta = 0.1 * jax.random.normal(kb, (c,), jnp.float32)
    mean = 0.1 * jax.random.normal(km, (c,), jnp.float32)
    var = 0.5 + 0.5 * jax.nn.sigmoid(jax.random.normal(kv, (c,), jnp.float32))
    return gamma, beta, mean, var


def _fold_bn(gamma, beta, mean, var, eps=1e-5):
    s = gamma / np.sqrt(var + eps)
    b = beta - mean * s
    return s.astype(np.float32), b.astype(np.float32)


def _shuffle_perm(mid, group):
    # matches create_channel_shuffle_conv_kernel: out[k] = in[(k % cpg)*group + k//cpg]
    if group <= 1:
        return np.arange(mid)
    cpg = mid // group
    return np.array([(k % cpg) * group + k // cpg for k in range(mid)], dtype=np.int64)


# ------------------------------- the kernel --------------------------------

def _make_kernel(Bt, H, W, Cin, Mid, Cmain, ksize, stride, pad, compute_dtype):
    Ho = (H + 2 * pad - ksize) // stride + 1
    Wo = (W + 2 * pad - ksize) // stride + 1
    K = ksize

    def _zero_border(scr, p, h, w):
        # scr: (Bt, h+2p, w+2p, C).  Zero only the halo ring; the interior is
        # fully overwritten every grid step, so the old whole-scratch zero-fill
        # (227% of interior stores) shrinks to ~27%.
        if p == 0:
            return
        bt, hp, wp, c = scr.shape
        scr[:, 0:p, :, :] = jnp.zeros((bt, p, wp, c), jnp.float32)
        scr[:, p + h:hp, :, :] = jnp.zeros((bt, hp - (p + h), wp, c), jnp.float32)
        scr[:, p:p + h, 0:p, :] = jnp.zeros((bt, h, p, c), jnp.float32)
        scr[:, p:p + h, p + w:wp, :] = jnp.zeros((bt, h, wp - (p + w), c), jnp.float32)

    def kernel(x_ref, w1_ref, b1_ref, wdw_ref, b2_ref, w3_ref, b3_ref, o_ref, *scratch):
        if stride == 2:
            dw_scr, xp_scr = scratch
        else:
            (dw_scr,) = scratch

        x = x_ref[...].astype(jnp.float32)                 # (Bt, H, W, Cin)
        xf = x.reshape(Bt * H * W, Cin)                    # batch folded into matmul M

        # ---- branch_main_1: 1x1 (group) conv + BN + ReLU, folded (bf16 MXU, f32 acc)
        t1 = jnp.dot(xf.astype(compute_dtype), w1_ref[...],
                     preferred_element_type=jnp.float32) + b1_ref[...]
        t1 = jnp.maximum(t1, 0.0)                          # (Bt*H*W, Mid) f32

        # ---- depthwise KxK conv + BN (folded), taps evaluated only at output pos.
        _zero_border(dw_scr, pad, H, W)
        dw_scr[:, pad:pad + H, pad:pad + W, :] = t1.reshape(Bt, H, W, Mid)
        acc = jnp.zeros((Bt, Ho, Wo, Mid), jnp.float32)
        for kh in range(K):
            for kw in range(K):
                if stride == 1:
                    win = dw_scr[:, kh:kh + Ho, kw:kw + Wo, :]
                else:
                    # stride-2 subsample via strided reads (no selection matmul)
                    win = dw_scr[:, pl.ds(kh, Ho, stride), pl.ds(kw, Wo, stride), :]
                tap = wdw_ref[kh * K + kw:kh * K + kw + 1, :]      # (1, Mid)
                acc = acc + win * tap
        dw = acc + b2_ref[...]                             # (Bt, Ho, Wo, Mid)
        dwf = dw.reshape(Bt * Ho * Wo, Mid)

        # ---- channel shuffle + branch_main_2: 1x1 group conv + BN, folded
        main = jnp.dot(dwf.astype(compute_dtype), w3_ref[...],
                       preferred_element_type=jnp.float32) + b3_ref[...]

        if stride == 1:
            out = jnp.maximum(main + xf, 0.0)              # relu(x + x_main)
            o_ref[...] = out.reshape(Bt, H, W, Cmain).astype(o_ref.dtype)
        else:
            # ---- branch_proj: AvgPool2d(3,2,1) as 9 shifted strided adds (VPU)
            xp_scr[:, 1:1 + H, 1:1 + W, :] = x
            _zero_border(xp_scr, 1, H, W)
            pool = jnp.zeros((Bt, Ho, Wo, Cin), jnp.float32)
            for kh in range(3):
                for kw in range(3):
                    pool = pool + xp_scr[:, pl.ds(kh, Ho, 2), pl.ds(kw, Wo, 2), :]
            proj = pool * (1.0 / 9.0)
            mainr = jnp.maximum(main, 0.0).reshape(Bt, Ho, Wo, Cmain)
            # single wide store of the channel concat (not two masked sub-stores)
            o_ref[...] = jnp.concatenate([proj, mainr], axis=-1).astype(o_ref.dtype)

    return kernel, Ho, Wo


# ------------------------------ module wrapper ------------------------------

class ShuffleV1BlockPallas:
    def __init__(self, inp, oup, *, group, first_group, mid_channels, ksize, stride,
                 key, compute_dtype=jnp.bfloat16):
        assert stride in (1, 2)
        self.inp, self.oup, self.group = inp, oup, group
        self.mid, self.ksize, self.stride = mid_channels, ksize, stride
        self.pad = ksize // 2
        self.g1 = 1 if first_group else group
        self.outputs = oup - inp if stride == 2 else oup
        self.compute_dtype = compute_dtype
        mid = mid_channels
        assert inp % self.g1 == 0 and mid % self.g1 == 0
        assert mid % group == 0 and self.outputs % group == 0
        if stride == 1:
            assert oup == inp, "stride-1 residual requires oup == inp"

        k1, k2, k3, kb1, kb2, kb3 = jax.random.split(key, 6)
        # raw PyTorch-layout weights (deterministic synthetic init)
        self.w1_raw = 0.2 * jax.random.normal(k1, (mid, inp // self.g1, 1, 1), jnp.float32)
        self.wdw_raw = 0.2 * jax.random.normal(k2, (mid, 1, ksize, ksize), jnp.float32)
        self.w3_raw = 0.2 * jax.random.normal(k3, (self.outputs, mid // group, 1, 1), jnp.float32)
        self.bn1 = _bn_params(kb1, mid)
        self.bn2 = _bn_params(kb2, mid)
        self.bn3 = _bn_params(kb3, self.outputs)
        self.perm = _shuffle_perm(mid, group)

        # ---- fold group structure + shuffle + BN into dense mats (numpy glue) ----
        w1np = np.asarray(self.w1_raw)[:, :, 0, 0]          # (mid, inp/g1)
        ipg, opg = inp // self.g1, mid // self.g1
        W1 = np.zeros((inp, mid), np.float32)
        for o in range(mid):
            go = o // opg
            W1[go * ipg:(go + 1) * ipg, o] = w1np[o]
        s1, b1 = _fold_bn(*[np.asarray(a) for a in self.bn1])
        self.w1 = jnp.asarray(W1 * s1[None, :]).astype(compute_dtype)   # MXU input
        self.b1 = jnp.asarray(b1[None, :])                              # f32

        wdwnp = np.asarray(self.wdw_raw)[:, 0, :, :]        # (mid, K, K)
        s2, b2 = _fold_bn(*[np.asarray(a) for a in self.bn2])
        WD = wdwnp.reshape(mid, ksize * ksize).T * s2[None, :]   # (K*K, mid)
        self.wdw = jnp.asarray(WD.astype(np.float32))       # keep f32 (VPU path, v5e)
        self.b2 = jnp.asarray(b2[None, :])

        w3np = np.asarray(self.w3_raw)[:, :, 0, 0]          # (outputs, mid/group)
        mpg, opg3 = mid // group, self.outputs // group
        W3s = np.zeros((mid, self.outputs), np.float32)     # over shuffled channel space
        for o in range(self.outputs):
            go = o // opg3
            W3s[go * mpg:(go + 1) * mpg, o] = w3np[o]
        W3 = np.zeros_like(W3s)
        W3[self.perm, :] = W3s                              # fold the shuffle permutation in
        s3, b3 = _fold_bn(*[np.asarray(a) for a in self.bn3])
        self.w3 = jnp.asarray(W3 * s3[None, :]).astype(compute_dtype)   # MXU input
        self.b3 = jnp.asarray(b3[None, :])

    # ------------------------------ Pallas forward ------------------------------
    def __call__(self, x, *, data_format="NHWC", batch_tile=None):
        # Hot path is NHWC (channels-last); NCHW callers pay the two transposes.
        if data_format == "NCHW":
            x = jnp.transpose(x, (0, 2, 3, 1))
        elif data_format != "NHWC":
            raise ValueError("data_format must be 'NHWC' or 'NCHW'")
        N, H, W, C = x.shape
        assert C == self.inp
        x = x.astype(jnp.float32)

        if batch_tile is None:
            # fold batch per grid step, but keep >= 2 grid steps so the
            # "parallel" axis can still shard across v7x's 2 TensorCores.
            batch_tile = max(1, N // 2)
            while N % batch_tile:
                batch_tile -= 1
        Bt = batch_tile
        assert N % Bt == 0

        kernel, Ho, Wo = _make_kernel(Bt, H, W, self.inp, self.mid, self.outputs,
                                      self.ksize, self.stride, self.pad,
                                      self.compute_dtype)

        def const_spec(arr):
            nd = arr.ndim
            return pl.BlockSpec(tuple(arr.shape), lambda b, _nd=nd: (0,) * _nd)

        inputs = [x, self.w1, self.b1, self.wdw, self.b2, self.w3, self.b3]
        in_specs = [pl.BlockSpec((Bt, H, W, self.inp), lambda b: (b, 0, 0, 0))]
        in_specs += [const_spec(a) for a in inputs[1:]]

        scratch = [pltpu.VMEM((Bt, H + 2 * self.pad, W + 2 * self.pad, self.mid),
                              jnp.float32)]
        if self.stride == 2:
            scratch.append(pltpu.VMEM((Bt, H + 2, W + 2, self.inp), jnp.float32))

        out_shape = jax.ShapeDtypeStruct((N, Ho, Wo, self.oup), jnp.float32)
        out_spec = pl.BlockSpec((Bt, Ho, Wo, self.oup), lambda b: (b, 0, 0, 0))

        fn = pl.pallas_call(
            kernel,
            out_shape=out_shape,
            grid_spec=pltpu.PrefetchScalarGridSpec(
                num_scalar_prefetch=0,
                grid=(N // Bt,),
                in_specs=in_specs,
                out_specs=out_spec,
                scratch_shapes=scratch,
            ),
            compiler_params=pltpu.CompilerParams(
                dimension_semantics=("parallel",),
                vmem_limit_bytes=32 * 1024 * 1024,   # valid on v5e/v6e/v7x
            ),
        )
        y = fn(*inputs)
        if data_format == "NCHW":
            return jnp.transpose(y, (0, 3, 1, 2))
        return y

    # ------------------------- pure-JAX reference (NCHW) -------------------------
    def reference(self, x_nchw):
        eps = 1e-5

        def conv(x, w, stride, pad, groups):
            return lax.conv_general_dilated(
                x, w, (stride, stride), [(pad, pad), (pad, pad)],
                dimension_numbers=("NCHW", "OIHW", "NCHW"),
                feature_group_count=groups, precision=lax.Precision.HIGHEST)

        def bn(x, p):
            g, b, m, v = p
            return ((x - m[None, :, None, None]) / jnp.sqrt(v[None, :, None, None] + eps)
                    * g[None, :, None, None] + b[None, :, None, None])

        t = conv(x_nchw, self.w1_raw, 1, 0, self.g1)
        t = jax.nn.relu(bn(t, self.bn1))
        t = conv(t, self.wdw_raw, self.stride, self.pad, self.mid)
        t = bn(t, self.bn2)
        if self.group > 1:
            t = t[:, self.perm, :, :]
        t = conv(t, self.w3_raw, 1, 0, self.group)
        t = bn(t, self.bn3)
        if self.stride == 1:
            return jax.nn.relu(t + x_nchw)
        pooled = lax.reduce_window(x_nchw, 0.0, lax.add, (1, 1, 3, 3), (1, 1, 2, 2),
                                   [(0, 0), (0, 0), (1, 1), (1, 1)]) / 9.0
        return jnp.concatenate([pooled, jax.nn.relu(t)], axis=1)


# ----------------------------------- main -----------------------------------

if __name__ == "__main__":
    key = jax.random.PRNGKey(0)
    kx, kp1, kp2 = jax.random.split(key, 3)
    N, C, H, W = 4, 4, 16, 16
    x_nchw = jax.random.normal(kx, (N, C, H, W), jnp.float32)
    x_nhwc = jnp.transpose(x_nchw, (0, 2, 3, 1))   # channels-last module boundary

    configs = [
        # stride=1 block (residual path): inp == oup
        (dict(inp=4, oup=4, group=2, first_group=False,
              mid_channels=4, ksize=3, stride=1), (N, H, W, 4), kp1),
        # stride=2 block (concat of avg-pool projection and relu(main))
        (dict(inp=4, oup=8, group=2, first_group=True,
              mid_channels=4, ksize=3, stride=2), (N, H // 2, W // 2, 8), kp2),
    ]

    for kw, expect_shape, kparam in configs:
        for cdt, tol in ((jnp.float32, 1e-3), (jnp.bfloat16, 5e-2)):
            blk = ShuffleV1BlockPallas(key=kparam, compute_dtype=cdt, **kw)
            y = jax.block_until_ready(blk(x_nhwc))          # NHWC in / NHWC out
            r = jnp.transpose(blk.reference(x_nchw), (0, 2, 3, 1))
            assert y.shape == r.shape == expect_shape
            # bf16 MXU inputs with f32 accumulation -> looser tolerance
            np.testing.assert_allclose(np.asarray(y), np.asarray(r), atol=tol, rtol=tol)

    print("KERNEL_OK")
</pallas_src>

<mosaic_0001>
module attributes {stable_mosaic.version = 11 : i64} {
  func.func @kernel(%arg0: i32, %arg1: memref<2x16x16x4xf32, #tpu.memory_space<vmem>>, %arg2: memref<4x4xf32, #tpu.memory_space<vmem>>, %arg3: memref<1x4xf32, #tpu.memory_space<vmem>>, %arg4: memref<9x4xf32, #tpu.memory_space<vmem>>, %arg5: memref<1x4xf32, #tpu.memory_space<vmem>>, %arg6: memref<4x4xf32, #tpu.memory_space<vmem>>, %arg7: memref<1x4xf32, #tpu.memory_space<vmem>>, %arg8: memref<2x16x16x4xf32, #tpu.memory_space<vmem>>, %arg9: memref<2x18x18x4xf32, #tpu.memory_space<vmem>>) attributes {dimension_semantics = [#tpu.dimension_semantics<parallel>], iteration_bounds = array<i64: 2>, scalar_prefetch = 0 : i64, scratch_operands = 1 : i64, tpu.core_type = #tpu.core_type<tc>, window_params = [{transform_indices = @transform_0, window_bounds = array<i64: 2, 16, 16, 4>}, {pipeline_mode = #tpu.pipeline_mode<synchronous>, transform_indices = @transform_1, window_bounds = array<i64: 4, 4>}, {pipeline_mode = #tpu.pipeline_mode<synchronous>, transform_indices = @transform_2, window_bounds = array<i64: 1, 4>}, {pipeline_mode = #tpu.pipeline_mode<synchronous>, transform_indices = @transform_3, window_bounds = array<i64: 9, 4>}, {pipeline_mode = #tpu.pipeline_mode<synchronous>, transform_indices = @transform_4, window_bounds = array<i64: 1, 4>}, {pipeline_mode = #tpu.pipeline_mode<synchronous>, transform_indices = @transform_5, window_bounds = array<i64: 4, 4>}, {pipeline_mode = #tpu.pipeline_mode<synchronous>, transform_indices = @transform_6, window_bounds = array<i64: 1, 4>}, {transform_indices = @transform_7, window_bounds = array<i64: 2, 16, 16, 4>}]} {
    %c0 = arith.constant 0 : index
    %c0_0 = arith.constant 0 : index
    %c0_1 = arith.constant 0 : index
    %c0_2 = arith.constant 0 : index
    %0 = vector.load %arg1[%c0, %c0_0, %c0_1, %c0_2] : memref<2x16x16x4xf32, #tpu.memory_space<vmem>>, vector<2x16x16x4xf32>
    %1 = vector.shape_cast %0 : vector<2x16x16x4xf32> to vector<512x4xf32>
    %c0_3 = arith.constant 0 : index
    %c0_4 = arith.constant 0 : index
    %2 = vector.load %arg2[%c0_3, %c0_4] : memref<4x4xf32, #tpu.memory_space<vmem>>, vector<4x4xf32>
    %cst = arith.constant dense<0.000000e+00> : vector<512x4xf32>
    %3 = tpu.matmul %1, %2, %cst {dimension_numbers = #tpu.dot_dimension_numbers<[1], [0], [0], [1], [0, 0, 1, 1], [], []>} : vector<512x4xf32>, vector<4x4xf32>, vector<512x4xf32> -> vector<512x4xf32>
    %c0_5 = arith.constant 0 : index
    %c0_6 = arith.constant 0 : index
    %4 = vector.load %arg3[%c0_5, %c0_6] : memref<1x4xf32, #tpu.memory_space<vmem>>, vector<1x4xf32>
    %5 = vector.broadcast %4 : vector<1x4xf32> to vector<512x4xf32>
    %6 = arith.addf %3, %5 : vector<512x4xf32>
    %cst_7 = arith.constant 0.000000e+00 : f32
    %7 = vector.broadcast %cst_7 : f32 to vector<512x4xf32>
    %8 = arith.maximumf %6, %7 : vector<512x4xf32>
    %cst_8 = arith.constant 0.000000e+00 : f32
    %9 = vector.broadcast %cst_8 : f32 to vector<2x1x18x4xf32>
    %c0_9 = arith.constant 0 : index
    %c0_10 = arith.constant 0 : index
    %c0_11 = arith.constant 0 : index
    %c0_12 = arith.constant 0 : index
    %10 = vector.load %arg9[%c0_9, %c0_10, %c0_11, %c0_12] : memref<2x18x18x4xf32, #tpu.memory_space<vmem>>, vector<2x1x18x4xf32>
    tpu.vector_store %arg9[%c0_9, %c0_10, %c0_11, %c0_12], %9 {strides = array<i32>} : memref<2x18x18x4xf32, #tpu.memory_space<vmem>>, vector<2x1x18x4xf32>,
    %cst_13 = arith.constant 0.000000e+00 : f32
    %11 = vector.broadcast %cst_13 : f32 to vector<2x1x18x4xf32>
    %c0_14 = arith.constant 0 : index
    %c17 = arith.constant 17 : index
    %c0_15 = arith.constant 0 : index
    %c0_16 = arith.constant 0 : index
    %12 = vector.load %arg9[%c0_14, %c17, %c0_15, %c0_16] : memref<2x18x18x4xf32, #tpu.memory_space<vmem>>, vector<2x1x18x4xf32>
    tpu.vector_store %arg9[%c0_14, %c17, %c0_15, %c0_16], %11 {strides = array<i32>} : memref<2x18x18x4xf32, #tpu.memory_space<vmem>>, vector<2x1x18x4xf32>,
    %cst_17 = arith.constant 0.000000e+00 : f32
    %13 = vector.broadcast %cst_17 : f32 to vector<2x16x1x4xf32>
    %c0_18 = arith.constant 0 : index
    %c1 = arith.constant 1 : index
    %c0_19 = arith.constant 0 : index
    %c0_20 = arith.constant 0 : index
    %14 = vector.load %arg9[%c0_18, %c1, %c0_19, %c0_20] : memref<2x18x18x4xf32, #tpu.memory_space<vmem>>, vector<2x16x1x4xf32>
    tpu.vector_store %arg9[%c0_18, %c1, %c0_19, %c0_20], %13 {strides = array<i32>} : memref<2x18x18x4xf32, #tpu.memory_space<vmem>>, vector<2x16x1x4xf32>,
    %cst_21 = arith.constant 0.000000e+00 : f32
    %15 = vector.broadcast %cst_21 : f32 to vector<2x16x1x4xf32>
    %c0_22 = arith.constant 0 : index
    %c1_23 = arith.constant 1 : index
    %c17_24 = arith.constant 17 : index
    %c0_25 = arith.constant 0 : index
    %16 = vector.load %arg9[%c0_22, %c1_23, %c17_24, %c0_25] : memref<2x18x18x4xf32, #tpu.memory_space<vmem>>, vector<2x16x1x4xf32>
    tpu.vector_store %arg9[%c0_22, %c1_23, %c17_24, %c0_25], %15 {strides = array<i32>} : memref<2x18x18x4xf32, #tpu.memory_space<vmem>>, vector<2x16x1x4xf32>,
    %17 = vector.shape_cast %8 : vector<512x4xf32> to vector<2x16x16x4xf32>
    %c0_26 = arith.constant 0 : index
    %c1_27 = arith.constant 1 : index
    %c1_28 = arith.constant 1 : index
    %c0_29 = arith.constant 0 : index
    %18 = vector.load %arg9[%c0_26, %c1_27, %c1_28, %c0_29] : memref<2x18x18x4xf32, #tpu.memory_space<vmem>>, vector<2x16x16x4xf32>
    tpu.vector_store %arg9[%c0_26, %c1_27, %c1_28, %c0_29], %17 {strides = array<i32>} : memref<2x18x18x4xf32, #tpu.memory_space<vmem>>, vector<2x16x16x4xf32>,
    %cst_30 = arith.constant 0.000000e+00 : f32
    %19 = vector.broadcast %cst_30 : f32 to vector<2x16x16x4xf32>
    %c0_31 = arith.constant 0 : index
    %c0_32 = arith.constant 0 : index
    %c0_33 = arith.constant 0 : index
    %c0_34 = arith.constant 0 : index
    %20 = vector.load %arg9[%c0_31, %c0_32, %c0_33, %c0_34] : memref<2x18x18x4xf32, #tpu.memory_space<vmem>>, vector<2x16x16x4xf32>
    %c0_35 = arith.constant 0 : index
    %c0_36 = arith.constant 0 : index
    %21 = vector.load %arg4[%c0_35, %c0_36] : memref<9x4xf32, #tpu.memory_space<vmem>>, vector<1x4xf32>
    %22 = vector.shape_cast %21 : vector<1x4xf32> to vector<1x1x1x4xf32>
    %23 = vector.broadcast %22 : vector<1x1x1x4xf32> to vector<2x16x16x4xf32>
    %24 = arith.mulf %20, %23 : vector<2x16x16x4xf32>
    %25 = arith.addf %19, %24 : vector<2x16x16x4xf32>
    %c0_37 = arith.constant 0 : index
    %c0_38 = arith.constant 0 : index
    %c1_39 = arith.constant 1 : index
    %c0_40 = arith.constant 0 : index
    %26 = vector.load %arg9[%c0_37, %c0_38, %c1_39, %c0_40] : memref<2x18x18x4xf32, #tpu.memory_space<vmem>>, vector<2x16x16x4xf32>
    %c1_41 = arith.constant 1 : index
    %c0_42 = arith.constant 0 : index
    %27 = vector.load %arg4[%c1_41, %c0_42] : memref<9x4xf32, #tpu.memory_space<vmem>>, vector<1x4xf32>
    %28 = vector.shape_cast %27 : vector<1x4xf32> to vector<1x1x1x4xf32>
    %29 = vector.broadcast %28 : vector<1x1x1x4xf32> to vector<2x16x16x4xf32>
    %30 = arith.mulf %26, %29 : vector<2x16x16x4xf32>
    %31 = arith.addf %25, %30 : vector<2x16x16x4xf32>
    %c0_43 = arith.constant 0 : index
    %c0_44 = arith.constant 0 : index
    %c2 = arith.constant 2 : index
    %c0_45 = arith.constant 0 : index
    %32 = vector.load %arg9[%c0_43, %c0_44, %c2, %c0_45] : memref<2x18x18x4xf32, #tpu.memory_space<vmem>>, vector<2x16x16x4xf32>
    %c2_46 = arith.constant 2 : index
    %c0_47 = arith.constant 0 : index
    %33 = vector.load %arg4[%c2_46, %c0_47] : memref<9x4xf32, #tpu.memory_space<vmem>>, vector<1x4xf32>
    %34 = vector.shape_cast %33 : vector<1x4xf32> to vector<1x1x1x4xf32>
    %35 = vector.broadcast %34 : vector<1x1x1x4xf32> to vector<2x16x16x4xf32>
    %36 = arith.mulf %32, %35 : vector<2x16x16x4xf32>
    %37 = arith.addf %31, %36 : vector<2x16x16x4xf32>
    %c0_48 = arith.constant 0 : index
    %c1_49 = arith.constant 1 : index
    %c0_50 = arith.constant 0 : index
    %c0_51 = arith.constant 0 : index
    %38 = vector.load %arg9[%c0_48, %c1_49, %c0_50, %c0_51] : memref<2x18x18x4xf32, #tpu.memory_space<vmem>>, vector<2x16x16x4xf32>
    %c3 = arith.constant 3 : index
    %c0_52 = arith.constant 0 : index
    %39 = vector.load %arg4[%c3, %c0_52] : memref<9x4xf32, #tpu.memory_space<vmem>>, vector<1x4xf32>
    %40 = vector.shape_cast %39 : vector<1x4xf32> to vector<1x1x1x4xf32>
    %41 = vector.broadcast %40 : vector<1x1x1x4xf32> to vector<2x16x16x4xf32>
    %42 = arith.mulf %38, %41 : vector<2x16x16x4xf32>
    %43 = arith.addf %37, %42 : vector<2x16x16x4xf32>
    %c0_53 = arith.constant 0 : index
    %c1_54 = arith.constant 1 : index
    %c1_55 = arith.constant 1 : index
    %c0_56 = arith.constant 0 : index
    %44 = vector.load %arg9[%c0_53, %c1_54, %c1_55, %c0_56] : memref<2x18x18x4xf32, #tpu.memory_space<vmem>>, vector<2x16x16x4xf32>
    %c4 = arith.constant 4 : index
    %c0_57 = arith.constant 0 : index
    %45 = vector.load %arg4[%c4, %c0_57] : memref<9x4xf32, #tpu.memory_space<vmem>>, vector<1x4xf32>
    %46 = vector.shape_cast %45 : vector<1x4xf32> to vector<1x1x1x4xf32>
    %47 = vector.broadcast %46 : vector<1x1x1x4xf32> to vector<2x16x16x4xf32>
    %48 = arith.mulf %44, %47 : vector<2x16x16x4xf32>
    %49 = arith.addf %43, %48 : vector<2x16x16x4xf32>
    %c0_58 = arith.constant 0 : index
    %c1_59 = arith.constant 1 : index
    %c2_60 = arith.constant 2 : index
    %c0_61 = arith.constant 0 : index
    %50 = vector.load %arg9[%c0_58, %c1_59, %c2_60, %c0_61] : memref<2x18x18x4xf32, #tpu.memory_space<vmem>>, vector<2x16x16x4xf32>
    %c5 = arith.constant 5 : index
    %c0_62 = arith.constant 0 : index
    %51 = vector.load %arg4[%c5, %c0_62] : memref<9x4xf32, #tpu.memory_space<vmem>>, vector<1x4xf32>
    %52 = vector.shape_cast %51 : vector<1x4xf32> to vector<1x1x1x4xf32>
    %53 = vector.broadcast %52 : vector<1x1x1x4xf32> to vector<2x16x16x4xf32>
    %54 = arith.mulf %50, %53 : vector<2x16x16x4xf32>
    %55 = arith.addf %49, %54 : vector<2x16x16x4xf32>
    %c0_63 = arith.constant 0 : index
    %c2_64 = arith.constant 2 : index
    %c0_65 = arith.constant 0 : index
    %c0_66 = arith.constant 0 : index
    %56 = vector.load %arg9[%c0_63, %c2_64, %c0_65, %c0_66] : memref<2x18x18x4xf32, #tpu.memory_space<vmem>>, vector<2x16x16x4xf32>
    %c6 = arith.constant 6 : index
    %c0_67 = arith.constant 0 : index
    %57 = vector.load %arg4[%c6, %c0_67] : memref<9x4xf32, #tpu.memory_space<vmem>>, vector<1x4xf32>
    %58 = vector.shape_cast %57 : vector<1x4xf32> to vector<1x1x1x4xf32>
    %59 = vector.broadcast %58 : vector<1x1x1x4xf32> to vector<2x16x16x4xf32>
    %60 = arith.mulf %56, %59 : vector<2x16x16x4xf32>
    %61 = arith.addf %55, %60 : vector<2x16x16x4xf32>
    %c0_68 = arith.constant 0 : index
    %c2_69 = arith.constant 2 : index
    %c1_70 = arith.constant 1 : index
    %c0_71 = arith.constant 0 : index
    %62 = vector.load %arg9[%c0_68, %c2_69, %c1_70, %c0_71] : memref<2x18x18x4xf32, #tpu.memory_space<vmem>>, vector<2x16x16x4xf32>
    %c7 = arith.constant 7 : index
    %c0_72 = arith.constant 0 : index
    %63 = vector.load %arg4[%c7, %c0_72] : memref<9x4xf32, #tpu.memory_space<vmem>>, vector<1x4xf32>
    %64 = vector.shape_cast %63 : vector<1x4xf32> to vector<1x1x1x4xf32>
    %65 = vector.broadcast %64 : vector<1x1x1x4xf32> to vector<2x16x16x4xf32>
    %66 = arith.mulf %62, %65 : vector<2x16x16x4xf32>
    %67 = arith.addf %61, %66 : vector<2x16x16x4xf32>
    %c0_73 = arith.constant 0 : index
    %c2_74 = arith.constant 2 : index
    %c2_75 = arith.constant 2 : index
    %c0_76 = arith.constant 0 : index
    %68 = vector.load %arg9[%c0_73, %c2_74, %c2_75, %c0_76] : memref<2x18x18x4xf32, #tpu.memory_space<vmem>>, vector<2x16x16x4xf32>
    %c8 = arith.constant 8 : index
    %c0_77 = arith.constant 0 : index
    %69 = vector.load %arg4[%c8, %c0_77] : memref<9x4xf32, #tpu.memory_space<vmem>>, vector<1x4xf32>
    %70 = vector.shape_cast %69 : vector<1x4xf32> to vector<1x1x1x4xf32>
    %71 = vector.broadcast %70 : vector<1x1x1x4xf32> to vector<2x16x16x4xf32>
    %72 = arith.mulf %68, %71 : vector<2x16x16x4xf32>
    %73 = arith.addf %67, %72 : vector<2x16x16x4xf32>
    %c0_78 = arith.constant 0 : index
    %c0_79 = arith.constant 0 : index
    %74 = vector.load %arg5[%c0_78, %c0_79] : memref<1x4xf32, #tpu.memory_space<vmem>>, vector<1x4xf32>
    %75 = vector.shape_cast %74 : vector<1x4xf32> to vector<1x1x1x4xf32>
    %76 = vector.broadcast %75 : vector<1x1x1x4xf32> to vector<2x16x16x4xf32>
    %77 = arith.addf %73, %76 : vector<2x16x16x4xf32>
    %78 = vector.shape_cast %77 : vector<2x16x16x4xf32> to vector<512x4xf32>
    %c0_80 = arith.constant 0 : index
    %c0_81 = arith.constant 0 : index
    %79 = vector.load %arg6[%c0_80, %c0_81] : memref<4x4xf32, #tpu.memory_space<vmem>>, vector<4x4xf32>
    %cst_82 = arith.constant dense<0.000000e+00> : vector<512x4xf32>
    %80 = tpu.matmul %78, %79, %cst_82 {dimension_numbers = #tpu.dot_dimension_numbers<[1], [0], [0], [1], [0, 0, 1, 1], [], []>} : vector<512x4xf32>, vector<4x4xf32>, vector<512x4xf32> -> vector<512x4xf32>
    %c0_83 = arith.constant 0 : index
    %c0_84 = arith.constant 0 : index
    %81 = vector.load %arg7[%c0_83, %c0_84] : memref<1x4xf32, #tpu.memory_space<vmem>>, vector<1x4xf32>
    %82 = vector.broadcast %81 : vector<1x4xf32> to vector<512x4xf32>
    %83 = arith.addf %80, %82 : vector<512x4xf32>
    %84 = arith.addf %83, %1 : vector<512x4xf32>
    %cst_85 = arith.constant 0.000000e+00 : f32
    %85 = vector.broadcast %cst_85 : f32 to vector<512x4xf32>
    %86 = arith.maximumf %84, %85 : vector<512x4xf32>
    %87 = vector.shape_cast %86 : vector<512x4xf32> to vector<2x16x16x4xf32>
    %c0_86 = arith.constant 0 : index
    %c0_87 = arith.constant 0 : index
    %c0_88 = arith.constant 0 : index
    %c0_89 = arith.constant 0 : index
    %88 = vector.load %arg8[%c0_86, %c0_87, %c0_88, %c0_89] : memref<2x16x16x4xf32, #tpu.memory_space<vmem>>, vector<2x16x16x4xf32>
    tpu.vector_store %arg8[%c0_86, %c0_87, %c0_88, %c0_89], %87 {strides = array<i32>} : memref<2x16x16x4xf32, #tpu.memory_space<vmem>>, vector<2x16x16x4xf32>,
    return
  }
  func.func @transform_0(%arg0: i32) -> (i32, i32, i32, i32) {
    %c0_i32 = arith.constant 0 : i32
    %c0_i32_0 = arith.constant 0 : i32
    %c0_i32_1 = arith.constant 0 : i32
    %c0_i32_2 = arith.constant 0 : i32
    return %arg0, %c0_i32, %c0_i32_0, %c0_i32_1 : i32, i32, i32, i32
  }
  func.func @transform_1(%arg0: i32) -> (i32, i32) {
    %c0_i32 = arith.constant 0 : i32
    %c0_i32_0 = arith.constant 0 : i32
    %c0_i32_1 = arith.constant 0 : i32
    return %c0_i32, %c0_i32_0 : i32, i32
  }
  func.func @transform_2(%arg0: i32) -> (i32, i32) {
    %c0_i32 = arith.constant 0 : i32
    %c0_i32_0 = arith.constant 0 : i32
    %c0_i32_1 = arith.constant 0 : i32
    return %c0_i32, %c0_i32_0 : i32, i32
  }
  func.func @transform_3(%arg0: i32) -> (i32, i32) {
    %c0_i32 = arith.constant 0 : i32
    %c0_i32_0 = arith.constant 0 : i32
    %c0_i32_1 = arith.constant 0 : i32
    return %c0_i32, %c0_i32_0 : i32, i32
  }
  func.func @transform_4(%arg0: i32) -> (i32, i32) {
    %c0_i32 = arith.constant 0 : i32
    %c0_i32_0 = arith.constant 0 : i32
    %c0_i32_1 = arith.constant 0 : i32
    return %c0_i32, %c0_i32_0 : i32, i32
  }
  func.func @transform_5(%arg0: i32) -> (i32, i32) {
    %c0_i32 = arith.constant 0 : i32
    %c0_i32_0 = arith.constant 0 : i32
    %c0_i32_1 = arith.constant 0 : i32
    return %c0_i32, %c0_i32_0 : i32, i32
  }
  func.func @transform_6(%arg0: i32) -> (i32, i32) {
    %c0_i32 = arith.constant 0 : i32
    %c0_i32_0 = arith.constant 0 : i32
    %c0_i32_1 = arith.constant 0 : i32
    return %c0_i32, %c0_i32_0 : i32, i32
  }
  func.func @transform_7(%arg0: i32) -> (i32, i32, i32, i32) {
    %c0_i32 = arith.constant 0 : i32
    %c0_i32_0 = arith.constant 0 : i32
    %c0_i32_1 = arith.constant 0 : i32
    %c0_i32_2 = arith.constant 0 : i32
    return %arg0, %c0_i32, %c0_i32_0, %c0_i32_1 : i32, i32, i32, i32
  }
}

</mosaic_0001>

<llo_original>
// kernel: tpu_custom_call.1
$region0: #{tpu_custom_call.1}
  #allocation0 [shape = 'u32[]', space=smem, size = 0x4, offset = 0x4, fixed_abs, tag = 'smem constant byte address 0x4 - core index']
  #allocation1 [shape = 'u32[144,128]{1,0:T(1,128)}', space=vmem, size = 0x12000, scoped, tag = 'internal scratch']
  #allocation2 [shape = 'f32[2,18,18,4]{3,2,1,0:T(8,128)}', space=vmem, size = 0x6c000, scoped, tag = 'scratch operand']
  %s0 = inlined_call_operand.vmem [shape: f32[4,16,16,4], index: 0, kind: input, shape index: {}]
  %s1 = inlined_call_operand.vmem [shape: f32[4,4], index: 1, kind: input, shape index: {}]
  %s2 = inlined_call_operand.vmem [shape: f32[1,4], index: 2, kind: input, shape index: {}]
  %s3 = inlined_call_operand.vmem [shape: f32[9,4], index: 3, kind: input, shape index: {}]
  %s4 = inlined_call_operand.vmem [shape: f32[1,4], index: 4, kind: input, shape index: {}]
  %s5 = inlined_call_operand.vmem [shape: f32[4,4], index: 5, kind: input, shape index: {}]
  %s6 = inlined_call_operand.vmem [shape: f32[1,4], index: 6, kind: input, shape index: {}]
  %s7 = inlined_call_operand.vmem [shape: f32[4,16,16,4], index: 7, kind: output, shape index: {}]
  %s8 = sld [smem:[#allocation0]]
  $region61: #{tpu_custom_call.1} parent=0
    _
  %s10 = ssub.s32 1, %s8
  %s11 = scalar_select 0, %s10, %s8
  loop: start=0, step=1, limit=4
  $region2: #{tpu_custom_call.1} parent=0 // loop_pre_header
    _
  $region3: #{tpu_custom_call.1} parent=0 // loop_header
    %s13 = sphi 0, %s17
    %p14 = scmp.ge.s32.totalorder %s13, 4
    %s23 = sphi 0, %s25
    %s26 = sphi 0, %s23
    %s27 = sphi 0, %s26
    %s43 = sphi 0, %s27
    %s47 = sphi 0, %s47
    %s49 = sphi 0, %s47
    %s50 = sphi 0, %s49
    %s64 = sphi 0, %s50
    %s68 = sphi 0, %s68
    %s70 = sphi 0, %s68
    %s71 = sphi 0, %s70
    %s85 = sphi 0, %s71
    %s89 = sphi 0, %s89
    %s91 = sphi 0, %s89
    %s92 = sphi 0, %s91
    %s106 = sphi 0, %s92
    %s110 = sphi 0, %s110
    %s112 = sphi 0, %s110
    %s113 = sphi 0, %s112
    %s127 = sphi 0, %s113
    %s131 = sphi 0, %s131
    %s133 = sphi 0, %s131
    %s134 = sphi 0, %s133
    %s148 = sphi 0, %s134
    %s152 = sphi 0, %s152
    %s154 = sphi 0, %s152
    %s155 = sphi 0, %s154
    %s169 = sphi 0, %s155
    %s175 = sphi 0, %s177
    %s178 = sphi 0, %s175
    %s179 = sphi 0, %s178
    %s195 = sphi 0, %s179
  $region4: #{tpu_custom_call.1} parent=0 // loop_header_branch
    %16 = sbr.rel (%p14) target = $region8
  $region5: #{tpu_custom_call.1} parent=0 // loop_body
    %s18 = ssub.s32 %s13, 1
    %s19 = ssub.s32 %s13, 2
    %s20 = sadd.s32 %s13, 1
    %s21 = ssub.s32 %s13, %s20
    %p22 = scmp.eq.s32.totalorder %s21, 0
    %s24 = sadd.s32 %s23, 1
    %s25 = scalar_select %p22, %s23, %s24
    %p28 = pneg %p22
    %p29 = scmp.eq.s32.totalorder %s13, 1
    %p30 = por %p28, %p29
    %p31 = scmp.ne.s32.totalorder %s23, %s26
    %p32 = scmp.eq.s32.totalorder %s13, 0
    %p33 = por %p31, %p32
    %p34 = scmp.ne.s32.totalorder %s23, %s26
    %p35 = scmp.eq.s32.totalorder %s18, 1
    %p36 = por %p34, %p35
    %p37 = scmp.ne.s32.totalorder %s26, %s27
    %p38 = scmp.eq.s32.totalorder %s18, 0
    %p39 = por %p37, %p38
    %p40 = scmp.ne.s32.totalorder %s26, %s27
    %p41 = scmp.eq.s32.totalorder %s19, 1
    %p42 = por %p40, %p41
    %p44 = scmp.ne.s32.totalorder %s27, %s43
    %p45 = scmp.eq.s32.totalorder %s19, 0
    %p46 = por %p44, %p45
    %s48 = sadd.s32 %s47, 1
    %p51 = scmp.eq.s32.totalorder %s13, 1
    %p52 = scmp.ne.s32.totalorder %s47, %s49
    %p53 = scmp.eq.s32.totalorder %s13, 0
    %p54 = por %p52, %p53
    %p55 = scmp.ne.s32.totalorder %s47, %s49
    %p56 = scmp.eq.s32.totalorder %s18, 1
    %p57 = por %p55, %p56
    %p58 = scmp.ne.s32.totalorder %s49, %s50
    %p59 = scmp.eq.s32.totalorder %s18, 0
    %p60 = por %p58, %p59
    %p61 = scmp.ne.s32.totalorder %s49, %s50
    %p62 = scmp.eq.s32.totalorder %s19, 1
    %p63 = por %p61, %p62
    %p65 = scmp.ne.s32.totalorder %s50, %s64
    %p66 = scmp.eq.s32.totalorder %s19, 0
    %p67 = por %p65, %p66
    %s69 = sadd.s32 %s68, 1
    %p72 = scmp.eq.s32.totalorder %s13, 1
    %p73 = scmp.ne.s32.totalorder %s68, %s70
    %p74 = scmp.eq.s32.totalorder %s13, 0
    %p75 = por %p73, %p74
    %p76 = scmp.ne.s32.totalorder %s68, %s70
    %p77 = scmp.eq.s32.totalorder %s18, 1
    %p78 = por %p76, %p77
    %p79 = scmp.ne.s32.totalorder %s70, %s71
    %p80 = scmp.eq.s32.totalorder %s18, 0
    %p81 = por %p79, %p80
    %p82 = scmp.ne.s32.totalorder %s70, %s71
    %p83 = scmp.eq.s32.totalorder %s19, 1
    %p84 = por %p82, %p83
    %p86 = scmp.ne.s32.totalorder %s71, %s85
    %p87 = scmp.eq.s32.totalorder %s19, 0
    %p88 = por %p86, %p87
    %s90 = sadd.s32 %s89, 1
    %p93 = scmp.eq.s32.totalorder %s13, 1
    %p94 = scmp.ne.s32.totalorder %s89, %s91
    %p95 = scmp.eq.s32.totalorder %s13, 0
    %p96 = por %p94, %p95
    %p97 = scmp.ne.s32.totalorder %s89, %s91
    %p98 = scmp.eq.s32.totalorder %s18, 1
    %p99 = por %p97, %p98
    %p100 = scmp.ne.s32.totalorder %s91, %s92
    %p101 = scmp.eq.s32.totalorder %s18, 0
    %p102 = por %p100, %p101
    %p103 = scmp.ne.s32.totalorder %s91, %s92
    %p104 = scmp.eq.s32.totalorder %s19, 1
    %p105 = por %p103, %p104
    %p107 = scmp.ne.s32.totalorder %s92, %s106
    %p108 = scmp.eq.s32.totalorder %s19, 0
    %p109 = por %p107, %p108
    %s111 = sadd.s32 %s110, 1
    %p114 = scmp.eq.s32.totalorder %s13, 1
    %p115 = scmp.ne.s32.totalorder %s110, %s112
    %p116 = scmp.eq.s32.totalorder %s13, 0
    %p117 = por %p115, %p116
    %p118 = scmp.ne.s32.totalorder %s110, %s112
    %p119 = scmp.eq.s32.totalorder %s18, 1
    %p120 = por %p118, %p119
    %p121 = scmp.ne.s32.totalorder %s112, %s113
    %p122 = scmp.eq.s32.totalorder %s18, 0
    %p123 = por %p121, %p122
    %p124 = scmp.ne.s32.totalorder %s112, %s113
    %p125 = scmp.eq.s32.totalorder %s19, 1
    %p126 = por %p124, %p125
    %p128 = scmp.ne.s32.totalorder %s113, %s127
    %p129 = scmp.eq.s32.totalorder %s19, 0
    %p130 = por %p128, %p129
    %s132 = sadd.s32 %s131, 1
    %p135 = scmp.eq.s32.totalorder %s13, 1
    %p136 = scmp.ne.s32.totalorder %s131, %s133
    %p137 = scmp.eq.s32.totalorder %s13, 0
    %p138 = por %p136, %p137
    %p139 = scmp.ne.s32.totalorder %s131, %s133
    %p140 = scmp.eq.s32.totalorder %s18, 1
    %p141 = por %p139, %p140
    %p142 = scmp.ne.s32.totalorder %s133, %s134
    %p143 = scmp.eq.s32.totalorder %s18, 0
    %p144 = por %p142, %p143
    %p145 = scmp.ne.s32.totalorder %s133, %s134
    %p146 = scmp.eq.s32.totalorder %s19, 1
    %p147 = por %p145, %p146
    %p149 = scmp.ne.s32.totalorder %s134, %s148
    %p150 = scmp.eq.s32.totalorder %s19, 0
    %p151 = por %p149, %p150
    %s153 = sadd.s32 %s152, 1
    %p156 = scmp.eq.s32.totalorder %s13, 1
    %p157 = scmp.ne.s32.totalorder %s152, %s154
    %p158 = scmp.eq.s32.totalorder %s13, 0
    %p159 = por %p157, %p158
    %p160 = scmp.ne.s32.totalorder %s152, %s154
    %p161 = scmp.eq.s32.totalorder %s18, 1
    %p162 = por %p160, %p161
    %p163 = scmp.ne.s32.totalorder %s154, %s155
    %p164 = scmp.eq.s32.totalorder %s18, 0
    %p165 = por %p163, %p164
    %p166 = scmp.ne.s32.totalorder %s154, %s155
    %p167 = scmp.eq.s32.totalorder %s19, 1
    %p168 = por %p166, %p167
    %p170 = scmp.ne.s32.totalorder %s155, %s169
    %p171 = scmp.eq.s32.totalorder %s19, 0
    %p172 = por %p170, %p171
    %s173 = ssub.s32 %s13, %s20
    %p174 = scmp.eq.s32.totalorder %s173, 0
    %s176 = sadd.s32 %s175, 1
    %s177 = scalar_select %p174, %s175, %s176
    %p180 = pneg %p174
    %p181 = scmp.eq.s32.totalorder %s13, 1
    %p182 = por %p180, %p181
    %p183 = scmp.ne.s32.totalorder %s175, %s178
    %p184 = scmp.eq.s32.totalorder %s13, 0
    %p185 = por %p183, %p184
    %p186 = scmp.ne.s32.totalorder %s175, %s178
    %p187 = scmp.eq.s32.totalorder %s18, 1
    %p188 = por %p186, %p187
    %p189 = scmp.ne.s32.totalorder %s178, %s179
    %p190 = scmp.eq.s32.totalorder %s18, 0
    %p191 = por %p189, %p190
    %p192 = scmp.ne.s32.totalorder %s178, %s179
    %p193 = scmp.eq.s32.totalorder %s19, 1
    %p194 = por %p192, %p193
    %p196 = scmp.ne.s32.totalorder %s179, %s195
    %p197 = scmp.eq.s32.totalorder %s19, 0
    %p198 = por %p196, %p197
    %p199 = scmp.le.s32.totalorder 1, %s13
    %p200 = scmp.lt.s32.totalorder %s13, 3
    %p201 = pnand %p199, %p200
    %p202 = pneg %p201
    // Predicated region
    $region9: #{tpu_custom_call.1} parent=5 // pred_check
      _
    $region10: #{tpu_custom_call.1} parent=5 // pred_check_branch
      %204 = sbr.rel (%p201) target = $region12
    $region11: #{tpu_custom_call.1} parent=5 // pred_region
      %s205 = ssub.s32 %s13, 1
      // Predicated region
      $region13: #{tpu_custom_call.1} parent=11 // pred_check
        %p206 = pneg %p60
      $region14: #{tpu_custom_call.1} parent=11 // pred_check_branch
        %208 = sbr.rel (%p206) target = $region16
      $region15: #{tpu_custom_call.1} parent=11 // pred_region
        _
      $region16: #{tpu_custom_call.1} parent=11 // pred_fallthru
        _
      // Predicated region
      $region17: #{tpu_custom_call.1} parent=11 // pred_check
        %p209 = pneg %p81
      $region18: #{tpu_custom_call.1} parent=11 // pred_check_branch
        %211 = sbr.rel (%p209) target = $region20
      $region19: #{tpu_custom_call.1} parent=11 // pred_region
        _
      $region20: #{tpu_custom_call.1} parent=11 // pred_fallthru
        _
      // Predicated region
      $region21: #{tpu_custom_call.1} parent=11 // pred_check
        %p212 = pneg %p102
      $region22: #{tpu_custom_call.1} parent=11 // pred_check_branch
        %214 = sbr.rel (%p212) target = $region24
      $region23: #{tpu_custom_call.1} parent=11 // pred_region
        _
      $region24: #{tpu_custom_call.1} parent=11 // pred_fallthru
        _
      // Predicated region
      $region25: #{tpu_custom_call.1} parent=11 // pred_check
        %p215 = pneg %p123
      $region26: #{tpu_custom_call.1} parent=11 // pred_check_branch
        %217 = sbr.rel (%p215) target = $region28
      $region27: #{tpu_custom_call.1} parent=11 // pred_region
        _
      $region28: #{tpu_custom_call.1} parent=11 // pred_fallthru
        _
      // Predicated region
      $region29: #{tpu_custom_call.1} parent=11 // pred_check
        %p218 = pneg %p144
      $region30: #{tpu_custom_call.1} parent=11 // pred_check_branch
        %220 = sbr.rel (%p218) target = $region32
      $region31: #{tpu_custom_call.1} parent=11 // pred_region
        _
      $region32: #{tpu_custom_call.1} parent=11 // pred_fallthru
        _
      // Predicated region
      $region33: #{tpu_custom_call.1} parent=11 // pred_check
        %p221 = pneg %p165
      $region34: #{tpu_custom_call.1} parent=11 // pred_check_branch
        %223 = sbr.rel (%p221) target = $region36
      $region35: #{tpu_custom_call.1} parent=11 // pred_region
        _
      $region36: #{tpu_custom_call.1} parent=11 // pred_fallthru
        _
    $region12: #{tpu_custom_call.1} parent=5 // pred_fallthru
      _
    %p224 = scmp.lt.s32.totalorder %s13, 2
    // Predicated region
    $region37: #{tpu_custom_call.1} parent=5 // pred_check
      %p225 = pneg %p224
    $region38: #{tpu_custom_call.1} parent=5 // pred_check_branch
      %227 = sbr.rel (%p225) target = $region40
    $region39: #{tpu_custom_call.1} parent=5 // pred_region
      // Predicated region
      $region41: #{tpu_custom_call.1} parent=39 // pred_check
        %p228 = pneg %p33
      $region42: #{tpu_custom_call.1} parent=39 // pred_check_branch
        %230 = sbr.rel (%p228) target = $region44
      $region43: #{tpu_custom_call.1} parent=39 // pred_region
        %s231 = smul.u32 2, %s13
        %p232 = scmp.lt.s32.totalorder %s231, 3
        %s233 = scalar_select %p232, %s231, 3
        %s234 = smul.addr %s233, 32
        %s235 = smul.addr %s234, 8
        %s236 = scalar_lea.vmem %s0, %s235
        %s237 = smul.u32 2, %s13
      $region44: #{tpu_custom_call.1} parent=39 // pred_fallthru
        _
    $region40: #{tpu_custom_call.1} parent=5 // pred_fallthru
      _
    %p238 = scmp.le.s32.totalorder 1, %s13
    %p239 = scmp.lt.s32.totalorder %s13, 3
    %p240 = pnand %p238, %p239
    %p241 = pneg %p240
    // Predicated region
    $region45: #{tpu_custom_call.1} parent=5 // pred_check
      _
    $region46: #{tpu_custom_call.1} parent=5 // pred_check_branch
      %243 = sbr.rel (%p240) target = $region48
    $region47: #{tpu_custom_call.1} parent=5 // pred_region
      %s244 = ssub.s32 %s13, 1
      %s245 = smul.u32 2, %s18
      %p246 = scmp.lt.s32.totalorder %s245, 3
      %s247 = scalar_select %p246, %s245, 3
      %s248 = smul.addr %s247, 32
      %s249 = smul.addr %s248, 8
      %s250 = scalar_lea.vmem %s0, %s249
      %p251 = pneg %p39
      %p252 = pneg %p36
      %p253 = pneg %p60
      %p254 = pneg %p57
      %p255 = pneg %p81
      %p256 = pneg %p78
      %p257 = pneg %p102
      %p258 = pneg %p99
      %p259 = pneg %p123
      %p260 = pneg %p120
      %p261 = pneg %p144
      %p262 = pneg %p141
      %p263 = pneg %p165
      %p264 = pneg %p162
      %p265 = pneg %p191
      %p266 = pneg %p188
      %s267 = smul.u32 2, %s18
      %p268 = scmp.lt.s32.totalorder %s267, 3
      %s269 = scalar_select %p268, %s267, 3
      %s270 = smul.addr %s269, 32
      %s271 = smul.addr %s270, 8
      %s272 = scalar_lea.vmem %s7, %s271
      %s273 = smul.u32 2, %s18
      %p274 = scmp.lt.s32.totalorder %s273, 3
      %s275 = scalar_select %p274, %s273, 3
      %s276 = smul.addr %s275, 32
      %s277 = smul.addr %s276, 8
      %s278 = scalar_lea.vmem %s0, %s277
      %s279 = smul.u32 2, %s18
      %s280 = smul.u32 2, %s18
      %p281 = scmp.lt.s32.totalorder %s280, 3
      %s282 = scalar_select %p281, %s280, 3
      %s283 = smul.addr %s282, 32
      %s284 = smul.addr %s283, 8
      %s285 = scalar_lea.vmem %s7, %s284
      %s286 = smul.u32 2, %s18
      %v287 = vld [vmem:[%s278] sm:$0xff]
      %v288 = vld [vmem:[%s278 + $0x8] sm:$0xff]
      %v289 = vld [vmem:[%s278 + $0x10] sm:$0xff]
      %v290 = vld [vmem:[%s278 + $0x18] sm:$0xff]
      %v291 = vld [vmem:[%s278 + $0x20] sm:$0xff]
      %v292 = vld [vmem:[%s278 + $0x28] sm:$0xff]
      %v293 = vld [vmem:[%s278 + $0x30] sm:$0xff]
      %v294 = vld [vmem:[%s278 + $0x38] sm:$0xff]
      %v295 = vld [vmem:[%s278 + $0x40] sm:$0xff]
      %v296 = vld [vmem:[%s278 + $0x48] sm:$0xff]
      %v297 = vld [vmem:[%s278 + $0x50] sm:$0xff]
      %v298 = vld [vmem:[%s278 + $0x58] sm:$0xff]
      %v299 = vld [vmem:[%s278 + $0x60] sm:$0xff]
      %v300 = vld [vmem:[%s278 + $0x68] sm:$0xff]
      %v301 = vld [vmem:[%s278 + $0x70] sm:$0xff]
      %v302 = vld [vmem:[%s278 + $0x78] sm:$0xff]
      %v303 = vld [vmem:[%s278 + $0x80] sm:$0xff]
      %v304 = vld [vmem:[%s278 + $0x88] sm:$0xff]
      %v305 = vld [vmem:[%s278 + $0x90] sm:$0xff]
      %v306 = vld [vmem:[%s278 + $0x98] sm:$0xff]
      %v307 = vld [vmem:[%s278 + $0xa0] sm:$0xff]
      %v308 = vld [vmem:[%s278 + $0xa8] sm:$0xff]
      %v309 = vld [vmem:[%s278 + $0xb0] sm:$0xff]
      %v310 = vld [vmem:[%s278 + $0xb8] sm:$0xff]
      %v311 = vld [vmem:[%s278 + $0xc0] sm:$0xff]
      %v312 = vld [vmem:[%s278 + $0xc8] sm:$0xff]
      %v313 = vld [vmem:[%s278 + $0xd0] sm:$0xff]
      %v314 = vld [vmem:[%s278 + $0xd8] sm:$0xff]
      %v315 = vld [vmem:[%s278 + $0xe0] sm:$0xff]
      %v316 = vld [vmem:[%s278 + $0xe8] sm:$0xff]
      %v317 = vld [vmem:[%s278 + $0xf0] sm:$0xff]
      %v318 = vld [vmem:[%s278 + $0xf8] sm:$0xff]
      %v319 = vld [vmem:[%s278 + $0x100] sm:$0xff]
      %v320 = vld [vmem:[%s278 + $0x108] sm:$0xff]
      %v321 = vld [vmem:[%s278 + $0x110] sm:$0xff]
      %v322 = vld [vmem:[%s278 + $0x118] sm:$0xff]
      %v323 = vld [vmem:[%s278 + $0x120] sm:$0xff]
      %v324 = vld [vmem:[%s278 + $0x128] sm:$0xff]
      %v325 = vld [vmem:[%s278 + $0x130] sm:$0xff]
      %v326 = vld [vmem:[%s278 + $0x138] sm:$0xff]
      %v327 = vld [vmem:[%s278 + $0x140] sm:$0xff]
      %v328 = vld [vmem:[%s278 + $0x148] sm:$0xff]
      %v329 = vld [vmem:[%s278 + $0x150] sm:$0xff]
      %v330 = vld [vmem:[%s278 + $0x158] sm:$0xff]
      %v331 = vld [vmem:[%s278 + $0x160] sm:$0xff]
      %v332 = vld [vmem:[%s278 + $0x168] sm:$0xff]
      %v333 = vld [vmem:[%s278 + $0x170] sm:$0xff]
      %v334 = vld [vmem:[%s278 + $0x178] sm:$0xff]
      %v335 = vld [vmem:[%s278 + $0x180] sm:$0xff]
      %v336 = vld [vmem:[%s278 + $0x188] sm:$0xff]
      %v337 = vld [vmem:[%s278 + $0x190] sm:$0xff]
      %v338 = vld [vmem:[%s278 + $0x198] sm:$0xff]
      %v339 = vld [vmem:[%s278 + $0x1a0] sm:$0xff]
      %v340 = vld [vmem:[%s278 + $0x1a8] sm:$0xff]
      %v341 = vld [vmem:[%s278 + $0x1b0] sm:$0xff]
      %v342 = vld [vmem:[%s278 + $0x1b8] sm:$0xff]
      %v343 = vld [vmem:[%s278 + $0x1c0] sm:$0xff]
      %v344 = vld [vmem:[%s278 + $0x1c8] sm:$0xff]
      %v345 = vld [vmem:[%s278 + $0x1d0] sm:$0xff]
      %v346 = vld [vmem:[%s278 + $0x1d8] sm:$0xff]
      %v347 = vld [vmem:[%s278 + $0x1e0] sm:$0xff]
      %v348 = vld [vmem:[%s278 + $0x1e8] sm:$0xff]
      %v349 = vld [vmem:[%s278 + $0x1f0] sm:$0xff]
      %v350 = vld [vmem:[%s278 + $0x1f8] sm:$0xff]
      %v351 = vld [vmem:[%s1] sm:$0xf]
      %v352 = vld [vmem:[%s2] sm:$0x1]
      %v354 = vlaneseq
      %v355 = vshrl.u32 %v354, 7
      %v356 = vsub.s32 0, %v355
      %v357 = vrot.slane %v352, %v356
      %vm359 = vcmask 31744
      %v361 = vsel %vm359, %v287, 0
      %v364 = vsel %vm359, %v288, 0
      %v367 = vsel %vm359, %v289, 0
      %v370 = vsel %vm359, %v290, 0
      %v373 = vsel %vm359, %v291, 0
      %v376 = vsel %vm359, %v292, 0
      %v379 = vsel %vm359, %v293, 0
      %v382 = vsel %vm359, %v294, 0
      %v385 = vsel %vm359, %v295, 0
      %v388 = vsel %vm359, %v296, 0
      %v391 = vsel %vm359, %v297, 0
      %v394 = vsel %vm359, %v298, 0
      %v397 = vsel %vm359, %v299, 0
      %v400 = vsel %vm359, %v300, 0
      %v403 = vsel %vm359, %v301, 0
      %v406 = vsel %vm359, %v302, 0
      %v409 = vsel %vm359, %v303, 0
      %v412 = vsel %vm359, %v304, 0
      %v415 = vsel %vm359, %v305, 0
      %v418 = vsel %vm359, %v306, 0
      %v421 = vsel %vm359, %v307, 0
      %v424 = vsel %vm359, %v308, 0
      %v427 = vsel %vm359, %v309, 0
      %v430 = vsel %vm359, %v310, 0
      %v433 = vsel %vm359, %v311, 0
      %v436 = vsel %vm359, %v312, 0
      %v439 = vsel %vm359, %v313, 0
      %v442 = vsel %vm359, %v314, 0
      %v445 = vsel %vm359, %v315, 0
      %v448 = vsel %vm359, %v316, 0
      %v451 = vsel %vm359, %v317, 0
      %v454 = vsel %vm359, %v318, 0
      %v457 = vsel %vm359, %v319, 0
      %v460 = vsel %vm359, %v320, 0
      %v463 = vsel %vm359, %v321, 0
      %v466 = vsel %vm359, %v322, 0
      %v469 = vsel %vm359, %v323, 0
      %v472 = vsel %vm359, %v324, 0
      %v475 = vsel %vm359, %v325, 0
      %v478 = vsel %vm359, %v326, 0
      %v481 = vsel %vm359, %v327, 0
      %v484 = vsel %vm359, %v328, 0
      %v487 = vsel %vm359, %v329, 0
      %v490 = vsel %vm359, %v330, 0
      %v493 = vsel %vm359, %v331, 0
      %v496 = vsel %vm359, %v332, 0
      %v499 = vsel %vm359, %v333, 0
      %v502 = vsel %vm359, %v334, 0
      %v505 = vsel %vm359, %v335, 0
      %v508 = vsel %vm359, %v336, 0
      %v511 = vsel %vm359, %v337, 0
      %v514 = vsel %vm359, %v338, 0
      %v517 = vsel %vm359, %v339, 0
      %v520 = vsel %vm359, %v340, 0
      %v523 = vsel %vm359, %v341, 0
      %v526 = vsel %vm359, %v342, 0
      %v529 = vsel %vm359, %v343, 0
      %v532 = vsel %vm359, %v344, 0
      %v535 = vsel %vm359, %v345, 0
      %v538 = vsel %vm359, %v346, 0
      %v541 = vsel %vm359, %v347, 0
      %v544 = vsel %vm359, %v348, 0
      %v547 = vsel %vm359, %v349, 0
      %v550 = vsel %vm359, %v350, 0
      %vm552 = vcmask 1043456
      %v554 = vsel %vm552, %v351, 0
      %556 = vmatprep.subr.mxu0 0.0
      %557 = vmatpush1.msra.mxu0 0.0
      %558 = vmatprep.subr.mxu0 0.0
      %559 = vmatpush1.msra.mxu0 0.0
      %560 = vmatprep.subr.mxu0 0.0
      %561 = vmatpush1.msra.mxu0 0.0
      %562 = vmatprep.subr.mxu0 0.0
      %563 = vmatpush1.msra.mxu0 0.0
      %564 = vmatprep.subr.mxu0 0.0
      %565 = vmatpush1.msra.mxu0 0.0
      %566 = vmatprep.subr.mxu0 0.0
      %567 = vmatpush1.msra.mxu0 0.0
      %568 = vmatprep.subr.mxu0 0.0
      %569 = vmatpush1.msra.mxu0 0.0
      %570 = vmatprep.subr.mxu0 0.0
      %571 = vmatpush1.msra.mxu0 0.0
      %572 = vmatprep.subr.mxu0 0.0
      %573 = vmatpush1.msra.mxu0 0.0
      %574 = vmatprep.subr.mxu0 0.0
      %575 = vmatpush1.msra.mxu0 0.0
      %576 = vmatprep.subr.mxu0 0.0
      %577 = vmatpush1.msra.mxu0 0.0
      %578 = vmatprep.subr.mxu0 0.0
      %579 = vmatpush1.msra.mxu0 0.0
      %580 = vmatprep.subr.mxu0 0.0
      %581 = vmatpush1.msra.mxu0 0.0
      %582 = vmatprep.subr.mxu0 0.0
      %583 = vmatpush1.msra.mxu0 0.0
      %584 = vmatprep.subr.mxu0 0.0
      %585 = vmatpush1.msra.mxu0 0.0
      %586 = vmatprep.subr.mxu0 0.0
      %587 = vmatpush1.msra.mxu0 %v554
      %588 = vmatprep.subr.mxu0 0.0
      %589 = vmatpush2.msra.mxu0 0.0
      %590 = vmatprep.subr.mxu0 0.0
      %591 = vmatpush2.msra.mxu0 0.0
      %592 = vmatprep.subr.mxu0 0.0
      %593 = vmatpush2.msra.mxu0 0.0
      %594 = vmatprep.subr.mxu0 0.0
      %595 = vmatpush2.msra.mxu0 0.0
      %596 = vmatprep.subr.mxu0 0.0
      %597 = vmatpush2.msra.mxu0 0.0
      %598 = vmatprep.subr.mxu0 0.0
      %599 = vmatpush2.msra.mxu0 0.0
      %600 = vmatprep.subr.mxu0 0.0
      %601 = vmatpush2.msra.mxu0 0.0
      %602 = vmatprep.subr.mxu0 0.0
      %603 = vmatpush2.msra.mxu0 0.0
      %604 = vmatprep.subr.mxu0 0.0
      %605 = vmatpush2.msra.mxu0 0.0
      %606 = vmatprep.subr.mxu0 0.0
      %607 = vmatpush2.msra.mxu0 0.0
      %608 = vmatprep.subr.mxu0 0.0
      %609 = vmatpush2.msra.mxu0 0.0
      %610 = vmatprep.subr.mxu0 0.0
      %611 = vmatpush2.msra.mxu0 0.0
      %612 = vmatprep.subr.mxu0 0.0
      %613 = vmatpush2.msra.mxu0 0.0
      %614 = vmatprep.subr.mxu0 0.0
      %615 = vmatpush2.msra.mxu0 0.0
      %616 = vmatprep.subr.mxu0 0.0
      %617 = vmatpush2.msra.mxu0 0.0
      %618 = vmatprep.subr.mxu0 0.0
      %619 = vmatpush2.msra.mxu0 0.0
      %620 = vmatprep.mubr.f32.mxu0 0.0
      %621 = vmatmul.mubr.f32.gmra.mxu0 %v361
      %v622 = vpop.f32.mrf.mxu0
      %v623 = vadd.f32 %v357, %v622
      %v624 = vpop.f32.mrf.mxu0
      %625 = vmatprep.mubr.f32.mxu0 0.0
      %626 = vmatmul.mubr.f32.gmra.mxu0 %v364
      %v627 = vpop.f32.mrf.mxu0
      %v628 = vadd.f32 %v357, %v627
      %v629 = vpop.f32.mrf.mxu0
      %630 = vmatprep.mubr.f32.mxu0 0.0
      %631 = vmatmul.mubr.f32.gmra.mxu0 %v367
      %v632 = vpop.f32.mrf.mxu0
      %v633 = vadd.f32 %v357, %v632
      %v634 = vpop.f32.mrf.mxu0
      %635 = vmatprep.mubr.f32.mxu0 0.0
      %636 = vmatmul.mubr.f32.gmra.mxu0 %v370
      %v637 = vpop.f32.mrf.mxu0
      %v638 = vadd.f32 %v357, %v637
      %v639 = vpop.f32.mrf.mxu0
      %640 = vmatprep.mubr.f32.mxu0 0.0
      %641 = vmatmul.mubr.f32.gmra.mxu0 %v373
      %v642 = vpop.f32.mrf.mxu0
      %v643 = vadd.f32 %v357, %v642
      %v644 = vpop.f32.mrf.mxu0
      %645 = vmatprep.mubr.f32.mxu0 0.0
      %646 = vmatmul.mubr.f32.gmra.mxu0 %v376
      %v647 = vpop.f32.mrf.mxu0
      %v648 = vadd.f32 %v357, %v647
      %v649 = vpop.f32.mrf.mxu0
      %650 = vmatprep.mubr.f32.mxu0 0.0
      %651 = vmatmul.mubr.f32.gmra.mxu0 %v379
      %v652 = vpop.f32.mrf.mxu0
      %v653 = vadd.f32 %v357, %v652
      %v654 = vpop.f32.mrf.mxu0
      %655 = vmatprep.mubr.f32.mxu0 0.0
      %656 = vmatmul.mubr.f32.gmra.mxu0 %v382
      %v657 = vpop.f32.mrf.mxu0
      %v658 = vadd.f32 %v357, %v657
      %v659 = vpop.f32.mrf.mxu0
      %660 = vmatprep.mubr.f32.mxu0 0.0
      %661 = vmatmul.mubr.f32.gmra.mxu0 %v385
      %v662 = vpop.f32.mrf.mxu0
      %v663 = vadd.f32 %v357, %v662
      %v664 = vpop.f32.mrf.mxu0
      %665 = vmatprep.mubr.f32.mxu0 0.0
      %666 = vmatmul.mubr.f32.gmra.mxu0 %v388
      %v667 = vpop.f32.mrf.mxu0
      %v668 = vadd.f32 %v357, %v667
      %v669 = vpop.f32.mrf.mxu0
      %670 = vmatprep.mubr.f32.mxu0 0.0
      %671 = vmatmul.mubr.f32.gmra.mxu0 %v391
      %v672 = vpop.f32.mrf.mxu0
      %v673 = vadd.f32 %v357, %v672
      %v674 = vpop.f32.mrf.mxu0
      %675 = vmatprep.mubr.f32.mxu0 0.0
      %676 = vmatmul.mubr.f32.gmra.mxu0 %v394
      %v677 = vpop.f32.mrf.mxu0
      %v678 = vadd.f32 %v357, %v677
      %v679 = vpop.f32.mrf.mxu0
      %680 = vmatprep.mubr.f32.mxu0 0.0
      %681 = vmatmul.mubr.f32.gmra.mxu0 %v397
      %v682 = vpop.f32.mrf.mxu0
      %v683 = vadd.f32 %v357, %v682
      %v684 = vpop.f32.mrf.mxu0
      %685 = vmatprep.mubr.f32.mxu0 0.0
      %686 = vmatmul.mubr.f32.gmra.mxu0 %v400
      %v687 = vpop.f32.mrf.mxu0
      %v688 = vadd.f32 %v357, %v687
      %v689 = vpop.f32.mrf.mxu0
      %690 = vmatprep.mubr.f32.mxu0 0.0
      %691 = vmatmul.mubr.f32.gmra.mxu0 %v403
      %v692 = vpop.f32.mrf.mxu0
      %v693 = vadd.f32 %v357, %v692
      %v694 = vpop.f32.mrf.mxu0
      %695 = vmatprep.mubr.f32.mxu0 0.0
      %696 = vmatmul.mubr.f32.gmra.mxu0 %v406
      %v697 = vpop.f32.mrf.mxu0
      %v698 = vadd.f32 %v357, %v697
      %v699 = vpop.f32.mrf.mxu0
      %700 = vmatprep.mubr.f32.mxu0 0.0
      %701 = vmatmul.mubr.f32.gmra.mxu0 %v409
      %v702 = vpop.f32.mrf.mxu0
      %v703 = vadd.f32 %v357, %v702
      %v704 = vpop.f32.mrf.mxu0
      %705 = vmatprep.mubr.f32.mxu0 0.0
      %706 = vmatmul.mubr.f32.gmra.mxu0 %v412
      %v707 = vpop.f32.mrf.mxu0
      %v708 = vadd.f32 %v357, %v707
      %v709 = vpop.f32.mrf.mxu0
      %710 = vmatprep.mubr.f32.mxu0 0.0
      %711 = vmatmul.mubr.f32.gmra.mxu0 %v415
      %v712 = vpop.f32.mrf.mxu0
      %v713 = vadd.f32 %v357, %v712
      %v714 = vpop.f32.mrf.mxu0
      %715 = vmatprep.mubr.f32.mxu0 0.0
      %716 = vmatmul.mubr.f32.gmra.mxu0 %v418
      %v717 = vpop.f32.mrf.mxu0
      %v718 = vadd.f32 %v357, %v717
      %v719 = vpop.f32.mrf.mxu0
      %720 = vmatprep.mubr.f32.mxu0 0.0
      %721 = vmatmul.mubr.f32.gmra.mxu0 %v421
      %v722 = vpop.f32.mrf.mxu0
      %v723 = vadd.f32 %v357, %v722
      %v724 = vpop.f32.mrf.mxu0
      %725 = vmatprep.mubr.f32.mxu0 0.0
      %726 = vmatmul.mubr.f32.gmra.mxu0 %v424
      %v727 = vpop.f32.mrf.mxu0
      %v728 = vadd.f32 %v357, %v727
      %v729 = vpop.f32.mrf.mxu0
      %730 = vmatprep.mubr.f32.mxu0 0.0
      %731 = vmatmul.mubr.f32.gmra.mxu0 %v427
      %v732 = vpop.f32.mrf.mxu0
      %v733 = vadd.f32 %v357, %v732
      %v734 = vpop.f32.mrf.mxu0
      %735 = vmatprep.mubr.f32.mxu0 0.0
      %736 = vmatmul.mubr.f32.gmra.mxu0 %v430
      %v737 = vpop.f32.mrf.mxu0
      %v738 = vadd.f32 %v357, %v737
      %v739 = vpop.f32.mrf.mxu0
      %740 = vmatprep.mubr.f32.mxu0 0.0
      %741 = vmatmul.mubr.f32.gmra.mxu0 %v433
      %v742 = vpop.f32.mrf.mxu0
      %v743 = vadd.f32 %v357, %v742
      %v744 = vpop.f32.mrf.mxu0
      %745 = vmatprep.mubr.f32.mxu0 0.0
      %746 = vmatmul.mubr.f32.gmra.mxu0 %v436
      %v747 = vpop.f32.mrf.mxu0
      %v748 = vadd.f32 %v357, %v747
      %v749 = vpop.f32.mrf.mxu0
      %750 = vmatprep.mubr.f32.mxu0 0.0
      %751 = vmatmul.mubr.f32.gmra.mxu0 %v439
      %v752 = vpop.f32.mrf.mxu0
      %v753 = vadd.f32 %v357, %v752
      %v754 = vpop.f32.mrf.mxu0
      %755 = vmatprep.mubr.f32.mxu0 0.0
      %756 = vmatmul.mubr.f32.gmra.mxu0 %v442
      %v757 = vpop.f32.mrf.mxu0
      %v758 = vadd.f32 %v357, %v757
      %v759 = vpop.f32.mrf.mxu0
      %760 = vmatprep.mubr.f32.mxu0 0.0
      %761 = vmatmul.mubr.f32.gmra.mxu0 %v445
      %v762 = vpop.f32.mrf.mxu0
      %v763 = vadd.f32 %v357, %v762
      %v764 = vpop.f32.mrf.mxu0
      %765 = vmatprep.mubr.f32.mxu0 0.0
      %766 = vmatmul.mubr.f32.gmra.mxu0 %v448
      %v767 = vpop.f32.mrf.mxu0
      %v768 = vadd.f32 %v357, %v767
      %v769 = vpop.f32.mrf.mxu0
      %770 = vmatprep.mubr.f32.mxu0 0.0
      %771 = vmatmul.mubr.f32.gmra.mxu0 %v451
      %v772 = vpop.f32.mrf.mxu0
      %v773 = vadd.f32 %v357, %v772
      %v774 = vpop.f32.mrf.mxu0
      %775 = vmatprep.mubr.f32.mxu0 0.0
      %776 = vmatmul.mubr.f32.gmra.mxu0 %v454
      %v777 = vpop.f32.mrf.mxu0
      %v778 = vadd.f32 %v357, %v777
      %v779 = vpop.f32.mrf.mxu0
      %780 = vmatprep.mubr.f32.mxu0 0.0
      %781 = vmatmul.mubr.f32.gmra.mxu0 %v457
      %v782 = vpop.f32.mrf.mxu0
      %v783 = vadd.f32 %v357, %v782
      %v784 = vpop.f32.mrf.mxu0
      %785 = vmatprep.mubr.f32.mxu0 0.0
      %786 = vmatmul.mubr.f32.gmra.mxu0 %v460
      %v787 = vpop.f32.mrf.mxu0
      %v788 = vadd.f32 %v357, %v787
      %v789 = vpop.f32.mrf.mxu0
      %790 = vmatprep.mubr.f32.mxu0 0.0
      %791 = vmatmul.mubr.f32.gmra.mxu0 %v463
      %v792 = vpop.f32.mrf.mxu0
      %v793 = vadd.f32 %v357, %v792
      %v794 = vpop.f32.mrf.mxu0
      %795 = vmatprep.mubr.f32.mxu0 0.0
      %796 = vmatmul.mubr.f32.gmra.mxu0 %v466
      %v797 = vpop.f32.mrf.mxu0
      %v798 = vadd.f32 %v357, %v797
      %v799 = vpop.f32.mrf.mxu0
      %800 = vmatprep.mubr.f32.mxu0 0.0
      %801 = vmatmul.mubr.f32.gmra.mxu0 %v469
      %v802 = vpop.f32.mrf.mxu0
      %v803 = vadd.f32 %v357, %v802
      %v804 = vpop.f32.mrf.mxu0
      %805 = vmatprep.mubr.f32.mxu0 0.0
      %806 = vmatmul.mubr.f32.gmra.mxu0 %v472
      %v807 = vpop.f32.mrf.mxu0
      %v808 = vadd.f32 %v357, %v807
      %v809 = vpop.f32.mrf.mxu0
      %810 = vmatprep.mubr.f32.mxu0 0.0
      %811 = vmatmul.mubr.f32.gmra.mxu0 %v475
      %v812 = vpop.f32.mrf.mxu0
      %v813 = vadd.f32 %v357, %v812
      %v814 = vpop.f32.mrf.mxu0
      %815 = vmatprep.mubr.f32.mxu0 0.0
      %816 = vmatmul.mubr.f32.gmra.mxu0 %v478
      %v817 = vpop.f32.mrf.mxu0
      %v818 = vadd.f32 %v357, %v817
      %v819 = vpop.f32.mrf.mxu0
      %820 = vmatprep.mubr.f32.mxu0 0.0
      %821 = vmatmul.mubr.f32.gmra.mxu0 %v481
      %v822 = vpop.f32.mrf.mxu0
      %v823 = vadd.f32 %v357, %v822
      %v824 = vpop.f32.mrf.mxu0
      %825 = vmatprep.mubr.f32.mxu0 0.0
      %826 = vmatmul.mubr.f32.gmra.mxu0 %v484
      %v827 = vpop.f32.mrf.mxu0
      %v828 = vadd.f32 %v357, %v827
      %v829 = vpop.f32.mrf.mxu0
      %830 = vmatprep.mubr.f32.mxu0 0.0
      %831 = vmatmul.mubr.f32.gmra.mxu0 %v487
      %v832 = vpop.f32.mrf.mxu0
      %v833 = vadd.f32 %v357, %v832
      %v834 = vpop.f32.mrf.mxu0
      %835 = vmatprep.mubr.f32.mxu0 0.0
      %836 = vmatmul.mubr.f32.gmra.mxu0 %v490
      %v837 = vpop.f32.mrf.mxu0
      %v838 = vadd.f32 %v357, %v837
      %v839 = vpop.f32.mrf.mxu0
      %840 = vmatprep.mubr.f32.mxu0 0.0
      %841 = vmatmul.mubr.f32.gmra.mxu0 %v493
      %v842 = vpop.f32.mrf.mxu0
      %v843 = vadd.f32 %v357, %v842
      %v844 = vpop.f32.mrf.mxu0
      %845 = vmatprep.mubr.f32.mxu0 0.0
      %846 = vmatmul.mubr.f32.gmra.mxu0 %v496
      %v847 = vpop.f32.mrf.mxu0
      %v848 = vadd.f32 %v357, %v847
      %v849 = vpop.f32.mrf.mxu0
      %850 = vmatprep.mubr.f32.mxu0 0.0
      %851 = vmatmul.mubr.f32.gmra.mxu0 %v499
      %v852 = vpop.f32.mrf.mxu0
      %v853 = vadd.f32 %v357, %v852
      %v854 = vpop.f32.mrf.mxu0
      %855 = vmatprep.mubr.f32.mxu0 0.0
      %856 = vmatmul.mubr.f32.gmra.mxu0 %v502
      %v857 = vpop.f32.mrf.mxu0
      %v858 = vadd.f32 %v357, %v857
      %v859 = vpop.f32.mrf.mxu0
      %860 = vmatprep.mubr.f32.mxu0 0.0
      %861 = vmatmul.mubr.f32.gmra.mxu0 %v505
      %v862 = vpop.f32.mrf.mxu0
      %v863 = vadd.f32 %v357, %v862
      %v864 = vpop.f32.mrf.mxu0
      %865 = vmatprep.mubr.f32.mxu0 0.0
      %866 = vmatmul.mubr.f32.gmra.mxu0 %v508
      %v867 = vpop.f32.mrf.mxu0
      %v868 = vadd.f32 %v357, %v867
      %v869 = vpop.f32.mrf.mxu0
      %870 = vmatprep.mubr.f32.mxu0 0.0
      %871 = vmatmul.mubr.f32.gmra.mxu0 %v511
      %v872 = vpop.f32.mrf.mxu0
      %v873 = vadd.f32 %v357, %v872
      %v874 = vpop.f32.mrf.mxu0
      %875 = vmatprep.mubr.f32.mxu0 0.0
      %876 = vmatmul.mubr.f32.gmra.mxu0 %v514
      %v877 = vpop.f32.mrf.mxu0
      %v878 = vadd.f32 %v357, %v877
      %v879 = vpop.f32.mrf.mxu0
      %880 = vmatprep.mubr.f32.mxu0 0.0
      %881 = vmatmul.mubr.f32.gmra.mxu0 %v517
      %v882 = vpop.f32.mrf.mxu0
      %v883 = vadd.f32 %v357, %v882
      %v884 = vpop.f32.mrf.mxu0
      %885 = vmatprep.mubr.f32.mxu0 0.0
      %886 = vmatmul.mubr.f32.gmra.mxu0 %v520
      %v887 = vpop.f32.mrf.mxu0
      %v888 = vadd.f32 %v357, %v887
      %v889 = vpop.f32.mrf.mxu0
      %890 = vmatprep.mubr.f32.mxu0 0.0
      %891 = vmatmul.mubr.f32.gmra.mxu0 %v523
      %v892 = vpop.f32.mrf.mxu0
      %v893 = vadd.f32 %v357, %v892
      %v894 = vpop.f32.mrf.mxu0
      %895 = vmatprep.mubr.f32.mxu0 0.0
      %896 = vmatmul.mubr.f32.gmra.mxu0 %v526
      %v897 = vpop.f32.mrf.mxu0
      %v898 = vadd.f32 %v357, %v897
      %v899 = vpop.f32.mrf.mxu0
      %900 = vmatprep.mubr.f32.mxu0 0.0
      %901 = vmatmul.mubr.f32.gmra.mxu0 %v529
      %v902 = vpop.f32.mrf.mxu0
      %v903 = vadd.f32 %v357, %v902
      %v904 = vpop.f32.mrf.mxu0
      %905 = vmatprep.mubr.f32.mxu0 0.0
      %906 = vmatmul.mubr.f32.gmra.mxu0 %v532
      %v907 = vpop.f32.mrf.mxu0
      %v908 = vadd.f32 %v357, %v907
      %v909 = vpop.f32.mrf.mxu0
      %910 = vmatprep.mubr.f32.mxu0 0.0
      %911 = vmatmul.mubr.f32.gmra.mxu0 %v535
      %v912 = vpop.f32.mrf.mxu0
      %v913 = vadd.f32 %v357, %v912
      %v914 = vpop.f32.mrf.mxu0
      %915 = vmatprep.mubr.f32.mxu0 0.0
      %916 = vmatmul.mubr.f32.gmra.mxu0 %v538
      %v917 = vpop.f32.mrf.mxu0
      %v918 = vadd.f32 %v357, %v917
      %v919 = vpop.f32.mrf.mxu0
      %920 = vmatprep.mubr.f32.mxu0 0.0
      %921 = vmatmul.mubr.f32.gmra.mxu0 %v541
      %v922 = vpop.f32.mrf.mxu0
      %v923 = vadd.f32 %v357, %v922
      %v924 = vpop.f32.mrf.mxu0
      %925 = vmatprep.mubr.f32.mxu0 0.0
      %926 = vmatmul.mubr.f32.gmra.mxu0 %v544
      %v927 = vpop.f32.mrf.mxu0
      %v928 = vadd.f32 %v357, %v927
      %v929 = vpop.f32.mrf.mxu0
      %930 = vmatprep.mubr.f32.mxu0 0.0
      %931 = vmatmul.mubr.f32.gmra.mxu0 %v547
      %v932 = vpop.f32.mrf.mxu0
      %v933 = vadd.f32 %v357, %v932
      %v934 = vpop.f32.mrf.mxu0
      %935 = vmatprep.mubr.f32.mxu0 0.0
      %936 = vmatmul.mubr.f32.gmra.mxu0 %v550
      %v937 = vpop.f32.mrf.mxu0
      %v938 = vadd.f32 %v357, %v937
      %v939 = vpop.f32.mrf.mxu0
      %940 = vdwg.mxu0
      %v941 = vmax.f32 %v623, 0.0
      %v942 = vmax.f32 %v628, 0.0
      %v943 = vmax.f32 %v633, 0.0
      %v944 = vmax.f32 %v638, 0.0
      %v945 = vmax.f32 %v643, 0.0
      %v946 = vmax.f32 %v648, 0.0
      %v947 = vmax.f32 %v653, 0.0
      %v948 = vmax.f32 %v658, 0.0
      %v949 = vmax.f32 %v663, 0.0
      %v950 = vmax.f32 %v668, 0.0
      %v951 = vmax.f32 %v673, 0.0
      %v952 = vmax.f32 %v678, 0.0
      %v953 = vmax.f32 %v683, 0.0
      %v954 = vmax.f32 %v688, 0.0
      %v955 = vmax.f32 %v693, 0.0
      %v956 = vmax.f32 %v698, 0.0
      %v957 = vmax.f32 %v703, 0.0
      %v958 = vmax.f32 %v708, 0.0
      %v959 = vmax.f32 %v713, 0.0
      %v960 = vmax.f32 %v718, 0.0
      %v961 = vmax.f32 %v723, 0.0
      %v962 = vmax.f32 %v728, 0.0
      %v963 = vmax.f32 %v733, 0.0
      %v964 = vmax.f32 %v738, 0.0
      %v965 = vmax.f32 %v743, 0.0
      %v966 = vmax.f32 %v748, 0.0
      %v967 = vmax.f32 %v753, 0.0
      %v968 = vmax.f32 %v758, 0.0
      %v969 = vmax.f32 %v763, 0.0
      %v970 = vmax.f32 %v768, 0.0
      %v971 = vmax.f32 %v773, 0.0
      %v972 = vmax.f32 %v778, 0.0
      %v973 = vmax.f32 %v783, 0.0
      %v974 = vmax.f32 %v788, 0.0
      %v975 = vmax.f32 %v793, 0.0
      %v976 = vmax.f32 %v798, 0.0
      %v977 = vmax.f32 %v803, 0.0
      %v978 = vmax.f32 %v808, 0.0
      %v979 = vmax.f32 %v813, 0.0
      %v980 = vmax.f32 %v818, 0.0
      %v981 = vmax.f32 %v823, 0.0
      %v982 = vmax.f32 %v828, 0.0
      %v983 = vmax.f32 %v833, 0.0
      %v984 = vmax.f32 %v838, 0.0
      %v985 = vmax.f32 %v843, 0.0
      %v986 = vmax.f32 %v848, 0.0
      %v987 = vmax.f32 %v853, 0.0
      %v988 = vmax.f32 %v858, 0.0
      %v989 = vmax.f32 %v863, 0.0
      %v990 = vmax.f32 %v868, 0.0
      %v991 = vmax.f32 %v873, 0.0
      %v992 = vmax.f32 %v878, 0.0
      %v993 = vmax.f32 %v883, 0.0
      %v994 = vmax.f32 %v888, 0.0
      %v995 = vmax.f32 %v893, 0.0
      %v996 = vmax.f32 %v898, 0.0
      %v997 = vmax.f32 %v903, 0.0
      %v998 = vmax.f32 %v908, 0.0
      %v999 = vmax.f32 %v913, 0.0
      %v1000 = vmax.f32 %v918, 0.0
      %v1001 = vmax.f32 %v923, 0.0
      %v1002 = vmax.f32 %v928, 0.0
      %v1003 = vmax.f32 %v933, 0.0
      %v1004 = vmax.f32 %v938, 0.0
      %1005 = vst.msk [vmem:[#allocation2] sm:$0xff] %vm359, 0.0
      %1006 = vst.msk [vmem:[#allocation2 + $0x8] sm:$0xff] %vm359, 0.0
      %vm1007 = vcmask 25600
      %1008 = vst.msk [vmem:[#allocation2 + $0x10] sm:$0x3] %vm1007, 0.0
      %1009 = vst.msk [vmem:[#allocation2 + $0x1b0] sm:$0xff] %vm359, 0.0
      %1010 = vst.msk [vmem:[#allocation2 + $0x1b8] sm:$0xff] %vm359, 0.0
      %1011 = vst.msk [vmem:[#allocation2 + $0x1c0] sm:$0x3] %vm1007, 0.0
      %s1012 = scalar_lea.vmem [#allocation2], 408
      %1013 = vst.msk [vmem:[%s1012] sm:$0xff] %vm359, 0.0
      %1014 = vst.msk [vmem:[%s1012 + $0x8] sm:$0xff] %vm359, 0.0
      %1015 = vst.msk [vmem:[%s1012 + $0x10] sm:$0x3] %vm1007, 0.0
      %1016 = vst.msk [vmem:[%s1012 + $0x1b0] sm:$0xff] %vm359, 0.0
      %1017 = vst.msk [vmem:[%s1012 + $0x1b8] sm:$0xff] %vm359, 0.0
      %1018 = vst.msk [vmem:[%s1012 + $0x1c0] sm:$0x3] %vm1007, 0.0
      %s1019 = scalar_lea.vmem [#allocation2], 24
      %vm1020 = vcmask 24576
      %1021 = vst.msk [vmem:[%s1019] sm:$0x1] %vm1020, 0.0
      %1022 = vst.msk [vmem:[%s1019 + $0x18] sm:$0x1] %vm1020, 0.0
      %1023 = vst.msk [vmem:[%s1019 + $0x30] sm:$0x1] %vm1020, 0.0
      %1024 = vst.msk [vmem:[%s1019 + $0x48] sm:$0x1] %vm1020, 0.0
      %1025 = vst.msk [vmem:[%s1019 + $0x60] sm:$0x1] %vm1020, 0.0
      %1026 = vst.msk [vmem:[%s1019 + $0x78] sm:$0x1] %vm1020, 0.0
      %1027 = vst.msk [vmem:[%s1019 + $0x90] sm:$0x1] %vm1020, 0.0
      %1028 = vst.msk [vmem:[%s1019 + $0xa8] sm:$0x1] %vm1020, 0.0
      %1029 = vst.msk [vmem:[%s1019 + $0xc0] sm:$0x1] %vm1020, 0.0
      %1030 = vst.msk [vmem:[%s1019 + $0xd8] sm:$0x1] %vm1020, 0.0
      %1031 = vst.msk [vmem:[%s1019 + $0xf0] sm:$0x1] %vm1020, 0.0
      %1032 = vst.msk [vmem:[%s1019 + $0x108] sm:$0x1] %vm1020, 0.0
      %1033 = vst.msk [vmem:[%s1019 + $0x120] sm:$0x1] %vm1020, 0.0
      %1034 = vst.msk [vmem:[%s1019 + $0x138] sm:$0x1] %vm1020, 0.0
      %1035 = vst.msk [vmem:[%s1019 + $0x150] sm:$0x1] %vm1020, 0.0
      %1036 = vst.msk [vmem:[%s1019 + $0x168] sm:$0x1] %vm1020, 0.0
      %1037 = vst.msk [vmem:[%s1019 + $0x1b0] sm:$0x1] %vm1020, 0.0
      %1038 = vst.msk [vmem:[%s1019 + $0x1c8] sm:$0x1] %vm1020, 0.0
      %1039 = vst.msk [vmem:[%s1019 + $0x1e0] sm:$0x1] %vm1020, 0.0
      %1040 = vst.msk [vmem:[%s1019 + $0x1f8] sm:$0x1] %vm1020, 0.0
      %1041 = vst.msk [vmem:[%s1019 + $0x210] sm:$0x1] %vm1020, 0.0
      %1042 = vst.msk [vmem:[%s1019 + $0x228] sm:$0x1] %vm1020, 0.0
      %1043 = vst.msk [vmem:[%s1019 + $0x240] sm:$0x1] %vm1020, 0.0
      %1044 = vst.msk [vmem:[%s1019 + $0x258] sm:$0x1] %vm1020, 0.0
      %1045 = vst.msk [vmem:[%s1019 + $0x270] sm:$0x1] %vm1020, 0.0
      %1046 = vst.msk [vmem:[%s1019 + $0x288] sm:$0x1] %vm1020, 0.0
      %1047 = vst.msk [vmem:[%s1019 + $0x2a0] sm:$0x1] %vm1020, 0.0
      %1048 = vst.msk [vmem:[%s1019 + $0x2b8] sm:$0x1] %vm1020, 0.0
      %1049 = vst.msk [vmem:[%s1019 + $0x2d0] sm:$0x1] %vm1020, 0.0
      %1050 = vst.msk [vmem:[%s1019 + $0x2e8] sm:$0x1] %vm1020, 0.0
      %1051 = vst.msk [vmem:[%s1019 + $0x300] sm:$0x1] %vm1020, 0.0
      %1052 = vst.msk [vmem:[%s1019 + $0x318] sm:$0x1] %vm1020, 0.0
      %1053 = vst.msk [vmem:[%s1019 + $0x11] sm:$0x1] %vm1020, 0.0
      %1054 = vst.msk [vmem:[%s1019 + $0x29] sm:$0x1] %vm1020, 0.0
      %1055 = vst.msk [vmem:[%s1019 + $0x41] sm:$0x1] %vm1020, 0.0
      %1056 = vst.msk [vmem:[%s1019 + $0x59] sm:$0x1] %vm1020, 0.0
      %1057 = vst.msk [vmem:[%s1019 + $0x71] sm:$0x1] %vm1020, 0.0
      %1058 = vst.msk [vmem:[%s1019 + $0x89] sm:$0x1] %vm1020, 0.0
      %1059 = vst.msk [vmem:[%s1019 + $0xa1] sm:$0x1] %vm1020, 0.0
      %1060 = vst.msk [vmem:[%s1019 + $0xb9] sm:$0x1] %vm1020, 0.0
      %1061 = vst.msk [vmem:[%s1019 + $0xd1] sm:$0x1] %vm1020, 0.0
      %1062 = vst.msk [vmem:[%s1019 + $0xe9] sm:$0x1] %vm1020, 0.0
      %1063 = vst.msk [vmem:[%s1019 + $0x101] sm:$0x1] %vm1020, 0.0
      %1064 = vst.msk [vmem:[%s1019 + $0x119] sm:$0x1] %vm1020, 0.0
      %1065 = vst.msk [vmem:[%s1019 + $0x131] sm:$0x1] %vm1020, 0.0
      %1066 = vst.msk [vmem:[%s1019 + $0x149] sm:$0x1] %vm1020, 0.0
      %1067 = vst.msk [vmem:[%s1019 + $0x161] sm:$0x1] %vm1020, 0.0
      %1068 = vst.msk [vmem:[%s1019 + $0x179] sm:$0x1] %vm1020, 0.0
      %1069 = vst.msk [vmem:[%s1019 + $0x1c1] sm:$0x1] %vm1020, 0.0
      %1070 = vst.msk [vmem:[%s1019 + $0x1d9] sm:$0x1] %vm1020, 0.0
      %1071 = vst.msk [vmem:[%s1019 + $0x1f1] sm:$0x1] %vm1020, 0.0
      %1072 = vst.msk [vmem:[%s1019 + $0x209] sm:$0x1] %vm1020, 0.0
      %1073 = vst.msk [vmem:[%s1019 + $0x221] sm:$0x1] %vm1020, 0.0
      %1074 = vst.msk [vmem:[%s1019 + $0x239] sm:$0x1] %vm1020, 0.0
      %1075 = vst.msk [vmem:[%s1019 + $0x251] sm:$0x1] %vm1020, 0.0
      %1076 = vst.msk [vmem:[%s1019 + $0x269] sm:$0x1] %vm1020, 0.0
      %1077 = vst.msk [vmem:[%s1019 + $0x281] sm:$0x1] %vm1020, 0.0
      %1078 = vst.msk [vmem:[%s1019 + $0x299] sm:$0x1] %vm1020, 0.0
      %1079 = vst.msk [vmem:[%s1019 + $0x2b1] sm:$0x1] %vm1020, 0.0
      %1080 = vst.msk [vmem:[%s1019 + $0x2c9] sm:$0x1] %vm1020, 0.0
      %1081 = vst.msk [vmem:[%s1019 + $0x2e1] sm:$0x1] %vm1020, 0.0
      %1082 = vst.msk [vmem:[%s1019 + $0x2f9] sm:$0x1] %vm1020, 0.0
      %1083 = vst.msk [vmem:[%s1019 + $0x311] sm:$0x1] %vm1020, 0.0
      %1084 = vst.msk [vmem:[%s1019 + $0x329] sm:$0x1] %vm1020, 0.0
      %1085 = vst.msk [vmem:[%s1019 + $0x1] sm:$0xff] %vm359, %v941
      %1086 = vst.msk [vmem:[%s1019 + $0x9] sm:$0xff] %vm359, %v942
      %1087 = vst.msk [vmem:[%s1019 + $0x19] sm:$0xff] %vm359, %v943
      %1088 = vst.msk [vmem:[%s1019 + $0x21] sm:$0xff] %vm359, %v944
      %1089 = vst.msk [vmem:[%s1019 + $0x31] sm:$0xff] %vm359, %v945
      %1090 = vst.msk [vmem:[%s1019 + $0x39] sm:$0xff] %vm359, %v946
      %1091 = vst.msk [vmem:[%s1019 + $0x49] sm:$0xff] %vm359, %v947
      %1092 = vst.msk [vmem:[%s1019 + $0x51] sm:$0xff] %vm359, %v948
      %1093 = vst.msk [vmem:[%s1019 + $0x61] sm:$0xff] %vm359, %v949
      %1094 = vst.msk [vmem:[%s1019 + $0x69] sm:$0xff] %vm359, %v950
      %1095 = vst.msk [vmem:[%s1019 + $0x79] sm:$0xff] %vm359, %v951
      %1096 = vst.msk [vmem:[%s1019 + $0x81] sm:$0xff] %vm359, %v952
      %1097 = vst.msk [vmem:[%s1019 + $0x91] sm:$0xff] %vm359, %v953
      %1098 = vst.msk [vmem:[%s1019 + $0x99] sm:$0xff] %vm359, %v954
      %1099 = vst.msk [vmem:[%s1019 + $0xa9] sm:$0xff] %vm359, %v955
      %1100 = vst.msk [vmem:[%s1019 + $0xb1] sm:$0xff] %vm359, %v956
      %1101 = vst.msk [vmem:[%s1019 + $0xc1] sm:$0xff] %vm359, %v957
      %1102 = vst.msk [vmem:[%s1019 + $0xc9] sm:$0xff] %vm359, %v958
      %1103 = vst.msk [vmem:[%s1019 + $0xd9] sm:$0xff] %vm359, %v959
      %1104 = vst.msk [vmem:[%s1019 + $0xe1] sm:$0xff] %vm359, %v960
      %1105 = vst.msk [vmem:[%s1019 + $0xf1] sm:$0xff] %vm359, %v961
      %1106 = vst.msk [vmem:[%s1019 + $0xf9] sm:$0xff] %vm359, %v962
      %1107 = vst.msk [vmem:[%s1019 + $0x109] sm:$0xff] %vm359, %v963
      %1108 = vst.msk [vmem:[%s1019 + $0x111] sm:$0xff] %vm359, %v964
      %1109 = vst.msk [vmem:[%s1019 + $0x121] sm:$0xff] %vm359, %v965
      %1110 = vst.msk [vmem:[%s1019 + $0x129] sm:$0xff] %vm359, %v966
      %1111 = vst.msk [vmem:[%s1019 + $0x139] sm:$0xff] %vm359, %v967
      %1112 = vst.msk [vmem:[%s1019 + $0x141] sm:$0xff] %vm359, %v968
      %1113 = vst.msk [vmem:[%s1019 + $0x151] sm:$0xff] %vm359, %v969
      %1114 = vst.msk [vmem:[%s1019 + $0x159] sm:$0xff] %vm359, %v970
      %1115 = vst.msk [vmem:[%s1019 + $0x169] sm:$0xff] %vm359, %v971
      %1116 = vst.msk [vmem:[%s1019 + $0x171] sm:$0xff] %vm359, %v972
      %1117 = vst.msk [vmem:[%s1019 + $0x1b1] sm:$0xff] %vm359, %v973
      %1118 = vst.msk [vmem:[%s1019 + $0x1b9] sm:$0xff] %vm359, %v974
      %1119 = vst.msk [vmem:[%s1019 + $0x1c9] sm:$0xff] %vm359, %v975
      %1120 = vst.msk [vmem:[%s1019 + $0x1d1] sm:$0xff] %vm359, %v976
      %1121 = vst.msk [vmem:[%s1019 + $0x1e1] sm:$0xff] %vm359, %v977
      %1122 = vst.msk [vmem:[%s1019 + $0x1e9] sm:$0xff] %vm359, %v978
      %1123 = vst.msk [vmem:[%s1019 + $0x1f9] sm:$0xff] %vm359, %v979
      %1124 = vst.msk [vmem:[%s1019 + $0x201] sm:$0xff] %vm359, %v980
      %1125 = vst.msk [vmem:[%s1019 + $0x211] sm:$0xff] %vm359, %v981
      %1126 = vst.msk [vmem:[%s1019 + $0x219] sm:$0xff] %vm359, %v982
      %1127 = vst.msk [vmem:[%s1019 + $0x229] sm:$0xff] %vm359, %v983
      %1128 = vst.msk [vmem:[%s1019 + $0x231] sm:$0xff] %vm359, %v984
      %1129 = vst.msk [vmem:[%s1019 + $0x241] sm:$0xff] %vm359, %v985
      %1130 = vst.msk [vmem:[%s1019 + $0x249] sm:$0xff] %vm359, %v986
      %1131 = vst.msk [vmem:[%s1019 + $0x259] sm:$0xff] %vm359, %v987
      %1132 = vst.msk [vmem:[%s1019 + $0x261] sm:$0xff] %vm359, %v988
      %1133 = vst.msk [vmem:[%s1019 + $0x271] sm:$0xff] %vm359, %v989
      %1134 = vst.msk [vmem:[%s1019 + $0x279] sm:$0xff] %vm359, %v990
      %1135 = vst.msk [vmem:[%s1019 + $0x289] sm:$0xff] %vm359, %v991
      %1136 = vst.msk [vmem:[%s1019 + $0x291] sm:$0xff] %vm359, %v992
      %1137 = vst.msk [vmem:[%s1019 + $0x2a1] sm:$0xff] %vm359, %v993
      %1138 = vst.msk [vmem:[%s1019 + $0x2a9] sm:$0xff] %vm359, %v994
      %1139 = vst.msk [vmem:[%s1019 + $0x2b9] sm:$0xff] %vm359, %v995
      %1140 = vst.msk [vmem:[%s1019 + $0x2c1] sm:$0xff] %vm359, %v996
      %1141 = vst.msk [vmem:[%s1019 + $0x2d1] sm:$0xff] %vm359, %v997
      %1142 = vst.msk [vmem:[%s1019 + $0x2d9] sm:$0xff] %vm359, %v998
      %1143 = vst.msk [vmem:[%s1019 + $0x2e9] sm:$0xff] %vm359, %v999
      %1144 = vst.msk [vmem:[%s1019 + $0x2f1] sm:$0xff] %vm359, %v1000
      %1145 = vst.msk [vmem:[%s1019 + $0x301] sm:$0xff] %vm359, %v1001
      %1146 = vst.msk [vmem:[%s1019 + $0x309] sm:$0xff] %vm359, %v1002
      %1147 = vst.msk [vmem:[%s1019 + $0x319] sm:$0xff] %vm359, %v1003
      %1148 = vst.msk [vmem:[%s1019 + $0x321] sm:$0xff] %vm359, %v1004
      %v1149 = vld [vmem:[#allocation2] sm:$0xff]
      %v1150 = vld [vmem:[#allocation2 + $0x8] sm:$0xff]
      %v1151 = vld [vmem:[#allocation2 + $0x18] sm:$0xff]
      %v1152 = vld [vmem:[#allocation2 + $0x20] sm:$0xff]
      %v1153 = vld [vmem:[#allocation2 + $0x30] sm:$0xff]
      %v1154 = vld [vmem:[#allocation2 + $0x38] sm:$0xff]
      %v1155 = vld [vmem:[#allocation2 + $0x48] sm:$0xff]
      %v1156 = vld [vmem:[#allocation2 + $0x50] sm:$0xff]
      %v1157 = vld [vmem:[#allocation2 + $0x60] sm:$0xff]
      %v1158 = vld [vmem:[#allocation2 + $0x68] sm:$0xff]
      %v1159 = vld [vmem:[#allocation2 + $0x78] sm:$0xff]
      %v1160 = vld [vmem:[#allocation2 + $0x80] sm:$0xff]
      %v1161 = vld [vmem:[#allocation2 + $0x90] sm:$0xff]
      %v1162 = vld [vmem:[#allocation2 + $0x98] sm:$0xff]
      %v1163 = vld [vmem:[#allocation2 + $0xa8] sm:$0xff]
      %v1164 = vld [vmem:[#allocation2 + $0xb0] sm:$0xff]
      %v1165 = vld [vmem:[#allocation2 + $0xc0] sm:$0xff]
      %v1166 = vld [vmem:[#allocation2 + $0xc8] sm:$0xff]
      %v1167 = vld [vmem:[#allocation2 + $0xd8] sm:$0xff]
      %v1168 = vld [vmem:[#allocation2 + $0xe0] sm:$0xff]
      %v1169 = vld [vmem:[#allocation2 + $0xf0] sm:$0xff]
      %v1170 = vld [vmem:[#allocation2 + $0xf8] sm:$0xff]
      %v1171 = vld [vmem:[#allocation2 + $0x108] sm:$0xff]
      %v1172 = vld [vmem:[#allocation2 + $0x110] sm:$0xff]
      %v1173 = vld [vmem:[#allocation2 + $0x120] sm:$0xff]
      %v1174 = vld [vmem:[#allocation2 + $0x128] sm:$0xff]
      %v1175 = vld [vmem:[#allocation2 + $0x138] sm:$0xff]
      %v1176 = vld [vmem:[#allocation2 + $0x140] sm:$0xff]
      %v1177 = vld [vmem:[#allocation2 + $0x150] sm:$0xff]
      %v1178 = vld [vmem:[#allocation2 + $0x158] sm:$0xff]
      %v1179 = vld [vmem:[#allocation2 + $0x168] sm:$0xff]
      %v1180 = vld [vmem:[#allocation2 + $0x170] sm:$0xff]
      %v1181 = vld [vmem:[#allocation2 + $0x1b0] sm:$0xff]
      %v1182 = vld [vmem:[#allocation2 + $0x1b8] sm:$0xff]
      %v1183 = vld [vmem:[#allocation2 + $0x1c8] sm:$0xff]
      %v1184 = vld [vmem:[#allocation2 + $0x1d0] sm:$0xff]
      %v1185 = vld [vmem:[#allocation2 + $0x1e0] sm:$0xff]
      %v1186 = vld [vmem:[#allocation2 + $0x1e8] sm:$0xff]
      %v1187 = vld [vmem:[#allocation2 + $0x1f8] sm:$0xff]
      %v1188 = vld [vmem:[#allocation2 + $0x200] sm:$0xff]
      %v1189 = vld [vmem:[#allocation2 + $0x210] sm:$0xff]
      %v1190 = vld [vmem:[#allocation2 + $0x218] sm:$0xff]
      %v1191 = vld [vmem:[#allocation2 + $0x228] sm:$0xff]
      %v1192 = vld [vmem:[#allocation2 + $0x230] sm:$0xff]
      %v1193 = vld [vmem:[#allocation2 + $0x240] sm:$0xff]
      %v1194 = vld [vmem:[#allocation2 + $0x248] sm:$0xff]
      %v1195 = vld [vmem:[#allocation2 + $0x258] sm:$0xff]
      %v1196 = vld [vmem:[#allocation2 + $0x260] sm:$0xff]
      %v1197 = vld [vmem:[#allocation2 + $0x270] sm:$0xff]
      %v1198 = vld [vmem:[#allocation2 + $0x278] sm:$0xff]
      %v1199 = vld [vmem:[#allocation2 + $0x288] sm:$0xff]
      %v1200 = vld [vmem:[#allocation2 + $0x290] sm:$0xff]
      %v1201 = vld [vmem:[#allocation2 + $0x2a0] sm:$0xff]
      %v1202 = vld [vmem:[#allocation2 + $0x2a8] sm:$0xff]
      %v1203 = vld [vmem:[#allocation2 + $0x2b8] sm:$0xff]
      %v1204 = vld [vmem:[#allocation2 + $0x2c0] sm:$0xff]
      %v1205 = vld [vmem:[#allocation2 + $0x2d0] sm:$0xff]
      %v1206 = vld [vmem:[#allocation2 + $0x2d8] sm:$0xff]
      %v1207 = vld [vmem:[#allocation2 + $0x2e8] sm:$0xff]
      %v1208 = vld [vmem:[#allocation2 + $0x2f0] sm:$0xff]
      %v1209 = vld [vmem:[#allocation2 + $0x300] sm:$0xff]
      %v1210 = vld [vmem:[#allocation2 + $0x308] sm:$0xff]
      %v1211 = vld [vmem:[#allocation2 + $0x318] sm:$0xff]
      %v1212 = vld [vmem:[#allocation2 + $0x320] sm:$0xff]
      %v1213 = vld [vmem:[%s3] sm:$0x1]
      %v1214 = vlaneseq
      %v1215 = vshrl.u32 %v1214, 7
      %v1216 = vsub.s32 0, %v1215
      %v1217 = vrot.slane %v1213, %v1216
      %v1218 = vmul.f32 %v1149, %v1217
      %v1219 = vmul.f32 %v1150, %v1217
      %v1220 = vmul.f32 %v1151, %v1217
      %v1221 = vmul.f32 %v1152, %v1217
      %v1222 = vmul.f32 %v1153, %v1217
      %v1223 = vmul.f32 %v1154, %v1217
      %v1224 = vmul.f32 %v1155, %v1217
      %v1225 = vmul.f32 %v1156, %v1217
      %v1226 = vmul.f32 %v1157, %v1217
      %v1227 = vmul.f32 %v1158, %v1217
      %v1228 = vmul.f32 %v1159, %v1217
      %v1229 = vmul.f32 %v1160, %v1217
      %v1230 = vmul.f32 %v1161, %v1217
      %v1231 = vmul.f32 %v1162, %v1217
      %v1232 = vmul.f32 %v1163, %v1217
      %v1233 = vmul.f32 %v1164, %v1217
      %v1234 = vmul.f32 %v1165, %v1217
      %v1235 = vmul.f32 %v1166, %v1217
      %v1236 = vmul.f32 %v1167, %v1217
      %v1237 = vmul.f32 %v1168, %v1217
      %v1238 = vmul.f32 %v1169, %v1217
      %v1239 = vmul.f32 %v1170, %v1217
      %v1240 = vmul.f32 %v1171, %v1217
      %v1241 = vmul.f32 %v1172, %v1217
      %v1242 = vmul.f32 %v1173, %v1217
      %v1243 = vmul.f32 %v1174, %v1217
      %v1244 = vmul.f32 %v1175, %v1217
      %v1245 = vmul.f32 %v1176, %v1217
      %v1246 = vmul.f32 %v1177, %v1217
      %v1247 = vmul.f32 %v1178, %v1217
      %v1248 = vmul.f32 %v1179, %v1217
      %v1249 = vmul.f32 %v1180, %v1217
      %v1250 = vmul.f32 %v1181, %v1217
      %v1251 = vmul.f32 %v1182, %v1217
      %v1252 = vmul.f32 %v1183, %v1217
      %v1253 = vmul.f32 %v1184, %v1217
      %v1254 = vmul.f32 %v1185, %v1217
      %v1255 = vmul.f32 %v1186, %v1217
      %v1256 = vmul.f32 %v1187, %v1217
      %v1257 = vmul.f32 %v1188, %v1217
      %v1258 = vmul.f32 %v1189, %v1217
      %v1259 = vmul.f32 %v1190, %v1217
      %v1260 = vmul.f32 %v1191, %v1217
      %v1261 = vmul.f32 %v1192, %v1217
      %v1262 = vmul.f32 %v1193, %v1217
      %v1263 = vmul.f32 %v1194, %v1217
      %v1264 = vmul.f32 %v1195, %v1217
      %v1265 = vmul.f32 %v1196, %v1217
      %v1266 = vmul.f32 %v1197, %v1217
      %v1267 = vmul.f32 %v1198, %v1217
      %v1268 = vmul.f32 %v1199, %v1217
      %v1269 = vmul.f32 %v1200, %v1217
      %v1270 = vmul.f32 %v1201, %v1217
      %v1271 = vmul.f32 %v1202, %v1217
      %v1272 = vmul.f32 %v1203, %v1217
      %v1273 = vmul.f32 %v1204, %v1217
      %v1274 = vmul.f32 %v1205, %v1217
      %v1275 = vmul.f32 %v1206, %v1217
      %v1276 = vmul.f32 %v1207, %v1217
      %v1277 = vmul.f32 %v1208, %v1217
      %v1278 = vmul.f32 %v1209, %v1217
      %v1279 = vmul.f32 %v1210, %v1217
      %v1280 = vmul.f32 %v1211, %v1217
      %v1281 = vmul.f32 %v1212, %v1217
      %v1282 = vadd.f32 %v1218, 0.0
      %v1283 = vadd.f32 %v1219, 0.0
      %v1284 = vadd.f32 %v1220, 0.0
      %v1285 = vadd.f32 %v1221, 0.0
      %v1286 = vadd.f32 %v1222, 0.0
      %v1287 = vadd.f32 %v1223, 0.0
      %v1288 = vadd.f32 %v1224, 0.0
      %v1289 = vadd.f32 %v1225, 0.0
      %v1290 = vadd.f32 %v1226, 0.0
      %v1291 = vadd.f32 %v1227, 0.0
      %v1292 = vadd.f32 %v1228, 0.0
      %v1293 = vadd.f32 %v1229, 0.0
      %v1294 = vadd.f32 %v1230, 0.0
      %v1295 = vadd.f32 %v1231, 0.0
      %v1296 = vadd.f32 %v1232, 0.0
      %v1297 = vadd.f32 %v1233, 0.0
      %v1298 = vadd.f32 %v1234, 0.0
      %v1299 = vadd.f32 %v1235, 0.0
      %v1300 = vadd.f32 %v1236, 0.0
      %v1301 = vadd.f32 %v1237, 0.0
      %v1302 = vadd.f32 %v1238, 0.0
      %v1303 = vadd.f32 %v1239, 0.0
      %v1304 = vadd.f32 %v1240, 0.0
      %v1305 = vadd.f32 %v1241, 0.0
      %v1306 = vadd.f32 %v1242, 0.0
      %v1307 = vadd.f32 %v1243, 0.0
      %v1308 = vadd.f32 %v1244, 0.0
      %v1309 = vadd.f32 %v1245, 0.0
      %v1310 = vadd.f32 %v1246, 0.0
      %v1311 = vadd.f32 %v1247, 0.0
      %v1312 = vadd.f32 %v1248, 0.0
      %v1313 = vadd.f32 %v1249, 0.0
      %v1314 = vadd.f32 %v1250, 0.0
      %v1315 = vadd.f32 %v1251, 0.0
      %v1316 = vadd.f32 %v1252, 0.0
      %v1317 = vadd.f32 %v1253, 0.0
      %v1318 = vadd.f32 %v1254, 0.0
      %v1319 = vadd.f32 %v1255, 0.0
      %v1320 = vadd.f32 %v1256, 0.0
      %v1321 = vadd.f32 %v1257, 0.0
      %v1322 = vadd.f32 %v1258, 0.0
      %v1323 = vadd.f32 %v1259, 0.0
      %v1324 = vadd.f32 %v1260, 0.0
      %v1325 = vadd.f32 %v1261, 0.0
      %v1326 = vadd.f32 %v1262, 0.0
      %v1327 = vadd.f32 %v1263, 0.0
      %v1328 = vadd.f32 %v1264, 0.0
      %v1329 = vadd.f32 %v1265, 0.0
      %v1330 = vadd.f32 %v1266, 0.0
      %v1331 = vadd.f32 %v1267, 0.0
      %v1332 = vadd.f32 %v1268, 0.0
      %v1333 = vadd.f32 %v1269, 0.0
      %v1334 = vadd.f32 %v1270, 0.0
      %v1335 = vadd.f32 %v1271, 0.0
      %v1336 = vadd.f32 %v1272, 0.0
      %v1337 = vadd.f32 %v1273, 0.0
      %v1338 = vadd.f32 %v1274, 0.0
      %v1339 = vadd.f32 %v1275, 0.0
      %v1340 = vadd.f32 %v1276, 0.0
      %v1341 = vadd.f32 %v1277, 0.0
      %v1342 = vadd.f32 %v1278, 0.0
      %v1343 = vadd.f32 %v1279, 0.0
      %v1344 = vadd.f32 %v1280, 0.0
      %v1345 = vadd.f32 %v1281, 0.0
      %v1346 = vld [vmem:[#allocation2 + $0x1] sm:$0xff]
      %v1347 = vld [vmem:[#allocation2 + $0x9] sm:$0xff]
      %v1348 = vld [vmem:[#allocation2 + $0x19] sm:$0xff]
      %v1349 = vld [vmem:[#allocation2 + $0x21] sm:$0xff]
      %v1350 = vld [vmem:[#allocation2 + $0x31] sm:$0xff]
      %v1351 = vld [vmem:[#allocation2 + $0x39] sm:$0xff]
      %v1352 = vld [vmem:[#allocation2 + $0x49] sm:$0xff]
      %v1353 = vld [vmem:[#allocation2 + $0x51] sm:$0xff]
      %v1354 = vld [vmem:[#allocation2 + $0x61] sm:$0xff]
      %v1355 = vld [vmem:[#allocation2 + $0x69] sm:$0xff]
      %v1356 = vld [vmem:[#allocation2 + $0x79] sm:$0xff]
      %v1357 = vld [vmem:[#allocation2 + $0x81] sm:$0xff]
      %v1358 = vld [vmem:[#allocation2 + $0x91] sm:$0xff]
      %v1359 = vld [vmem:[#allocation2 + $0x99] sm:$0xff]
      %v1360 = vld [vmem:[#allocation2 + $0xa9] sm:$0xff]
      %v1361 = vld [vmem:[#allocation2 + $0xb1] sm:$0xff]
      %v1362 = vld [vmem:[#allocation2 + $0xc1] sm:$0xff]
      %v1363 = vld [vmem:[#allocation2 + $0xc9] sm:$0xff]
      %v1364 = vld [vmem:[#allocation2 + $0xd9] sm:$0xff]
      %v1365 = vld [vmem:[#allocation2 + $0xe1] sm:$0xff]
      %v1366 = vld [vmem:[#allocation2 + $0xf1] sm:$0xff]
      %v1367 = vld [vmem:[#allocation2 + $0xf9] sm:$0xff]
      %v1368 = vld [vmem:[#allocation2 + $0x109] sm:$0xff]
      %v1369 = vld [vmem:[#allocation2 + $0x111] sm:$0xff]
      %v1370 = vld [vmem:[#allocation2 + $0x121] sm:$0xff]
      %v1371 = vld [vmem:[#allocation2 + $0x129] sm:$0xff]
      %v1372 = vld [vmem:[#allocation2 + $0x139] sm:$0xff]
      %v1373 = vld [vmem:[#allocation2 + $0x141] sm:$0xff]
      %v1374 = vld [vmem:[#allocation2 + $0x151] sm:$0xff]
      %v1375 = vld [vmem:[#allocation2 + $0x159] sm:$0xff]
      %v1376 = vld [vmem:[#allocation2 + $0x169] sm:$0xff]
      %v1377 = vld [vmem:[#allocation2 + $0x171] sm:$0xff]
      %v1378 = vld [vmem:[#allocation2 + $0x1b1] sm:$0xff]
      %v1379 = vld [vmem:[#allocation2 + $0x1b9] sm:$0xff]
      %v1380 = vld [vmem:[#allocation2 + $0x1c9] sm:$0xff]
      %v1381 = vld [vmem:[#allocation2 + $0x1d1] sm:$0xff]
      %v1382 = vld [vmem:[#allocation2 + $0x1e1] sm:$0xff]
      %v1383 = vld [vmem:[#allocation2 + $0x1e9] sm:$0xff]
      %v1384 = vld [vmem:[#allocation2 + $0x1f9] sm:$0xff]
      %v1385 = vld [vmem:[#allocation2 + $0x201] sm:$0xff]
      %v1386 = vld [vmem:[#allocation2 + $0x211] sm:$0xff]
      %v1387 = vld [vmem:[#allocation2 + $0x219] sm:$0xff]
      %v1388 = vld [vmem:[#allocation2 + $0x229] sm:$0xff]
      %v1389 = vld [vmem:[#allocation2 + $0x231] sm:$0xff]
      %v1390 = vld [vmem:[#allocation2 + $0x241] sm:$0xff]
      %v1391 = vld [vmem:[#allocation2 + $0x249] sm:$0xff]
      %v1392 = vld [vmem:[#allocation2 + $0x259] sm:$0xff]
      %v1393 = vld [vmem:[#allocation2 + $0x261] sm:$0xff]
      %v1394 = vld [vmem:[#allocation2 + $0x271] sm:$0xff]
      %v1395 = vld [vmem:[#allocation2 + $0x279] sm:$0xff]
      %v1396 = vld [vmem:[#allocation2 + $0x289] sm:$0xff]
      %v1397 = vld [vmem:[#allocation2 + $0x291] sm:$0xff]
      %v1398 = vld [vmem:[#allocation2 + $0x2a1] sm:$0xff]
      %v1399 = vld [vmem:[#allocation2 + $0x2a9] sm:$0xff]
      %v1400 = vld [vmem:[#allocation2 + $0x2b9] sm:$0xff]
      %v1401 = vld [vmem:[#allocation2 + $0x2c1] sm:$0xff]
      %v1402 = vld [vmem:[#allocation2 + $0x2d1] sm:$0xff]
      %v1403 = vld [vmem:[#allocation2 + $0x2d9] sm:$0xff]
      %v1404 = vld [vmem:[#allocation2 + $0x2e9] sm:$0xff]
      %v1405 = vld [vmem:[#allocation2 + $0x2f1] sm:$0xff]
      %v1406 = vld [vmem:[#allocation2 + $0x301] sm:$0xff]
      %v1407 = vld [vmem:[#allocation2 + $0x309] sm:$0xff]
      %v1408 = vld [vmem:[#allocation2 + $0x319] sm:$0xff]
      %v1409 = vld [vmem:[#allocation2 + $0x321] sm:$0xff]
      %v1410 = vld [vmem:[%s3 + $0x1] sm:$0x1]
      %v1411 = vlaneseq
      %v1412 = vshrl.u32 %v1411, 7
      %v1413 = vsub.s32 0, %v1412
      %v1414 = vrot.slane %v1410, %v1413
      %v1415 = vmul.f32 %v1346, %v1414
      %v1416 = vmul.f32 %v1347, %v1414
      %v1417 = vmul.f32 %v1348, %v1414
      %v1418 = vmul.f32 %v1349, %v1414
      %v1419 = vmul.f32 %v1350, %v1414
      %v1420 = vmul.f32 %v1351, %v1414
      %v1421 = vmul.f32 %v1352, %v1414
      %v1422 = vmul.f32 %v1353, %v1414
      %v1423 = vmul.f32 %v1354, %v1414
      %v1424 = vmul.f32 %v1355, %v1414
      %v1425 = vmul.f32 %v1356, %v1414
      %v1426 = vmul.f32 %v1357, %v1414
      %v1427 = vmul.f32 %v1358, %v1414
      %v1428 = vmul.f32 %v1359, %v1414
      %v1429 = vmul.f32 %v1360, %v1414
      %v1430 = vmul.f32 %v1361, %v1414
      %v1431 = vmul.f32 %v1362, %v1414
      %v1432 = vmul.f32 %v1363, %v1414
      %v1433 = vmul.f32 %v1364, %v1414
      %v1434 = vmul.f32 %v1365, %v1414
      %v1435 = vmul.f32 %v1366, %v1414
      %v1436 = vmul.f32 %v1367, %v1414
      %v1437 = vmul.f32 %v1368, %v1414
      %v1438 = vmul.f32 %v1369, %v1414
      %v1439 = vmul.f32 %v1370, %v1414
      %v1440 = vmul.f32 %v1371, %v1414
      %v1441 = vmul.f32 %v1372, %v1414
      %v1442 = vmul.f32 %v1373, %v1414
      %v1443 = vmul.f32 %v1374, %v1414
      %v1444 = vmul.f32 %v1375, %v1414
      %v1445 = vmul.f32 %v1376, %v1414
      %v1446 = vmul.f32 %v1377, %v1414
      %v1447 = vmul.f32 %v1378, %v1414
      %v1448 = vmul.f32 %v1379, %v1414
      %v1449 = vmul.f32 %v1380, %v1414
      %v1450 = vmul.f32 %v1381, %v1414
      %v1451 = vmul.f32 %v1382, %v1414
      %v1452 = vmul.f32 %v1383, %v1414
      %v1453 = vmul.f32 %v1384, %v1414
      %v1454 = vmul.f32 %v1385, %v1414
      %v1455 = vmul.f32 %v1386, %v1414
      %v1456 = vmul.f32 %v1387, %v1414
      %v1457 = vmul.f32 %v1388, %v1414
      %v1458 = vmul.f32 %v1389, %v1414
      %v1459 = vmul.f32 %v1390, %v1414
      %v1460 = vmul.f32 %v1391, %v1414
      %v1461 = vmul.f32 %v1392, %v1414
      %v1462 = vmul.f32 %v1393, %v1414
      %v1463 = vmul.f32 %v1394, %v1414
      %v1464 = vmul.f32 %v1395, %v1414
      %v1465 = vmul.f32 %v1396, %v1414
      %v1466 = vmul.f32 %v1397, %v1414
      %v1467 = vmul.f32 %v1398, %v1414
      %v1468 = vmul.f32 %v1399, %v1414
      %v1469 = vmul.f32 %v1400, %v1414
      %v1470 = vmul.f32 %v1401, %v1414
      %v1471 = vmul.f32 %v1402, %v1414
      %v1472 = vmul.f32 %v1403, %v1414
      %v1473 = vmul.f32 %v1404, %v1414
      %v1474 = vmul.f32 %v1405, %v1414
      %v1475 = vmul.f32 %v1406, %v1414
      %v1476 = vmul.f32 %v1407, %v1414
      %v1477 = vmul.f32 %v1408, %v1414
      %v1478 = vmul.f32 %v1409, %v1414
      %v1479 = vadd.f32 %v1282, %v1415
      %v1480 = vadd.f32 %v1283, %v1416
      %v1481 = vadd.f32 %v1284, %v1417
      %v1482 = vadd.f32 %v1285, %v1418
      %v1483 = vadd.f32 %v1286, %v1419
      %v1484 = vadd.f32 %v1287, %v1420
      %v1485 = vadd.f32 %v1288, %v1421
      %v1486 = vadd.f32 %v1289, %v1422
      %v1487 = vadd.f32 %v1290, %v1423
      %v1488 = vadd.f32 %v1291, %v1424
      %v1489 = vadd.f32 %v1292, %v1425
      %v1490 = vadd.f32 %v1293, %v1426
      %v1491 = vadd.f32 %v1294, %v1427
      %v1492 = vadd.f32 %v1295, %v1428
      %v1493 = vadd.f32 %v1296, %v1429
      %v1494 = vadd.f32 %v1297, %v1430
      %v1495 = vadd.f32 %v1298, %v1431
      %v1496 = vadd.f32 %v1299, %v1432
      %v1497 = vadd.f32 %v1300, %v1433
      %v1498 = vadd.f32 %v1301, %v1434
      %v1499 = vadd.f32 %v1302, %v1435
      %v1500 = vadd.f32 %v1303, %v1436
      %v1501 = vadd.f32 %v1304, %v1437
      %v1502 = vadd.f32 %v1305, %v1438
      %v1503 = vadd.f32 %v1306, %v1439
      %v1504 = vadd.f32 %v1307, %v1440
      %v1505 = vadd.f32 %v1308, %v1441
      %v1506 = vadd.f32 %v1309, %v1442
      %v1507 = vadd.f32 %v1310, %v1443
      %v1508 = vadd.f32 %v1311, %v1444
      %v1509 = vadd.f32 %v1312, %v1445
      %v1510 = vadd.f32 %v1313, %v1446
      %v1511 = vadd.f32 %v1314, %v1447
      %v1512 = vadd.f32 %v1315, %v1448
      %v1513 = vadd.f32 %v1316, %v1449
      %v1514 = vadd.f32 %v1317, %v1450
      %v1515 = vadd.f32 %v1318, %v1451
      %v1516 = vadd.f32 %v1319, %v1452
      %v1517 = vadd.f32 %v1320, %v1453
      %v1518 = vadd.f32 %v1321, %v1454
      %v1519 = vadd.f32 %v1322, %v1455
      %v1520 = vadd.f32 %v1323, %v1456
      %v1521 = vadd.f32 %v1324, %v1457
      %v1522 = vadd.f32 %v1325, %v1458
      %v1523 = vadd.f32 %v1326, %v1459
      %v1524 = vadd.f32 %v1327, %v1460
      %v1525 = vadd.f32 %v1328, %v1461
      %v1526 = vadd.f32 %v1329, %v1462
      %v1527 = vadd.f32 %v1330, %v1463
      %v1528 = vadd.f32 %v1331, %v1464
      %v1529 = vadd.f32 %v1332, %v1465
      %v1530 = vadd.f32 %v1333, %v1466
      %v1531 = vadd.f32 %v1334, %v1467
      %v1532 = vadd.f32 %v1335, %v1468
      %v1533 = vadd.f32 %v1336, %v1469
      %v1534 = vadd.f32 %v1337, %v1470
      %v1535 = vadd.f32 %v1338, %v1471
      %v1536 = vadd.f32 %v1339, %v1472
      %v1537 = vadd.f32 %v1340, %v1473
      %v1538 = vadd.f32 %v1341, %v1474
      %v1539 = vadd.f32 %v1342, %v1475
      %v1540 = vadd.f32 %v1343, %v1476
      %v1541 = vadd.f32 %v1344, %v1477
      %v1542 = vadd.f32 %v1345, %v1478
      %v1543 = vld [vmem:[#allocation2 + $0x2] sm:$0xff]
      %v1544 = vld [vmem:[#allocation2 + $0xa] sm:$0xff]
      %v1545 = vld [vmem:[#allocation2 + $0x1a] sm:$0xff]
      %v1546 = vld [vmem:[#allocation2 + $0x22] sm:$0xff]
      %v1547 = vld [vmem:[#allocation2 + $0x32] sm:$0xff]
      %v1548 = vld [vmem:[#allocation2 + $0x3a] sm:$0xff]
      %v1549 = vld [vmem:[#allocation2 + $0x4a] sm:$0xff]
      %v1550 = vld [vmem:[#allocation2 + $0x52] sm:$0xff]
      %v1551 = vld [vmem:[#allocation2 + $0x62] sm:$0xff]
      %v1552 = vld [vmem:[#allocation2 + $0x6a] sm:$0xff]
      %v1553 = vld [vmem:[#allocation2 + $0x7a] sm:$0xff]
      %v1554 = vld [vmem:[#allocation2 + $0x82] sm:$0xff]
      %v1555 = vld [vmem:[#allocation2 + $0x92] sm:$0xff]
      %v1556 = vld [vmem:[#allocation2 + $0x9a] sm:$0xff]
      %v1557 = vld [vmem:[#allocation2 + $0xaa] sm:$0xff]
      %v1558 = vld [vmem:[#allocation2 + $0xb2] sm:$0xff]
      %v1559 = vld [vmem:[#allocation2 + $0xc2] sm:$0xff]
      %v1560 = vld [vmem:[#allocation2 + $0xca] sm:$0xff]
      %v1561 = vld [vmem:[#allocation2 + $0xda] sm:$0xff]
      %v1562 = vld [vmem:[#allocation2 + $0xe2] sm:$0xff]
      %v1563 = vld [vmem:[#allocation2 + $0xf2] sm:$0xff]
      %v1564 = vld [vmem:[#allocation2 + $0xfa] sm:$0xff]
      %v1565 = vld [vmem:[#allocation2 + $0x10a] sm:$0xff]
      %v1566 = vld [vmem:[#allocation2 + $0x112] sm:$0xff]
      %v1567 = vld [vmem:[#allocation2 + $0x122] sm:$0xff]
      %v1568 = vld [vmem:[#allocation2 + $0x12a] sm:$0xff]
      %v1569 = vld [vmem:[#allocation2 + $0x13a] sm:$0xff]
      %v1570 = vld [vmem:[#allocation2 + $0x142] sm:$0xff]
      %v1571 = vld [vmem:[#allocation2 + $0x152] sm:$0xff]
      %v1572 = vld [vmem:[#allocation2 + $0x15a] sm:$0xff]
      %v1573 = vld [vmem:[#allocation2 + $0x16a] sm:$0xff]
      %v1574 = vld [vmem:[#allocation2 + $0x172] sm:$0xff]
      %v1575 = vld [vmem:[#allocation2 + $0x1b2] sm:$0xff]
      %v1576 = vld [vmem:[#allocation2 + $0x1ba] sm:$0xff]
      %v1577 = vld [vmem:[#allocation2 + $0x1ca] sm:$0xff]
      %v1578 = vld [vmem:[#allocation2 + $0x1d2] sm:$0xff]
      %v1579 = vld [vmem:[#allocation2 + $0x1e2] sm:$0xff]
      %v1580 = vld [vmem:[#allocation2 + $0x1ea] sm:$0xff]
      %v1581 = vld [vmem:[#allocation2 + $0x1fa] sm:$0xff]
      %v1582 = vld [vmem:[#allocation2 + $0x202] sm:$0xff]
      %v1583 = vld [vmem:[#allocation2 + $0x212] sm:$0xff]
      %v1584 = vld [vmem:[#allocation2 + $0x21a] sm:$0xff]
      %v1585 = vld [vmem:[#allocation2 + $0x22a] sm:$0xff]
      %v1586 = vld [vmem:[#allocation2 + $0x232] sm:$0xff]
      %v1587 = vld [vmem:[#allocation2 + $0x242] sm:$0xff]
      %v1588 = vld [vmem:[#allocation2 + $0x24a] sm:$0xff]
      %v1589 = vld [vmem:[#allocation2 + $0x25a] sm:$0xff]
      %v1590 = vld [vmem:[#allocation2 + $0x262] sm:$0xff]
      %v1591 = vld [vmem:[#allocation2 + $0x272] sm:$0xff]
      %v1592 = vld [vmem:[#allocation2 + $0x27a] sm:$0xff]
      %v1593 = vld [vmem:[#allocation2 + $0x28a] sm:$0xff]
      %v1594 = vld [vmem:[#allocation2 + $0x292] sm:$0xff]
      %v1595 = vld [vmem:[#allocation2 + $0x2a2] sm:$0xff]
      %v1596 = vld [vmem:[#allocation2 + $0x2aa] sm:$0xff]
      %v1597 = vld [vmem:[#allocation2 + $0x2ba] sm:$0xff]
      %v1598 = vld [vmem:[#allocation2 + $0x2c2] sm:$0xff]
      %v1599 = vld [vmem:[#allocation2 + $0x2d2] sm:$0xff]
      %v1600 = vld [vmem:[#allocation2 + $0x2da] sm:$0xff]
      %v1601 = vld [vmem:[#allocation2 + $0x2ea] sm:$0xff]
      %v1602 = vld [vmem:[#allocation2 + $0x2f2] sm:$0xff]
      %v1603 = vld [vmem:[#allocation2 + $0x302] sm:$0xff]
      %v1604 = vld [vmem:[#allocation2 + $0x30a] sm:$0xff]
      %v1605 = vld [vmem:[#allocation2 + $0x31a] sm:$0xff]
      %v1606 = vld [vmem:[#allocation2 + $0x322] sm:$0xff]
      %v1607 = vld [vmem:[%s3 + $0x2] sm:$0x1]
      %v1608 = vlaneseq
      %v1609 = vshrl.u32 %v1608, 7
      %v1610 = vsub.s32 0, %v1609
      %v1611 = vrot.slane %v1607, %v1610
      %v1612 = vmul.f32 %v1543, %v1611
      %v1613 = vmul.f32 %v1544, %v1611
      %v1614 = vmul.f32 %v1545, %v1611
      %v1615 = vmul.f32 %v1546, %v1611
      %v1616 = vmul.f32 %v1547, %v1611
      %v1617 = vmul.f32 %v1548, %v1611
      %v1618 = vmul.f32 %v1549, %v1611
      %v1619 = vmul.f32 %v1550, %v1611
      %v1620 = vmul.f32 %v1551, %v1611
      %v1621 = vmul.f32 %v1552, %v1611
      %v1622 = vmul.f32 %v1553, %v1611
      %v1623 = vmul.f32 %v1554, %v1611
      %v1624 = vmul.f32 %v1555, %v1611
      %v1625 = vmul.f32 %v1556, %v1611
      %v1626 = vmul.f32 %v1557, %v1611
      %v1627 = vmul.f32 %v1558, %v1611
      %v1628 = vmul.f32 %v1559, %v1611
      %v1629 = vmul.f32 %v1560, %v1611
      %v1630 = vmul.f32 %v1561, %v1611
      %v1631 = vmul.f32 %v1562, %v1611
      %v1632 = vmul.f32 %v1563, %v1611
      %v1633 = vmul.f32 %v1564, %v1611
      %v1634 = vmul.f32 %v1565, %v1611
      %v1635 = vmul.f32 %v1566, %v1611
      %v1636 = vmul.f32 %v1567, %v1611
      %v1637 = vmul.f32 %v1568, %v1611
      %v1638 = vmul.f32 %v1569, %v1611
      %v1639 = vmul.f32 %v1570, %v1611
      %v1640 = vmul.f32 %v1571, %v1611
      %v1641 = vmul.f32 %v1572, %v1611
      %v1642 = vmul.f32 %v1573, %v1611
      %v1643 = vmul.f32 %v1574, %v1611
      %v1644 = vmul.f32 %v1575, %v1611
      %v1645 = vmul.f32 %v1576, %v1611
      %v1646 = vmul.f32 %v1577, %v1611
      %v1647 = vmul.f32 %v1578, %v1611
      %v1648 = vmul.f32 %v1579, %v1611
      %v1649 = vmul.f32 %v1580, %v1611
      %v1650 = vmul.f32 %v1581, %v1611
      %v1651 = vmul.f32 %v1582, %v1611
      %v1652 = vmul.f32 %v1583, %v1611
      %v1653 = vmul.f32 %v1584, %v1611
      %v1654 = vmul.f32 %v1585, %v1611
      %v1655 = vmul.f32 %v1586, %v1611
      %v1656 = vmul.f32 %v1587, %v1611
      %v1657 = vmul.f32 %v1588, %v1611
      %v1658 = vmul.f32 %v1589, %v1611
      %v1659 = vmul.f32 %v1590, %v1611
      %v1660 = vmul.f32 %v1591, %v1611
      %v1661 = vmul.f32 %v1592, %v1611
      %v1662 = vmul.f32 %v1593, %v1611
      %v1663 = vmul.f32 %v1594, %v1611
      %v1664 = vmul.f32 %v1595, %v1611
      %v1665 = vmul.f32 %v1596, %v1611
      %v1666 = vmul.f32 %v1597, %v1611
      %v1667 = vmul.f32 %v1598, %v1611
      %v1668 = vmul.f32 %v1599, %v1611
      %v1669 = vmul.f32 %v1600, %v1611
      %v1670 = vmul.f32 %v1601, %v1611
      %v1671 = vmul.f32 %v1602, %v1611
      %v1672 = vmul.f32 %v1603, %v1611
      %v1673 = vmul.f32 %v1604, %v1611
      %v1674 = vmul.f32 %v1605, %v1611
      %v1675 = vmul.f32 %v1606, %v1611
      %v1676 = vadd.f32 %v1479, %v1612
      %v1677 = vadd.f32 %v1480, %v1613
      %v1678 = vadd.f32 %v1481, %v1614
      %v1679 = vadd.f32 %v1482, %v1615
      %v1680 = vadd.f32 %v1483, %v1616
      %v1681 = vadd.f32 %v1484, %v1617
      %v1682 = vadd.f32 %v1485, %v1618
      %v1683 = vadd.f32 %v1486, %v1619
      %v1684 = vadd.f32 %v1487, %v1620
      %v1685 = vadd.f32 %v1488, %v1621
      %v1686 = vadd.f32 %v1489, %v1622
      %v1687 = vadd.f32 %v1490, %v1623
      %v1688 = vadd.f32 %v1491, %v1624
      %v1689 = vadd.f32 %v1492, %v1625
      %v1690 = vadd.f32 %v1493, %v1626
      %v1691 = vadd.f32 %v1494, %v1627
      %v1692 = vadd.f32 %v1495, %v1628
      %v1693 = vadd.f32 %v1496, %v1629
      %v1694 = vadd.f32 %v1497, %v1630
      %v1695 = vadd.f32 %v1498, %v1631
      %v1696 = vadd.f32 %v1499, %v1632
      %v1697 = vadd.f32 %v1500, %v1633
      %v1698 = vadd.f32 %v1501, %v1634
      %v1699 = vadd.f32 %v1502, %v1635
      %v1700 = vadd.f32 %v1503, %v1636
      %v1701 = vadd.f32 %v1504, %v1637
      %v1702 = vadd.f32 %v1505, %v1638
      %v1703 = vadd.f32 %v1506, %v1639
      %v1704 = vadd.f32 %v1507, %v1640
      %v1705 = vadd.f32 %v1508, %v1641
      %v1706 = vadd.f32 %v1509, %v1642
      %v1707 = vadd.f32 %v1510, %v1643
      %v1708 = vadd.f32 %v1511, %v1644
      %v1709 = vadd.f32 %v1512, %v1645
      %v1710 = vadd.f32 %v1513, %v1646
      %v1711 = vadd.f32 %v1514, %v1647
      %v1712 = vadd.f32 %v1515, %v1648
      %v1713 = vadd.f32 %v1516, %v1649
      %v1714 = vadd.f32 %v1517, %v1650
      %v1715 = vadd.f32 %v1518, %v1651
      %v1716 = vadd.f32 %v1519, %v1652
      %v1717 = vadd.f32 %v1520, %v1653
      %v1718 = vadd.f32 %v1521, %v1654
      %v1719 = vadd.f32 %v1522, %v1655
      %v1720 = vadd.f32 %v1523, %v1656
      %v1721 = vadd.f32 %v1524, %v1657
      %v1722 = vadd.f32 %v1525, %v1658
      %v1723 = vadd.f32 %v1526, %v1659
      %v1724 = vadd.f32 %v1527, %v1660
      %v1725 = vadd.f32 %v1528, %v1661
      %v1726 = vadd.f32 %v1529, %v1662
      %v1727 = vadd.f32 %v1530, %v1663
      %v1728 = vadd.f32 %v1531, %v1664
      %v1729 = vadd.f32 %v1532, %v1665
      %v1730 = vadd.f32 %v1533, %v1666
      %v1731 = vadd.f32 %v1534, %v1667
      %v1732 = vadd.f32 %v1535, %v1668
      %v1733 = vadd.f32 %v1536, %v1669
      %v1734 = vadd.f32 %v1537, %v1670
      %v1735 = vadd.f32 %v1538, %v1671
      %v1736 = vadd.f32 %v1539, %v1672
      %v1737 = vadd.f32 %v1540, %v1673
      %v1738 = vadd.f32 %v1541, %v1674
      %v1739 = vadd.f32 %v1542, %v1675
      %v1740 = vld [vmem:[%s1019] sm:$0xff]
      %v1741 = vld [vmem:[%s1019 + $0x8] sm:$0xff]
      %v1742 = vld [vmem:[%s1019 + $0x18] sm:$0xff]
      %v1743 = vld [vmem:[%s1019 + $0x20] sm:$0xff]
      %v1744 = vld [vmem:[%s1019 + $0x30] sm:$0xff]
      %v1745 = vld [vmem:[%s1019 + $0x38] sm:$0xff]
      %v1746 = vld [vmem:[%s1019 + $0x48] sm:$0xff]
      %v1747 = vld [vmem:[%s1019 + $0x50] sm:$0xff]
      %v1748 = vld [vmem:[%s1019 + $0x60] sm:$0xff]
      %v1749 = vld [vmem:[%s1019 + $0x68] sm:$0xff]
      %v1750 = vld [vmem:[%s1019 + $0x78] sm:$0xff]
      %v1751 = vld [vmem:[%s1019 + $0x80] sm:$0xff]
      %v1752 = vld [vmem:[%s1019 + $0x90] sm:$0xff]
      %v1753 = vld [vmem:[%s1019 + $0x98] sm:$0xff]
      %v1754 = vld [vmem:[%s1019 + $0xa8] sm:$0xff]
      %v1755 = vld [vmem:[%s1019 + $0xb0] sm:$0xff]
      %v1756 = vld [vmem:[%s1019 + $0xc0] sm:$0xff]
      %v1757 = vld [vmem:[%s1019 + $0xc8] sm:$0xff]
      %v1758 = vld [vmem:[%s1019 + $0xd8] sm:$0xff]
      %v1759 = vld [vmem:[%s1019 + $0xe0] sm:$0xff]
      %v1760 = vld [vmem:[%s1019 + $0xf0] sm:$0xff]
      %v1761 = vld [vmem:[%s1019 + $0xf8] sm:$0xff]
      %v1762 = vld [vmem:[%s1019 + $0x108] sm:$0xff]
      %v1763 = vld [vmem:[%s1019 + $0x110] sm:$0xff]
      %v1764 = vld [vmem:[%s1019 + $0x120] sm:$0xff]
      %v1765 = vld [vmem:[%s1019 + $0x128] sm:$0xff]
      %v1766 = vld [vmem:[%s1019 + $0x138] sm:$0xff]
      %v1767 = vld [vmem:[%s1019 + $0x140] sm:$0xff]
      %v1768 = vld [vmem:[%s1019 + $0x150] sm:$0xff]
      %v1769 = vld [vmem:[%s1019 + $0x158] sm:$0xff]
      %v1770 = vld [vmem:[%s1019 + $0x168] sm:$0xff]
      %v1771 = vld [vmem:[%s1019 + $0x170] sm:$0xff]
      %v1772 = vld [vmem:[%s1019 + $0x1b0] sm:$0xff]
      %v1773 = vld [vmem:[%s1019 + $0x1b8] sm:$0xff]
      %v1774 = vld [vmem:[%s1019 + $0x1c8] sm:$0xff]
      %v1775 = vld [vmem:[%s1019 + $0x1d0] sm:$0xff]
      %v1776 = vld [vmem:[%s1019 + $0x1e0] sm:$0xff]
      %v1777 = vld [vmem:[%s1019 + $0x1e8] sm:$0xff]
      %v1778 = vld [vmem:[%s1019 + $0x1f8] sm:$0xff]
      %v1779 = vld [vmem:[%s1019 + $0x200] sm:$0xff]
      %v1780 = vld [vmem:[%s1019 + $0x210] sm:$0xff]
      %v1781 = vld [vmem:[%s1019 + $0x218] sm:$0xff]
      %v1782 = vld [vmem:[%s1019 + $0x228] sm:$0xff]
      %v1783 = vld [vmem:[%s1019 + $0x230] sm:$0xff]
      %v1784 = vld [vmem:[%s1019 + $0x240] sm:$0xff]
      %v1785 = vld [vmem:[%s1019 + $0x248] sm:$0xff]
      %v1786 = vld [vmem:[%s1019 + $0x258] sm:$0xff]
      %v1787 = vld [vmem:[%s1019 + $0x260] sm:$0xff]
      %v1788 = vld [vmem:[%s1019 + $0x270] sm:$0xff]
      %v1789 = vld [vmem:[%s1019 + $0x278] sm:$0xff]
      %v1790 = vld [vmem:[%s1019 + $0x288] sm:$0xff]
      %v1791 = vld [vmem:[%s1019 + $0x290] sm:$0xff]
      %v1792 = vld [vmem:[%s1019 + $0x2a0] sm:$0xff]
      %v1793 = vld [vmem:[%s1019 + $0x2a8] sm:$0xff]
      %v1794 = vld [vmem:[%s1019 + $0x2b8] sm:$0xff]
      %v1795 = vld [vmem:[%s1019 + $0x2c0] sm:$0xff]
      %v1796 = vld [vmem:[%s1019 + $0x2d0] sm:$0xff]
      %v1797 = vld [vmem:[%s1019 + $0x2d8] sm:$0xff]
      %v1798 = vld [vmem:[%s1019 + $0x2e8] sm:$0xff]
      %v1799 = vld [vmem:[%s1019 + $0x2f0] sm:$0xff]
      %v1800 = vld [vmem:[%s1019 + $0x300] sm:$0xff]
      %v1801 = vld [vmem:[%s1019 + $0x308] sm:$0xff]
      %v1802 = vld [vmem:[%s1019 + $0x318] sm:$0xff]
      %v1803 = vld [vmem:[%s1019 + $0x320] sm:$0xff]
      %v1804 = vld [vmem:[%s3 + $0x3] sm:$0x1]
      %v1805 = vlaneseq
      %v1806 = vshrl.u32 %v1805, 7
      %v1807 = vsub.s32 0, %v1806
      %v1808 = vrot.slane %v1804, %v1807
      %v1809 = vmul.f32 %v1740, %v1808
      %v1810 = vmul.f32 %v1741, %v1808
      %v1811 = vmul.f32 %v1742, %v1808
      %v1812 = vmul.f32 %v1743, %v1808
      %v1813 = vmul.f32 %v1744, %v1808
      %v1814 = vmul.f32 %v1745, %v1808
      %v1815 = vmul.f32 %v1746, %v1808
      %v1816 = vmul.f32 %v1747, %v1808
      %v1817 = vmul.f32 %v1748, %v1808
      %v1818 = vmul.f32 %v1749, %v1808
      %v1819 = vmul.f32 %v1750, %v1808
      %v1820 = vmul.f32 %v1751, %v1808
      %v1821 = vmul.f32 %v1752, %v1808
      %v1822 = vmul.f32 %v1753, %v1808
      %v1823 = vmul.f32 %v1754, %v1808
      %v1824 = vmul.f32 %v1755, %v1808
      %v1825 = vmul.f32 %v1756, %v1808
      %v1826 = vmul.f32 %v1757, %v1808
      %v1827 = vmul.f32 %v1758, %v1808
      %v1828 = vmul.f32 %v1759, %v1808
      %v1829 = vmul.f32 %v1760, %v1808
      %v1830 = vmul.f32 %v1761, %v1808
      %v1831 = vmul.f32 %v1762, %v1808
      %v1832 = vmul.f32 %v1763, %v1808
      %v1833 = vmul.f32 %v1764, %v1808
      %v1834 = vmul.f32 %v1765, %v1808
      %v1835 = vmul.f32 %v1766, %v1808
      %v1836 = vmul.f32 %v1767, %v1808
      %v1837 = vmul.f32 %v1768, %v1808
      %v1838 = vmul.f32 %v1769, %v1808
      %v1839 = vmul.f32 %v1770, %v1808
      %v1840 = vmul.f32 %v1771, %v1808
      %v1841 = vmul.f32 %v1772, %v1808
      %v1842 = vmul.f32 %v1773, %v1808
      %v1843 = vmul.f32 %v1774, %v1808
      %v1844 = vmul.f32 %v1775, %v1808
      %v1845 = vmul.f32 %v1776, %v1808
      %v1846 = vmul.f32 %v1777, %v1808
      %v1847 = vmul.f32 %v1778, %v1808
      %v1848 = vmul.f32 %v1779, %v1808
      %v1849 = vmul.f32 %v1780, %v1808
      %v1850 = vmul.f32 %v1781, %v1808
      %v1851 = vmul.f32 %v1782, %v1808
      %v1852 = vmul.f32 %v1783, %v1808
      %v1853 = vmul.f32 %v1784, %v1808
      %v1854 = vmul.f32 %v1785, %v1808
      %v1855 = vmul.f32 %v1786, %v1808
      %v1856 = vmul.f32 %v1787, %v1808
      %v1857 = vmul.f32 %v1788, %v1808
      %v1858 = vmul.f32 %v1789, %v1808
      %v1859 = vmul.f32 %v1790, %v1808
      %v1860 = vmul.f32 %v1791, %v1808
      %v1861 = vmul.f32 %v1792, %v1808
      %v1862 = vmul.f32 %v1793, %v1808
      %v1863 = vmul.f32 %v1794, %v1808
      %v1864 = vmul.f32 %v1795, %v1808
      %v1865 = vmul.f32 %v1796, %v1808
      %v1866 = vmul.f32 %v1797, %v1808
      %v1867 = vmul.f32 %v1798, %v1808
      %v1868 = vmul.f32 %v1799, %v1808
      %v1869 = vmul.f32 %v1800, %v1808
      %v1870 = vmul.f32 %v1801, %v1808
      %v1871 = vmul.f32 %v1802, %v1808
      %v1872 = vmul.f32 %v1803, %v1808
      %v1873 = vadd.f32 %v1676, %v1809
      %v1874 = vadd.f32 %v1677, %v1810
      %v1875 = vadd.f32 %v1678, %v1811
      %v1876 = vadd.f32 %v1679, %v1812
      %v1877 = vadd.f32 %v1680, %v1813
      %v1878 = vadd.f32 %v1681, %v1814
      %v1879 = vadd.f32 %v1682, %v1815
      %v1880 = vadd.f32 %v1683, %v1816
      %v1881 = vadd.f32 %v1684, %v1817
      %v1882 = vadd.f32 %v1685, %v1818
      %v1883 = vadd.f32 %v1686, %v1819
      %v1884 = vadd.f32 %v1687, %v1820
      %v1885 = vadd.f32 %v1688, %v1821
      %v1886 = vadd.f32 %v1689, %v1822
      %v1887 = vadd.f32 %v1690, %v1823
      %v1888 = vadd.f32 %v1691, %v1824
      %v1889 = vadd.f32 %v1692, %v1825
      %v1890 = vadd.f32 %v1693, %v1826
      %v1891 = vadd.f32 %v1694, %v1827
      %v1892 = vadd.f32 %v1695, %v1828
      %v1893 = vadd.f32 %v1696, %v1829
      %v1894 = vadd.f32 %v1697, %v1830
      %v1895 = vadd.f32 %v1698, %v1831
      %v1896 = vadd.f32 %v1699, %v1832
      %v1897 = vadd.f32 %v1700, %v1833
      %v1898 = vadd.f32 %v1701, %v1834
      %v1899 = vadd.f32 %v1702, %v1835
      %v1900 = vadd.f32 %v1703, %v1836
      %v1901 = vadd.f32 %v1704, %v1837
      %v1902 = vadd.f32 %v1705, %v1838
      %v1903 = vadd.f32 %v1706, %v1839
      %v1904 = vadd.f32 %v1707, %v1840
      %v1905 = vadd.f32 %v1708, %v1841
      %v1906 = vadd.f32 %v1709, %v1842
      %v1907 = vadd.f32 %v1710, %v1843
      %v1908 = vadd.f32 %v1711, %v1844
      %v1909 = vadd.f32 %v1712, %v1845
      %v1910 = vadd.f32 %v1713, %v1846
      %v1911 = vadd.f32 %v1714, %v1847
      %v1912 = vadd.f32 %v1715, %v1848
      %v1913 = vadd.f32 %v1716, %v1849
      %v1914 = vadd.f32 %v1717, %v1850
      %v1915 = vadd.f32 %v1718, %v1851
      %v1916 = vadd.f32 %v1719, %v1852
      %v1917 = vadd.f32 %v1720, %v1853
      %v1918 = vadd.f32 %v1721, %v1854
      %v1919 = vadd.f32 %v1722, %v1855
      %v1920 = vadd.f32 %v1723, %v1856
      %v1921 = vadd.f32 %v1724, %v1857
      %v1922 = vadd.f32 %v1725, %v1858
      %v1923 = vadd.f32 %v1726, %v1859
      %v1924 = vadd.f32 %v1727, %v1860
      %v1925 = vadd.f32 %v1728, %v1861
      %v1926 = vadd.f32 %v1729, %v1862
      %v1927 = vadd.f32 %v1730, %v1863
      %v1928 = vadd.f32 %v1731, %v1864
      %v1929 = vadd.f32 %v1732, %v1865
      %v1930 = vadd.f32 %v1733, %v1866
      %v1931 = vadd.f32 %v1734, %v1867
      %v1932 = vadd.f32 %v1735, %v1868
      %v1933 = vadd.f32 %v1736, %v1869
      %v1934 = vadd.f32 %v1737, %v1870
      %v1935 = vadd.f32 %v1738, %v1871
      %v1936 = vadd.f32 %v1739, %v1872
      %v1937 = vld [vmem:[%s1019 + $0x1] sm:$0xff]
      %v1938 = vld [vmem:[%s1019 + $0x9] sm:$0xff]
      %v1939 = vld [vmem:[%s1019 + $0x19] sm:$0xff]
      %v1940 = vld [vmem:[%s1019 + $0x21] sm:$0xff]
      %v1941 = vld [vmem:[%s1019 + $0x31] sm:$0xff]
      %v1942 = vld [vmem:[%s1019 + $0x39] sm:$0xff]
      %v1943 = vld [vmem:[%s1019 + $0x49] sm:$0xff]
      %v1944 = vld [vmem:[%s1019 + $0x51] sm:$0xff]
      %v1945 = vld [vmem:[%s1019 + $0x61] sm:$0xff]
      %v1946 = vld [vmem:[%s1019 + $0x69] sm:$0xff]
      %v1947 = vld [vmem:[%s1019 + $0x79] sm:$0xff]
      %v1948 = vld [vmem:[%s1019 + $0x81] sm:$0xff]
      %v1949 = vld [vmem:[%s1019 + $0x91] sm:$0xff]
      %v1950 = vld [vmem:[%s1019 + $0x99] sm:$0xff]
      %v1951 = vld [vmem:[%s1019 + $0xa9] sm:$0xff]
      %v1952 = vld [vmem:[%s1019 + $0xb1] sm:$0xff]
      %v1953 = vld [vmem:[%s1019 + $0xc1] sm:$0xff]
      %v1954 = vld [vmem:[%s1019 + $0xc9] sm:$0xff]
      %v1955 = vld [vmem:[%s1019 + $0xd9] sm:$0xff]
      %v1956 = vld [vmem:[%s1019 + $0xe1] sm:$0xff]
      %v1957 = vld [vmem:[%s1019 + $0xf1] sm:$0xff]
      %v1958 = vld [vmem:[%s1019 + $0xf9] sm:$0xff]
      %v1959 = vld [vmem:[%s1019 + $0x109] sm:$0xff]
      %v1960 = vld [vmem:[%s1019 + $0x111] sm:$0xff]
      %v1961 = vld [vmem:[%s1019 + $0x121] sm:$0xff]
      %v1962 = vld [vmem:[%s1019 + $0x129] sm:$0xff]
      %v1963 = vld [vmem:[%s1019 + $0x139] sm:$0xff]
      %v1964 = vld [vmem:[%s1019 + $0x141] sm:$0xff]
      %v1965 = vld [vmem:[%s1019 + $0x151] sm:$0xff]
      %v1966 = vld [vmem:[%s1019 + $0x159] sm:$0xff]
      %v1967 = vld [vmem:[%s1019 + $0x169] sm:$0xff]
      %v1968 = vld [vmem:[%s1019 + $0x171] sm:$0xff]
      %v1969 = vld [vmem:[%s1019 + $0x1b1] sm:$0xff]
      %v1970 = vld [vmem:[%s1019 + $0x1b9] sm:$0xff]
      %v1971 = vld [vmem:[%s1019 + $0x1c9] sm:$0xff]
      %v1972 = vld [vmem:[%s1019 + $0x1d1] sm:$0xff]
      %v1973 = vld [vmem:[%s1019 + $0x1e1] sm:$0xff]
      %v1974 = vld [vmem:[%s1019 + $0x1e9] sm:$0xff]
      %v1975 = vld [vmem:[%s1019 + $0x1f9] sm:$0xff]
      %v1976 = vld [vmem:[%s1019 + $0x201] sm:$0xff]
      %v1977 = vld [vmem:[%s1019 + $0x211] sm:$0xff]
      %v1978 = vld [vmem:[%s1019 + $0x219] sm:$0xff]
      %v1979 = vld [vmem:[%s1019 + $0x229] sm:$0xff]
      %v1980 = vld [vmem:[%s1019 + $0x231] sm:$0xff]
      %v1981 = vld [vmem:[%s1019 + $0x241] sm:$0xff]
      %v1982 = vld [vmem:[%s1019 + $0x249] sm:$0xff]
      %v1983 = vld [vmem:[%s1019 + $0x259] sm:$0xff]
      %v1984 = vld [vmem:[%s1019 + $0x261] sm:$0xff]
      %v1985 = vld [vmem:[%s1019 + $0x271] sm:$0xff]
      %v1986 = vld [vmem:[%s1019 + $0x279] sm:$0xff]
      %v1987 = vld [vmem:[%s1019 + $0x289] sm:$0xff]
      %v1988 = vld [vmem:[%s1019 + $0x291] sm:$0xff]
      %v1989 = vld [vmem:[%s1019 + $0x2a1] sm:$0xff]
      %v1990 = vld [vmem:[%s1019 + $0x2a9] sm:$0xff]
      %v1991 = vld [vmem:[%s1019 + $0x2b9] sm:$0xff]
      %v1992 = vld [vmem:[%s1019 + $0x2c1] sm:$0xff]
      %v1993 = vld [vmem:[%s1019 + $0x2d1] sm:$0xff]
      %v1994 = vld [vmem:[%s1019 + $0x2d9] sm:$0xff]
      %v1995 = vld [vmem:[%s1019 + $0x2e9] sm:$0xff]
      %v1996 = vld [vmem:[%s1019 + $0x2f1] sm:$0xff]
      %v1997 = vld [vmem:[%s1019 + $0x301] sm:$0xff]
      %v1998 = vld [vmem:[%s1019 + $0x309] sm:$0xff]
      %v1999 = vld [vmem:[%s1019 + $0x319] sm:$0xff]
      %v2000 = vld [vmem:[%s1019 + $0x321] sm:$0xff]
      %v2001 = vld [vmem:[%s3 + $0x4] sm:$0x1]
      %v2002 = vlaneseq
      %v2003 = vshrl.u32 %v2002, 7
      %v2004 = vsub.s32 0, %v2003
      %v2005 = vrot.slane %v2001, %v2004
      %v2006 = vmul.f32 %v1937, %v2005
      %v2007 = vmul.f32 %v1938, %v2005
      %v2008 = vmul.f32 %v1939, %v2005
      %v2009 = vmul.f32 %v1940, %v2005
      %v2010 = vmul.f32 %v1941, %v2005
      %v2011 = vmul.f32 %v1942, %v2005
      %v2012 = vmul.f32 %v1943, %v2005
      %v2013 = vmul.f32 %v1944, %v2005
      %v2014 = vmul.f32 %v1945, %v2005
      %v2015 = vmul.f32 %v1946, %v2005
      %v2016 = vmul.f32 %v1947, %v2005
      %v2017 = vmul.f32 %v1948, %v2005
      %v2018 = vmul.f32 %v1949, %v2005
      %v2019 = vmul.f32 %v1950, %v2005
      %v2020 = vmul.f32 %v1951, %v2005
      %v2021 = vmul.f32 %v1952, %v2005
      %v2022 = vmul.f32 %v1953, %v2005
      %v2023 = vmul.f32 %v1954, %v2005
      %v2024 = vmul.f32 %v1955, %v2005
      %v2025 = vmul.f32 %v1956, %v2005
      %v2026 = vmul.f32 %v1957, %v2005
      %v2027 = vmul.f32 %v1958, %v2005
      %v2028 = vmul.f32 %v1959, %v2005
      %v2029 = vmul.f32 %v1960, %v2005
      %v2030 = vmul.f32 %v1961, %v2005
      %v2031 = vmul.f32 %v1962, %v2005
      %v2032 = vmul.f32 %v1963, %v2005
      %v2033 = vmul.f32 %v1964, %v2005
      %v2034 = vmul.f32 %v1965, %v2005
      %v2035 = vmul.f32 %v1966, %v2005
      %v2036 = vmul.f32 %v1967, %v2005
      %v2037 = vmul.f32 %v1968, %v2005
      %v2038 = vmul.f32 %v1969, %v2005
      %v2039 = vmul.f32 %v1970, %v2005
      %v2040 = vmul.f32 %v1971, %v2005
      %v2041 = vmul.f32 %v1972, %v2005
      %v2042 = vmul.f32 %v1973, %v2005
      %v2043 = vmul.f32 %v1974, %v2005
      %v2044 = vmul.f32 %v1975, %v2005
      %v2045 = vmul.f32 %v1976, %v2005
      %v2046 = vmul.f32 %v1977, %v2005
      %v2047 = vmul.f32 %v1978, %v2005
      %v2048 = vmul.f32 %v1979, %v2005
      %v2049 = vmul.f32 %v1980, %v2005
      %v2050 = vmul.f32 %v1981, %v2005
      %v2051 = vmul.f32 %v1982, %v2005
      %v2052 = vmul.f32 %v1983, %v2005
      %v2053 = vmul.f32 %v1984, %v2005
      %v2054 = vmul.f32 %v1985, %v2005
      %v2055 = vmul.f32 %v1986, %v2005
      %v2056 = vmul.f32 %v1987, %v2005
      %v2057 = vmul.f32 %v1988, %v2005
      %v2058 = vmul.f32 %v1989, %v2005
      %v2059 = vmul.f32 %v1990, %v2005
      %v2060 = vmul.f32 %v1991, %v2005
      %v2061 = vmul.f32 %v1992, %v2005
      %v2062 = vmul.f32 %v1993, %v2005
      %v2063 = vmul.f32 %v1994, %v2005
      %v2064 = vmul.f32 %v1995, %v2005
      %v2065 = vmul.f32 %v1996, %v2005
      %v2066 = vmul.f32 %v1997, %v2005
      %v2067 = vmul.f32 %v1998, %v2005
      %v2068 = vmul.f32 %v1999, %v2005
      %v2069 = vmul.f32 %v2000, %v2005
      %v2070 = vadd.f32 %v1873, %v2006
      %v2071 = vadd.f32 %v1874, %v2007
      %v2072 = vadd.f32 %v1875, %v2008
      %v2073 = vadd.f32 %v1876, %v2009
      %v2074 = vadd.f32 %v1877, %v2010
      %v2075 = vadd.f32 %v1878, %v2011
      %v2076 = vadd.f32 %v1879, %v2012
      %v2077 = vadd.f32 %v1880, %v2013
      %v2078 = vadd.f32 %v1881, %v2014
      %v2079 = vadd.f32 %v1882, %v2015
      %v2080 = vadd.f32 %v1883, %v2016
      %v2081 = vadd.f32 %v1884, %v2017
      %v2082 = vadd.f32 %v1885, %v2018
      %v2083 = vadd.f32 %v1886, %v2019
      %v2084 = vadd.f32 %v1887, %v2020
      %v2085 = vadd.f32 %v1888, %v2021
      %v2086 = vadd.f32 %v1889, %v2022
      %v2087 = vadd.f32 %v1890, %v2023
      %v2088 = vadd.f32 %v1891, %v2024
      %v2089 = vadd.f32 %v1892, %v2025
      %v2090 = vadd.f32 %v1893, %v2026
      %v2091 = vadd.f32 %v1894, %v2027
      %v2092 = vadd.f32 %v1895, %v2028
      %v2093 = vadd.f32 %v1896, %v2029
      %v2094 = vadd.f32 %v1897, %v2030
      %v2095 = vadd.f32 %v1898, %v2031
      %v2096 = vadd.f32 %v1899, %v2032
      %v2097 = vadd.f32 %v1900, %v2033
      %v2098 = vadd.f32 %v1901, %v2034
      %v2099 = vadd.f32 %v1902, %v2035
      %v2100 = vadd.f32 %v1903, %v2036
      %v2101 = vadd.f32 %v1904, %v2037
      %v2102 = vadd.f32 %v1905, %v2038
      %v2103 = vadd.f32 %v1906, %v2039
      %v2104 = vadd.f32 %v1907, %v2040
      %v2105 = vadd.f32 %v1908, %v2041
      %v2106 = vadd.f32 %v1909, %v2042
      %v2107 = vadd.f32 %v1910, %v2043
      %v2108 = vadd.f32 %v1911, %v2044
      %v2109 = vadd.f32 %v1912, %v2045
      %v2110 = vadd.f32 %v1913, %v2046
      %v2111 = vadd.f32 %v1914, %v2047
      %v2112 = vadd.f32 %v1915, %v2048
      %v2113 = vadd.f32 %v1916, %v2049
      %v2114 = vadd.f32 %v1917, %v2050
      %v2115 = vadd.f32 %v1918, %v2051
      %v2116 = vadd.f32 %v1919, %v2052
      %v2117 = vadd.f32 %v1920, %v2053
      %v2118 = vadd.f32 %v1921, %v2054
      %v2119 = vadd.f32 %v1922, %v2055
      %v2120 = vadd.f32 %v1923, %v2056
      %v2121 = vadd.f32 %v1924, %v2057
      %v2122 = vadd.f32 %v1925, %v2058
      %v2123 = vadd.f32 %v1926, %v2059
      %v2124 = vadd.f32 %v1927, %v2060
      %v2125 = vadd.f32 %v1928, %v2061
      %v2126 = vadd.f32 %v1929, %v2062
      %v2127 = vadd.f32 %v1930, %v2063
      %v2128 = vadd.f32 %v1931, %v2064
      %v2129 = vadd.f32 %v1932, %v2065
      %v2130 = vadd.f32 %v1933, %v2066
      %v2131 = vadd.f32 %v1934, %v2067
      %v2132 = vadd.f32 %v1935, %v2068
      %v2133 = vadd.f32 %v1936, %v2069
      %v2134 = vld [vmem:[%s1019 + $0x2] sm:$0xff]
      %v2135 = vld [vmem:[%s1019 + $0xa] sm:$0xff]
      %v2136 = vld [vmem:[%s1019 + $0x1a] sm:$0xff]
      %v2137 = vld [vmem:[%s1019 + $0x22] sm:$0xff]
      %v2138 = vld [vmem:[%s1019 + $0x32] sm:$0xff]
      %v2139 = vld [vmem:[%s1019 + $0x3a] sm:$0xff]
      %v2140 = vld [vmem:[%s1019 + $0x4a] sm:$0xff]
      %v2141 = vld [vmem:[%s1019 + $0x52] sm:$0xff]
      %v2142 = vld [vmem:[%s1019 + $0x62] sm:$0xff]
      %v2143 = vld [vmem:[%s1019 + $0x6a] sm:$0xff]
      %v2144 = vld [vmem:[%s1019 + $0x7a] sm:$0xff]
      %v2145 = vld [vmem:[%s1019 + $0x82] sm:$0xff]
      %v2146 = vld [vmem:[%s1019 + $0x92] sm:$0xff]
      %v2147 = vld [vmem:[%s1019 + $0x9a] sm:$0xff]
      %v2148 = vld [vmem:[%s1019 + $0xaa] sm:$0xff]
      %v2149 = vld [vmem:[%s1019 + $0xb2] sm:$0xff]
      %v2150 = vld [vmem:[%s1019 + $0xc2] sm:$0xff]
      %v2151 = vld [vmem:[%s1019 + $0xca] sm:$0xff]
      %v2152 = vld [vmem:[%s1019 + $0xda] sm:$0xff]
      %v2153 = vld [vmem:[%s1019 + $0xe2] sm:$0xff]
      %v2154 = vld [vmem:[%s1019 + $0xf2] sm:$0xff]
      %v2155 = vld [vmem:[%s1019 + $0xfa] sm:$0xff]
      %v2156 = vld [vmem:[%s1019 + $0x10a] sm:$0xff]
      %v2157 = vld [vmem:[%s1019 + $0x112] sm:$0xff]
      %v2158 = vld [vmem:[%s1019 + $0x122] sm:$0xff]
      %v2159 = vld [vmem:[%s1019 + $0x12a] sm:$0xff]
      %v2160 = vld [vmem:[%s1019 + $0x13a] sm:$0xff]
      %v2161 = vld [vmem:[%s1019 + $0x142] sm:$0xff]
      %v2162 = vld [vmem:[%s1019 + $0x152] sm:$0xff]
      %v2163 = vld [vmem:[%s1019 + $0x15a] sm:$0xff]
      %v2164 = vld [vmem:[%s1019 + $0x16a] sm:$0xff]
      %v2165 = vld [vmem:[%s1019 + $0x172] sm:$0xff]
      %v2166 = vld [vmem:[%s1019 + $0x1b2] sm:$0xff]
      %v2167 = vld [vmem:[%s1019 + $0x1ba] sm:$0xff]
      %v2168 = vld [vmem:[%s1019 + $0x1ca] sm:$0xff]
      %v2169 = vld [vmem:[%s1019 + $0x1d2] sm:$0xff]
      %v2170 = vld [vmem:[%s1019 + $0x1e2] sm:$0xff]
      %v2171 = vld [vmem:[%s1019 + $0x1ea] sm:$0xff]
      %v2172 = vld [vmem:[%s1019 + $0x1fa] sm:$0xff]
      %v2173 = vld [vmem:[%s1019 + $0x202] sm:$0xff]
      %v2174 = vld [vmem:[%s1019 + $0x212] sm:$0xff]
      %v2175 = vld [vmem:[%s1019 + $0x21a] sm:$0xff]
      %v2176 = vld [vmem:[%s1019 + $0x22a] sm:$0xff]
      %v2177 = vld [vmem:[%s1019 + $0x232] sm:$0xff]
      %v2178 = vld [vmem:[%s1019 + $0x242] sm:$0xff]
      %v2179 = vld [vmem:[%s1019 + $0x24a] sm:$0xff]
      %v2180 = vld [vmem:[%s1019 + $0x25a] sm:$0xff]
      %v2181 = vld [vmem:[%s1019 + $0x262] sm:$0xff]
      %v2182 = vld [vmem:[%s1019 + $0x272] sm:$0xff]
      %v2183 = vld [vmem:[%s1019 + $0x27a] sm:$0xff]
      %v2184 = vld [vmem:[%s1019 + $0x28a] sm:$0xff]
      %v2185 = vld [vmem:[%s1019 + $0x292] sm:$0xff]
      %v2186 = vld [vmem:[%s1019 + $0x2a2] sm:$0xff]
      %v2187 = vld [vmem:[%s1019 + $0x2aa] sm:$0xff]
      %v2188 = vld [vmem:[%s1019 + $0x2ba] sm:$0xff]
      %v2189 = vld [vmem:[%s1019 + $0x2c2] sm:$0xff]
      %v2190 = vld [vmem:[%s1019 + $0x2d2] sm:$0xff]
      %v2191 = vld [vmem:[%s1019 + $0x2da] sm:$0xff]
      %v2192 = vld [vmem:[%s1019 + $0x2ea] sm:$0xff]
      %v2193 = vld [vmem:[%s1019 + $0x2f2] sm:$0xff]
      %v2194 = vld [vmem:[%s1019 + $0x302] sm:$0xff]
      %v2195 = vld [vmem:[%s1019 + $0x30a] sm:$0xff]
      %v2196 = vld [vmem:[%s1019 + $0x31a] sm:$0xff]
      %v2197 = vld [vmem:[%s1019 + $0x322] sm:$0xff]
      %v2198 = vld [vmem:[%s3 + $0x5] sm:$0x1]
      %v2199 = vlaneseq
      %v2200 = vshrl.u32 %v2199, 7
      %v2201 = vsub.s32 0, %v2200
      %v2202 = vrot.slane %v2198, %v2201
      %v2203 = vmul.f32 %v2134, %v2202
      %v2204 = vmul.f32 %v2135, %v2202
      %v2205 = vmul.f32 %v2136, %v2202
      %v2206 = vmul.f32 %v2137, %v2202
      %v2207 = vmul.f32 %v2138, %v2202
      %v2208 = vmul.f32 %v2139, %v2202
      %v2209 = vmul.f32 %v2140, %v2202
      %v2210 = vmul.f32 %v2141, %v2202
      %v2211 = vmul.f32 %v2142, %v2202
      %v2212 = vmul.f32 %v2143, %v2202
      %v2213 = vmul.f32 %v2144, %v2202
      %v2214 = vmul.f32 %v2145, %v2202
      %v2215 = vmul.f32 %v2146, %v2202
      %v2216 = vmul.f32 %v2147, %v2202
      %v2217 = vmul.f32 %v2148, %v2202
      %v2218 = vmul.f32 %v2149, %v2202
      %v2219 = vmul.f32 %v2150, %v2202
      %v2220 = vmul.f32 %v2151, %v2202
      %v2221 = vmul.f32 %v2152, %v2202
      %v2222 = vmul.f32 %v2153, %v2202
      %v2223 = vmul.f32 %v2154, %v2202
      %v2224 = vmul.f32 %v2155, %v2202
      %v2225 = vmul.f32 %v2156, %v2202
      %v2226 = vmul.f32 %v2157, %v2202
      %v2227 = vmul.f32 %v2158, %v2202
      %v2228 = vmul.f32 %v2159, %v2202
      %v2229 = vmul.f32 %v2160, %v2202
      %v2230 = vmul.f32 %v2161, %v2202
      %v2231 = vmul.f32 %v2162, %v2202
      %v2232 = vmul.f32 %v2163, %v2202
      %v2233 = vmul.f32 %v2164, %v2202
      %v2234 = vmul.f32 %v2165, %v2202
      %v2235 = vmul.f32 %v2166, %v2202
      %v2236 = vmul.f32 %v2167, %v2202
      %v2237 = vmul.f32 %v2168, %v2202
      %v2238 = vmul.f32 %v2169, %v2202
      %v2239 = vmul.f32 %v2170, %v2202
      %v2240 = vmul.f32 %v2171, %v2202
      %v2241 = vmul.f32 %v2172, %v2202
      %v2242 = vmul.f32 %v2173, %v2202
      %v2243 = vmul.f32 %v2174, %v2202
      %v2244 = vmul.f32 %v2175, %v2202
      %v2245 = vmul.f32 %v2176, %v2202
      %v2246 = vmul.f32 %v2177, %v2202
      %v2247 = vmul.f32 %v2178, %v2202
      %v2248 = vmul.f32 %v2179, %v2202
      %v2249 = vmul.f32 %v2180, %v2202
      %v2250 = vmul.f32 %v2181, %v2202
      %v2251 = vmul.f32 %v2182, %v2202
      %v2252 = vmul.f32 %v2183, %v2202
      %v2253 = vmul.f32 %v2184, %v2202
      %v2254 = vmul.f32 %v2185, %v2202
      %v2255 = vmul.f32 %v2186, %v2202
      %v2256 = vmul.f32 %v2187, %v2202
      %v2257 = vmul.f32 %v2188, %v2202
      %v2258 = vmul.f32 %v2189, %v2202
      %v2259 = vmul.f32 %v2190, %v2202
      %v2260 = vmul.f32 %v2191, %v2202
      %v2261 = vmul.f32 %v2192, %v2202
      %v2262 = vmul.f32 %v2193, %v2202
      %v2263 = vmul.f32 %v2194, %v2202
      %v2264 = vmul.f32 %v2195, %v2202
      %v2265 = vmul.f32 %v2196, %v2202
      %v2266 = vmul.f32 %v2197, %v2202
      %v2267 = vadd.f32 %v2070, %v2203
      %v2268 = vadd.f32 %v2071, %v2204
      %v2269 = vadd.f32 %v2072, %v2205
      %v2270 = vadd.f32 %v2073, %v2206
      %v2271 = vadd.f32 %v2074, %v2207
      %v2272 = vadd.f32 %v2075, %v2208
      %v2273 = vadd.f32 %v2076, %v2209
      %v2274 = vadd.f32 %v2077, %v2210
      %v2275 = vadd.f32 %v2078, %v2211
      %v2276 = vadd.f32 %v2079, %v2212
      %v2277 = vadd.f32 %v2080, %v2213
      %v2278 = vadd.f32 %v2081, %v2214
      %v2279 = vadd.f32 %v2082, %v2215
      %v2280 = vadd.f32 %v2083, %v2216
      %v2281 = vadd.f32 %v2084, %v2217
      %v2282 = vadd.f32 %v2085, %v2218
      %v2283 = vadd.f32 %v2086, %v2219
      %v2284 = vadd.f32 %v2087, %v2220
      %v2285 = vadd.f32 %v2088, %v2221
      %v2286 = vadd.f32 %v2089, %v2222
      %v2287 = vadd.f32 %v2090, %v2223
      %v2288 = vadd.f32 %v2091, %v2224
      %v2289 = vadd.f32 %v2092, %v2225
      %v2290 = vadd.f32 %v2093, %v2226
      %v2291 = vadd.f32 %v2094, %v2227
      %v2292 = vadd.f32 %v2095, %v2228
      %v2293 = vadd.f32 %v2096, %v2229
      %v2294 = vadd.f32 %v2097, %v2230
      %v2295 = vadd.f32 %v2098, %v2231
      %v2296 = vadd.f32 %v2099, %v2232
      %v2297 = vadd.f32 %v2100, %v2233
      %v2298 = vadd.f32 %v2101, %v2234
      %v2299 = vadd.f32 %v2102, %v2235
      %v2300 = vadd.f32 %v2103, %v2236
      %v2301 = vadd.f32 %v2104, %v2237
      %v2302 = vadd.f32 %v2105, %v2238
      %v2303 = vadd.f32 %v2106, %v2239
      %v2304 = vadd.f32 %v2107, %v2240
      %v2305 = vadd.f32 %v2108, %v2241
      %v2306 = vadd.f32 %v2109, %v2242
      %v2307 = vadd.f32 %v2110, %v2243
      %v2308 = vadd.f32 %v2111, %v2244
      %v2309 = vadd.f32 %v2112, %v2245
      %v2310 = vadd.f32 %v2113, %v2246
      %v2311 = vadd.f32 %v2114, %v2247
      %v2312 = vadd.f32 %v2115, %v2248
      %v2313 = vadd.f32 %v2116, %v2249
      %v2314 = vadd.f32 %v2117, %v2250
      %v2315 = vadd.f32 %v2118, %v2251
      %v2316 = vadd.f32 %v2119, %v2252
      %v2317 = vadd.f32 %v2120, %v2253
      %v2318 = vadd.f32 %v2121, %v2254
      %v2319 = vadd.f32 %v2122, %v2255
      %v2320 = vadd.f32 %v2123, %v2256
      %v2321 = vadd.f32 %v2124, %v2257
      %v2322 = vadd.f32 %v2125, %v2258
      %v2323 = vadd.f32 %v2126, %v2259
      %v2324 = vadd.f32 %v2127, %v2260
      %v2325 = vadd.f32 %v2128, %v2261
      %v2326 = vadd.f32 %v2129, %v2262
      %v2327 = vadd.f32 %v2130, %v2263
      %v2328 = vadd.f32 %v2131, %v2264
      %v2329 = vadd.f32 %v2132, %v2265
      %v2330 = vadd.f32 %v2133, %v2266
      %s2331 = scalar_lea.vmem [#allocation2], 48
      %v2332 = vld [vmem:[%s2331] sm:$0xff]
      %v2333 = vld [vmem:[%s2331 + $0x8] sm:$0xff]
      %v2334 = vld [vmem:[%s2331 + $0x18] sm:$0xff]
      %v2335 = vld [vmem:[%s2331 + $0x20] sm:$0xff]
      %v2336 = vld [vmem:[%s2331 + $0x30] sm:$0xff]
      %v2337 = vld [vmem:[%s2331 + $0x38] sm:$0xff]
      %v2338 = vld [vmem:[%s2331 + $0x48] sm:$0xff]
      %v2339 = vld [vmem:[%s2331 + $0x50] sm:$0xff]
      %v2340 = vld [vmem:[%s2331 + $0x60] sm:$0xff]
      %v2341 = vld [vmem:[%s2331 + $0x68] sm:$0xff]
      %v2342 = vld [vmem:[%s2331 + $0x78] sm:$0xff]
      %v2343 = vld [vmem:[%s2331 + $0x80] sm:$0xff]
      %v2344 = vld [vmem:[%s2331 + $0x90] sm:$0xff]
      %v2345 = vld [vmem:[%s2331 + $0x98] sm:$0xff]
      %v2346 = vld [vmem:[%s2331 + $0xa8] sm:$0xff]
      %v2347 = vld [vmem:[%s2331 + $0xb0] sm:$0xff]
      %v2348 = vld [vmem:[%s2331 + $0xc0] sm:$0xff]
      %v2349 = vld [vmem:[%s2331 + $0xc8] sm:$0xff]
      %v2350 = vld [vmem:[%s2331 + $0xd8] sm:$0xff]
      %v2351 = vld [vmem:[%s2331 + $0xe0] sm:$0xff]
      %v2352 = vld [vmem:[%s2331 + $0xf0] sm:$0xff]
      %v2353 = vld [vmem:[%s2331 + $0xf8] sm:$0xff]
      %v2354 = vld [vmem:[%s2331 + $0x108] sm:$0xff]
      %v2355 = vld [vmem:[%s2331 + $0x110] sm:$0xff]
      %v2356 = vld [vmem:[%s2331 + $0x120] sm:$0xff]
      %v2357 = vld [vmem:[%s2331 + $0x128] sm:$0xff]
      %v2358 = vld [vmem:[%s2331 + $0x138] sm:$0xff]
      %v2359 = vld [vmem:[%s2331 + $0x140] sm:$0xff]
      %v2360 = vld [vmem:[%s2331 + $0x150] sm:$0xff]
      %v2361 = vld [vmem:[%s2331 + $0x158] sm:$0xff]
      %v2362 = vld [vmem:[%s2331 + $0x168] sm:$0xff]
      %v2363 = vld [vmem:[%s2331 + $0x170] sm:$0xff]
      %v2364 = vld [vmem:[%s2331 + $0x1b0] sm:$0xff]
      %v2365 = vld [vmem:[%s2331 + $0x1b8] sm:$0xff]
      %v2366 = vld [vmem:[%s2331 + $0x1c8] sm:$0xff]
      %v2367 = vld [vmem:[%s2331 + $0x1d0] sm:$0xff]
      %v2368 = vld [vmem:[%s2331 + $0x1e0] sm:$0xff]
      %v2369 = vld [vmem:[%s2331 + $0x1e8] sm:$0xff]
      %v2370 = vld [vmem:[%s2331 + $0x1f8] sm:$0xff]
      %v2371 = vld [vmem:[%s2331 + $0x200] sm:$0xff]
      %v2372 = vld [vmem:[%s2331 + $0x210] sm:$0xff]
      %v2373 = vld [vmem:[%s2331 + $0x218] sm:$0xff]
      %v2374 = vld [vmem:[%s2331 + $0x228] sm:$0xff]
      %v2375 = vld [vmem:[%s2331 + $0x230] sm:$0xff]
      %v2376 = vld [vmem:[%s2331 + $0x240] sm:$0xff]
      %v2377 = vld [vmem:[%s2331 + $0x248] sm:$0xff]
      %v2378 = vld [vmem:[%s2331 + $0x258] sm:$0xff]
      %v2379 = vld [vmem:[%s2331 + $0x260] sm:$0xff]
      %v2380 = vld [vmem:[%s2331 + $0x270] sm:$0xff]
      %v2381 = vld [vmem:[%s2331 + $0x278] sm:$0xff]
      %v2382 = vld [vmem:[%s2331 + $0x288] sm:$0xff]
      %v2383 = vld [vmem:[%s2331 + $0x290] sm:$0xff]
      %v2384 = vld [vmem:[%s2331 + $0x2a0] sm:$0xff]
      %v2385 = vld [vmem:[%s2331 + $0x2a8] sm:$0xff]
      %v2386 = vld [vmem:[%s2331 + $0x2b8] sm:$0xff]
      %v2387 = vld [vmem:[%s2331 + $0x2c0] sm:$0xff]
      %v2388 = vld [vmem:[%s2331 + $0x2d0] sm:$0xff]
      %v2389 = vld [vmem:[%s2331 + $0x2d8] sm:$0xff]
      %v2390 = vld [vmem:[%s2331 + $0x2e8] sm:$0xff]
      %v2391 = vld [vmem:[%s2331 + $0x2f0] sm:$0xff]
      %v2392 = vld [vmem:[%s2331 + $0x300] sm:$0xff]
      %v2393 = vld [vmem:[%s2331 + $0x308] sm:$0xff]
      %v2394 = vld [vmem:[%s2331 + $0x318] sm:$0xff]
      %v2395 = vld [vmem:[%s2331 + $0x320] sm:$0xff]
      %v2396 = vld [vmem:[%s3 + $0x6] sm:$0x1]
      %v2397 = vlaneseq
      %v2398 = vshrl.u32 %v2397, 7
      %v2399 = vsub.s32 0, %v2398
      %v2400 = vrot.slane %v2396, %v2399
      %v2401 = vmul.f32 %v2332, %v2400
      %v2402 = vmul.f32 %v2333, %v2400
      %v2403 = vmul.f32 %v2334, %v2400
      %v2404 = vmul.f32 %v2335, %v2400
      %v2405 = vmul.f32 %v2336, %v2400
      %v2406 = vmul.f32 %v2337, %v2400
      %v2407 = vmul.f32 %v2338, %v2400
      %v2408 = vmul.f32 %v2339, %v2400
      %v2409 = vmul.f32 %v2340, %v2400
      %v2410 = vmul.f32 %v2341, %v2400
      %v2411 = vmul.f32 %v2342, %v2400
      %v2412 = vmul.f32 %v2343, %v2400
      %v2413 = vmul.f32 %v2344, %v2400
      %v2414 = vmul.f32 %v2345, %v2400
      %v2415 = vmul.f32 %v2346, %v2400
      %v2416 = vmul.f32 %v2347, %v2400
      %v2417 = vmul.f32 %v2348, %v2400
      %v2418 = vmul.f32 %v2349, %v2400
      %v2419 = vmul.f32 %v2350, %v2400
      %v2420 = vmul.f32 %v2351, %v2400
      %v2421 = vmul.f32 %v2352, %v2400
      %v2422 = vmul.f32 %v2353, %v2400
      %v2423 = vmul.f32 %v2354, %v2400
      %v2424 = vmul.f32 %v2355, %v2400
      %v2425 = vmul.f32 %v2356, %v2400
      %v2426 = vmul.f32 %v2357, %v2400
      %v2427 = vmul.f32 %v2358, %v2400
      %v2428 = vmul.f32 %v2359, %v2400
      %v2429 = vmul.f32 %v2360, %v2400
      %v2430 = vmul.f32 %v2361, %v2400
      %v2431 = vmul.f32 %v2362, %v2400
      %v2432 = vmul.f32 %v2363, %v2400
      %v2433 = vmul.f32 %v2364, %v2400
      %v2434 = vmul.f32 %v2365, %v2400
      %v2435 = vmul.f32 %v2366, %v2400
      %v2436 = vmul.f32 %v2367, %v2400
      %v2437 = vmul.f32 %v2368, %v2400
      %v2438 = vmul.f32 %v2369, %v2400
      %v2439 = vmul.f32 %v2370, %v2400
      %v2440 = vmul.f32 %v2371, %v2400
      %v2441 = vmul.f32 %v2372, %v2400
      %v2442 = vmul.f32 %v2373, %v2400
      %v2443 = vmul.f32 %v2374, %v2400
      %v2444 = vmul.f32 %v2375, %v2400
      %v2445 = vmul.f32 %v2376, %v2400
      %v2446 = vmul.f32 %v2377, %v2400
      %v2447 = vmul.f32 %v2378, %v2400
      %v2448 = vmul.f32 %v2379, %v2400
      %v2449 = vmul.f32 %v2380, %v2400
      %v2450 = vmul.f32 %v2381, %v2400
      %v2451 = vmul.f32 %v2382, %v2400
      %v2452 = vmul.f32 %v2383, %v2400
      %v2453 = vmul.f32 %v2384, %v2400
      %v2454 = vmul.f32 %v2385, %v2400
      %v2455 = vmul.f32 %v2386, %v2400
      %v2456 = vmul.f32 %v2387, %v2400
      %v2457 = vmul.f32 %v2388, %v2400
      %v2458 = vmul.f32 %v2389, %v2400
      %v2459 = vmul.f32 %v2390, %v2400
      %v2460 = vmul.f32 %v2391, %v2400
      %v2461 = vmul.f32 %v2392, %v2400
      %v2462 = vmul.f32 %v2393, %v2400
      %v2463 = vmul.f32 %v2394, %v2400
      %v2464 = vmul.f32 %v2395, %v2400
      %v2465 = vadd.f32 %v2267, %v2401
      %v2466 = vadd.f32 %v2268, %v2402
      %v2467 = vadd.f32 %v2269, %v2403
      %v2468 = vadd.f32 %v2270, %v2404
      %v2469 = vadd.f32 %v2271, %v2405
      %v2470 = vadd.f32 %v2272, %v2406
      %v2471 = vadd.f32 %v2273, %v2407
      %v2472 = vadd.f32 %v2274, %v2408
      %v2473 = vadd.f32 %v2275, %v2409
      %v2474 = vadd.f32 %v2276, %v2410
      %v2475 = vadd.f32 %v2277, %v2411
      %v2476 = vadd.f32 %v2278, %v2412
      %v2477 = vadd.f32 %v2279, %v2413
      %v2478 = vadd.f32 %v2280, %v2414
      %v2479 = vadd.f32 %v2281, %v2415
      %v2480 = vadd.f32 %v2282, %v2416
      %v2481 = vadd.f32 %v2283, %v2417
      %v2482 = vadd.f32 %v2284, %v2418
      %v2483 = vadd.f32 %v2285, %v2419
      %v2484 = vadd.f32 %v2286, %v2420
      %v2485 = vadd.f32 %v2287, %v2421
      %v2486 = vadd.f32 %v2288, %v2422
      %v2487 = vadd.f32 %v2289, %v2423
      %v2488 = vadd.f32 %v2290, %v2424
      %v2489 = vadd.f32 %v2291, %v2425
      %v2490 = vadd.f32 %v2292, %v2426
      %v2491 = vadd.f32 %v2293, %v2427
      %v2492 = vadd.f32 %v2294, %v2428
      %v2493 = vadd.f32 %v2295, %v2429
      %v2494 = vadd.f32 %v2296, %v2430
      %v2495 = vadd.f32 %v2297, %v2431
      %v2496 = vadd.f32 %v2298, %v2432
      %v2497 = vadd.f32 %v2299, %v2433
      %v2498 = vadd.f32 %v2300, %v2434
      %v2499 = vadd.f32 %v2301, %v2435
      %v2500 = vadd.f32 %v2302, %v2436
      %v2501 = vadd.f32 %v2303, %v2437
      %v2502 = vadd.f32 %v2304, %v2438
      %v2503 = vadd.f32 %v2305, %v2439
      %v2504 = vadd.f32 %v2306, %v2440
      %v2505 = vadd.f32 %v2307, %v2441
      %v2506 = vadd.f32 %v2308, %v2442
      %v2507 = vadd.f32 %v2309, %v2443
      %v2508 = vadd.f32 %v2310, %v2444
      %v2509 = vadd.f32 %v2311, %v2445
      %v2510 = vadd.f32 %v2312, %v2446
      %v2511 = vadd.f32 %v2313, %v2447
      %v2512 = vadd.f32 %v2314, %v2448
      %v2513 = vadd.f32 %v2315, %v2449
      %v2514 = vadd.f32 %v2316, %v2450
      %v2515 = vadd.f32 %v2317, %v2451
      %v2516 = vadd.f32 %v2318, %v2452
      %v2517 = vadd.f32 %v2319, %v2453
      %v2518 = vadd.f32 %v2320, %v2454
      %v2519 = vadd.f32 %v2321, %v2455
      %v2520 = vadd.f32 %v2322, %v2456
      %v2521 = vadd.f32 %v2323, %v2457
      %v2522 = vadd.f32 %v2324, %v2458
      %v2523 = vadd.f32 %v2325, %v2459
      %v2524 = vadd.f32 %v2326, %v2460
      %v2525 = vadd.f32 %v2327, %v2461
      %v2526 = vadd.f32 %v2328, %v2462
      %v2527 = vadd.f32 %v2329, %v2463
      %v2528 = vadd.f32 %v2330, %v2464
      %v2529 = vld [vmem:[%s2331 + $0x1] sm:$0xff]
      %v2530 = vld [vmem:[%s2331 + $0x9] sm:$0xff]
      %v2531 = vld [vmem:[%s2331 + $0x19] sm:$0xff]
      %v2532 = vld [vmem:[%s2331 + $0x21] sm:$0xff]
      %v2533 = vld [vmem:[%s2331 + $0x31] sm:$0xff]
      %v2534 = vld [vmem:[%s2331 + $0x39] sm:$0xff]
      %v2535 = vld [vmem:[%s2331 + $0x49] sm:$0xff]
      %v2536 = vld [vmem:[%s2331 + $0x51] sm:$0xff]
      %v2537 = vld [vmem:[%s2331 + $0x61] sm:$0xff]
      %v2538 = vld [vmem:[%s2331 + $0x69] sm:$0xff]
      %v2539 = vld [vmem:[%s2331 + $0x79] sm:$0xff]
      %v2540 = vld [vmem:[%s2331 + $0x81] sm:$0xff]
      %v2541 = vld [vmem:[%s2331 + $0x91] sm:$0xff]
      %v2542 = vld [vmem:[%s2331 + $0x99] sm:$0xff]
      %v2543 = vld [vmem:[%s2331 + $0xa9] sm:$0xff]
      %v2544 = vld [vmem:[%s2331 + $0xb1] sm:$0xff]
      %v2545 = vld [vmem:[%s2331 + $0xc1] sm:$0xff]
      %v2546 = vld [vmem:[%s2331 + $0xc9] sm:$0xff]
      %v2547 = vld [vmem:[%s2331 + $0xd9] sm:$0xff]
      %v2548 = vld [vmem:[%s2331 + $0xe1] sm:$0xff]
      %v2549 = vld [vmem:[%s2331 + $0xf1] sm:$0xff]
      %v2550 = vld [vmem:[%s2331 + $0xf9] sm:$0xff]
      %v2551 = vld [vmem:[%s2331 + $0x109] sm:$0xff]
      %v2552 = vld [vmem:[%s2331 + $0x111] sm:$0xff]
      %v2553 = vld [vmem:[%s2331 + $0x121] sm:$0xff]
      %v2554 = vld [vmem:[%s2331 + $0x129] sm:$0xff]
      %v2555 = vld [vmem:[%s2331 + $0x139] sm:$0xff]
      %v2556 = vld [vmem:[%s2331 + $0x141] sm:$0xff]
      %v2557 = vld [vmem:[%s2331 + $0x151] sm:$0xff]
      %v2558 = vld [vmem:[%s2331 + $0x159] sm:$0xff]
      %v2559 = vld [vmem:[%s2331 + $0x169] sm:$0xff]
      %v2560 = vld [vmem:[%s2331 + $0x171] sm:$0xff]
      %v2561 = vld [vmem:[%s2331 + $0x1b1] sm:$0xff]
      %v2562 = vld [vmem:[%s2331 + $0x1b9] sm:$0xff]
      %v2563 = vld [vmem:[%s2331 + $0x1c9] sm:$0xff]
      %v2564 = vld [vmem:[%s2331 + $0x1d1] sm:$0xff]
      %v2565 = vld [vmem:[%s2331 + $0x1e1] sm:$0xff]
      %v2566 = vld [vmem:[%s2331 + $0x1e9] sm:$0xff]
      %v2567 = vld [vmem:[%s2331 + $0x1f9] sm:$0xff]
      %v2568 = vld [vmem:[%s2331 + $0x201] sm:$0xff]
      %v2569 = vld [vmem:[%s2331 + $0x211] sm:$0xff]
      %v2570 = vld [vmem:[%s2331 + $0x219] sm:$0xff]
      %v2571 = vld [vmem:[%s2331 + $0x229] sm:$0xff]
      %v2572 = vld [vmem:[%s2331 + $0x231] sm:$0xff]
      %v2573 = vld [vmem:[%s2331 + $0x241] sm:$0xff]
      %v2574 = vld [vmem:[%s2331 + $0x249] sm:$0xff]
      %v2575 = vld [vmem:[%s2331 + $0x259] sm:$0xff]
      %v2576 = vld [vmem:[%s2331 + $0x261] sm:$0xff]
      %v2577 = vld [vmem:[%s2331 + $0x271] sm:$0xff]
      %v2578 = vld [vmem:[%s2331 + $0x279] sm:$0xff]
      %v2579 = vld [vmem:[%s2331 + $0x289] sm:$0xff]
      %v2580 = vld [vmem:[%s2331 + $0x291] sm:$0xff]
      %v2581 = vld [vmem:[%s2331 + $0x2a1] sm:$0xff]
      %v2582 = vld [vmem:[%s2331 + $0x2a9] sm:$0xff]
      %v2583 = vld [vmem:[%s2331 + $0x2b9] sm:$0xff]
      %v2584 = vld [vmem:[%s2331 + $0x2c1] sm:$0xff]
      %v2585 = vld [vmem:[%s2331 + $0x2d1] sm:$0xff]
      %v2586 = vld [vmem:[%s2331 + $0x2d9] sm:$0xff]
      %v2587 = vld [vmem:[%s2331 + $0x2e9] sm:$0xff]
      %v2588 = vld [vmem:[%s2331 + $0x2f1] sm:$0xff]
      %v2589 = vld [vmem:[%s2331 + $0x301] sm:$0xff]
      %v2590 = vld [vmem:[%s2331 + $0x309] sm:$0xff]
      %v2591 = vld [vmem:[%s2331 + $0x319] sm:$0xff]
      %v2592 = vld [vmem:[%s2331 + $0x321] sm:$0xff]
      %v2593 = vld [vmem:[%s3 + $0x7] sm:$0x1]
      %v2594 = vlaneseq
      %v2595 = vshrl.u32 %v2594, 7
      %v2596 = vsub.s32 0, %v2595
      %v2597 = vrot.slane %v2593, %v2596
      %v2598 = vmul.f32 %v2529, %v2597
      %v2599 = vmul.f32 %v2530, %v2597
      %v2600 = vmul.f32 %v2531, %v2597
      %v2601 = vmul.f32 %v2532, %v2597
      %v2602 = vmul.f32 %v2533, %v2597
      %v2603 = vmul.f32 %v2534, %v2597
      %v2604 = vmul.f32 %v2535, %v2597
      %v2605 = vmul.f32 %v2536, %v2597
      %v2606 = vmul.f32 %v2537, %v2597
      %v2607 = vmul.f32 %v2538, %v2597
      %v2608 = vmul.f32 %v2539, %v2597
      %v2609 = vmul.f32 %v2540, %v2597
      %v2610 = vmul.f32 %v2541, %v2597
      %v2611 = vmul.f32 %v2542, %v2597
      %v2612 = vmul.f32 %v2543, %v2597
      %v2613 = vmul.f32 %v2544, %v2597
      %v2614 = vmul.f32 %v2545, %v2597
      %v2615 = vmul.f32 %v2546, %v2597
      %v2616 = vmul.f32 %v2547, %v2597
      %v2617 = vmul.f32 %v2548, %v2597
      %v2618 = vmul.f32 %v2549, %v2597
      %v2619 = vmul.f32 %v2550, %v2597
      %v2620 = vmul.f32 %v2551, %v2597
      %v2621 = vmul.f32 %v2552, %v2597
      %v2622 = vmul.f32 %v2553, %v2597
      %v2623 = vmul.f32 %v2554, %v2597
      %v2624 = vmul.f32 %v2555, %v2597
      %v2625 = vmul.f32 %v2556, %v2597
      %v2626 = vmul.f32 %v2557, %v2597
      %v2627 = vmul.f32 %v2558, %v2597
      %v2628 = vmul.f32 %v2559, %v2597
      %v2629 = vmul.f32 %v2560, %v2597
      %v2630 = vmul.f32 %v2561, %v2597
      %v2631 = vmul.f32 %v2562, %v2597
      %v2632 = vmul.f32 %v2563, %v2597
      %v2633 = vmul.f32 %v2564, %v2597
      %v2634 = vmul.f32 %v2565, %v2597
      %v2635 = vmul.f32 %v2566, %v2597
      %v2636 = vmul.f32 %v2567, %v2597
      %v2637 = vmul.f32 %v2568, %v2597
      %v2638 = vmul.f32 %v2569, %v2597
      %v2639 = vmul.f32 %v2570, %v2597
      %v2640 = vmul.f32 %v2571, %v2597
      %v2641 = vmul.f32 %v2572, %v2597
      %v2642 = vmul.f32 %v2573, %v2597
      %v2643 = vmul.f32 %v2574, %v2597
      %v2644 = vmul.f32 %v2575, %v2597
      %v2645 = vmul.f32 %v2576, %v2597
      %v2646 = vmul.f32 %v2577, %v2597
      %v2647 = vmul.f32 %v2578, %v2597
      %v2648 = vmul.f32 %v2579, %v2597
      %v2649 = vmul.f32 %v2580, %v2597
      %v2650 = vmul.f32 %v2581, %v2597
      %v2651 = vmul.f32 %v2582, %v2597
      %v2652 = vmul.f32 %v2583, %v2597
      %v2653 = vmul.f32 %v2584, %v2597
      %v2654 = vmul.f32 %v2585, %v2597
      %v2655 = vmul.f32 %v2586, %v2597
      %v2656 = vmul.f32 %v2587, %v2597
      %v2657 = vmul.f32 %v2588, %v2597
      %v2658 = vmul.f32 %v2589, %v2597
      %v2659 = vmul.f32 %v2590, %v2597
      %v2660 = vmul.f32 %v2591, %v2597
      %v2661 = vmul.f32 %v2592, %v2597
      %v2662 = vadd.f32 %v2465, %v2598
      %v2663 = vadd.f32 %v2466, %v2599
      %v2664 = vadd.f32 %v2467, %v2600
      %v2665 = vadd.f32 %v2468, %v2601
      %v2666 = vadd.f32 %v2469, %v2602
      %v2667 = vadd.f32 %v2470, %v2603
      %v2668 = vadd.f32 %v2471, %v2604
      %v2669 = vadd.f32 %v2472, %v2605
      %v2670 = vadd.f32 %v2473, %v2606
      %v2671 = vadd.f32 %v2474, %v2607
      %v2672 = vadd.f32 %v2475, %v2608
      %v2673 = vadd.f32 %v2476, %v2609
      %v2674 = vadd.f32 %v2477, %v2610
      %v2675 = vadd.f32 %v2478, %v2611
      %v2676 = vadd.f32 %v2479, %v2612
      %v2677 = vadd.f32 %v2480, %v2613
      %v2678 = vadd.f32 %v2481, %v2614
      %v2679 = vadd.f32 %v2482, %v2615
      %v2680 = vadd.f32 %v2483, %v2616
      %v2681 = vadd.f32 %v2484, %v2617
      %v2682 = vadd.f32 %v2485, %v2618
      %v2683 = vadd.f32 %v2486, %v2619
      %v2684 = vadd.f32 %v2487, %v2620
      %v2685 = vadd.f32 %v2488, %v2621
      %v2686 = vadd.f32 %v2489, %v2622
      %v2687 = vadd.f32 %v2490, %v2623
      %v2688 = vadd.f32 %v2491, %v2624
      %v2689 = vadd.f32 %v2492, %v2625
      %v2690 = vadd.f32 %v2493, %v2626
      %v2691 = vadd.f32 %v2494, %v2627
      %v2692 = vadd.f32 %v2495, %v2628
      %v2693 = vadd.f32 %v2496, %v2629
      %v2694 = vadd.f32 %v2497, %v2630
      %v2695 = vadd.f32 %v2498, %v2631
      %v2696 = vadd.f32 %v2499, %v2632
      %v2697 = vadd.f32 %v2500, %v2633
      %v2698 = vadd.f32 %v2501, %v2634
      %v2699 = vadd.f32 %v2502, %v2635
      %v2700 = vadd.f32 %v2503, %v2636
      %v2701 = vadd.f32 %v2504, %v2637
      %v2702 = vadd.f32 %v2505, %v2638
      %v2703 = vadd.f32 %v2506, %v2639
      %v2704 = vadd.f32 %v2507, %v2640
      %v2705 = vadd.f32 %v2508, %v2641
      %v2706 = vadd.f32 %v2509, %v2642
      %v2707 = vadd.f32 %v2510, %v2643
      %v2708 = vadd.f32 %v2511, %v2644
      %v2709 = vadd.f32 %v2512, %v2645
      %v2710 = vadd.f32 %v2513, %v2646
      %v2711 = vadd.f32 %v2514, %v2647
      %v2712 = vadd.f32 %v2515, %v2648
      %v2713 = vadd.f32 %v2516, %v2649
      %v2714 = vadd.f32 %v2517, %v2650
      %v2715 = vadd.f32 %v2518, %v2651
      %v2716 = vadd.f32 %v2519, %v2652
      %v2717 = vadd.f32 %v2520, %v2653
      %v2718 = vadd.f32 %v2521, %v2654
      %v2719 = vadd.f32 %v2522, %v2655
      %v2720 = vadd.f32 %v2523, %v2656
      %v2721 = vadd.f32 %v2524, %v2657
      %v2722 = vadd.f32 %v2525, %v2658
      %v2723 = vadd.f32 %v2526, %v2659
      %v2724 = vadd.f32 %v2527, %v2660
      %v2725 = vadd.f32 %v2528, %v2661
      %v2726 = vld [vmem:[%s2331 + $0x2] sm:$0xff]
      %v2727 = vld [vmem:[%s2331 + $0xa] sm:$0xff]
      %v2728 = vld [vmem:[%s2331 + $0x1a] sm:$0xff]
      %v2729 = vld [vmem:[%s2331 + $0x22] sm:$0xff]
      %v2730 = vld [vmem:[%s2331 + $0x32] sm:$0xff]
      %v2731 = vld [vmem:[%s2331 + $0x3a] sm:$0xff]
      %v2732 = vld [vmem:[%s2331 + $0x4a] sm:$0xff]
      %v2733 = vld [vmem:[%s2331 + $0x52] sm:$0xff]
      %v2734 = vld [vmem:[%s2331 + $0x62] sm:$0xff]
      %v2735 = vld [vmem:[%s2331 + $0x6a] sm:$0xff]
      %v2736 = vld [vmem:[%s2331 + $0x7a] sm:$0xff]
      %v2737 = vld [vmem:[%s2331 + $0x82] sm:$0xff]
      %v2738 = vld [vmem:[%s2331 + $0x92] sm:$0xff]
      %v2739 = vld [vmem:[%s2331 + $0x9a] sm:$0xff]
      %v2740 = vld [vmem:[%s2331 + $0xaa] sm:$0xff]
      %v2741 = vld [vmem:[%s2331 + $0xb2] sm:$0xff]
      %v2742 = vld [vmem:[%s2331 + $0xc2] sm:$0xff]
      %v2743 = vld [vmem:[%s2331 + $0xca] sm:$0xff]
      %v2744 = vld [vmem:[%s2331 + $0xda] sm:$0xff]
      %v2745 = vld [vmem:[%s2331 + $0xe2] sm:$0xff]
      %v2746 = vld [vmem:[%s2331 + $0xf2] sm:$0xff]
      %v2747 = vld [vmem:[%s2331 + $0xfa] sm:$0xff]
      %v2748 = vld [vmem:[%s2331 + $0x10a] sm:$0xff]
      %v2749 = vld [vmem:[%s2331 + $0x112] sm:$0xff]
      %v2750 = vld [vmem:[%s2331 + $0x122] sm:$0xff]
      %v2751 = vld [vmem:[%s2331 + $0x12a] sm:$0xff]
      %v2752 = vld [vmem:[%s2331 + $0x13a] sm:$0xff]
      %v2753 = vld [vmem:[%s2331 + $0x142] sm:$0xff]
      %v2754 = vld [vmem:[%s2331 + $0x152] sm:$0xff]
      %v2755 = vld [vmem:[%s2331 + $0x15a] sm:$0xff]
      %v2756 = vld [vmem:[%s2331 + $0x16a] sm:$0xff]
      %v2757 = vld [vmem:[%s2331 + $0x172] sm:$0xff]
      %v2758 = vld [vmem:[%s2331 + $0x1b2] sm:$0xff]
      %v2759 = vld [vmem:[%s2331 + $0x1ba] sm:$0xff]
      %v2760 = vld [vmem:[%s2331 + $0x1ca] sm:$0xff]
      %v2761 = vld [vmem:[%s2331 + $0x1d2] sm:$0xff]
      %v2762 = vld [vmem:[%s2331 + $0x1e2] sm:$0xff]
      %v2763 = vld [vmem:[%s2331 + $0x1ea] sm:$0xff]
      %v2764 = vld [vmem:[%s2331 + $0x1fa] sm:$0xff]
      %v2765 = vld [vmem:[%s2331 + $0x202] sm:$0xff]
      %v2766 = vld [vmem:[%s2331 + $0x212] sm:$0xff]
      %v2767 = vld [vmem:[%s2331 + $0x21a] sm:$0xff]
      %v2768 = vld [vmem:[%s2331 + $0x22a] sm:$0xff]
      %v2769 = vld [vmem:[%s2331 + $0x232] sm:$0xff]
      %v2770 = vld [vmem:[%s2331 + $0x242] sm:$0xff]
      %v2771 = vld [vmem:[%s2331 + $0x24a] sm:$0xff]
      %v2772 = vld [vmem:[%s2331 + $0x25a] sm:$0xff]
      %v2773 = vld [vmem:[%s2331 + $0x262] sm:$0xff]
      %v2774 = vld [vmem:[%s2331 + $0x272] sm:$0xff]
      %v2775 = vld [vmem:[%s2331 + $0x27a] sm:$0xff]
      %v2776 = vld [vmem:[%s2331 + $0x28a] sm:$0xff]
      %v2777 = vld [vmem:[%s2331 + $0x292] sm:$0xff]
      %v2778 = vld [vmem:[%s2331 + $0x2a2] sm:$0xff]
      %v2779 = vld [vmem:[%s2331 + $0x2aa] sm:$0xff]
      %v2780 = vld [vmem:[%s2331 + $0x2ba] sm:$0xff]
      %v2781 = vld [vmem:[%s2331 + $0x2c2] sm:$0xff]
      %v2782 = vld [vmem:[%s2331 + $0x2d2] sm:$0xff]
      %v2783 = vld [vmem:[%s2331 + $0x2da] sm:$0xff]
      %v2784 = vld [vmem:[%s2331 + $0x2ea] sm:$0xff]
      %v2785 = vld [vmem:[%s2331 + $0x2f2] sm:$0xff]
      %v2786 = vld [vmem:[%s2331 + $0x302] sm:$0xff]
      %v2787 = vld [vmem:[%s2331 + $0x30a] sm:$0xff]
      %v2788 = vld [vmem:[%s2331 + $0x31a] sm:$0xff]
      %v2789 = vld [vmem:[%s2331 + $0x322] sm:$0xff]
      %v2790 = vld [vmem:[%s3 + $0x8] sm:$0x1]
      %v2791 = vlaneseq
      %v2792 = vshrl.u32 %v2791, 7
      %v2793 = vsub.s32 0, %v2792
      %v2794 = vrot.slane %v2790, %v2793
      %v2795 = vmul.f32 %v2726, %v2794
      %v2796 = vmul.f32 %v2727, %v2794
      %v2797 = vmul.f32 %v2728, %v2794
      %v2798 = vmul.f32 %v2729, %v2794
      %v2799 = vmul.f32 %v2730, %v2794
      %v2800 = vmul.f32 %v2731, %v2794
      %v2801 = vmul.f32 %v2732, %v2794
      %v2802 = vmul.f32 %v2733, %v2794
      %v2803 = vmul.f32 %v2734, %v2794
      %v2804 = vmul.f32 %v2735, %v2794
      %v2805 = vmul.f32 %v2736, %v2794
      %v2806 = vmul.f32 %v2737, %v2794
      %v2807 = vmul.f32 %v2738, %v2794
      %v2808 = vmul.f32 %v2739, %v2794
      %v2809 = vmul.f32 %v2740, %v2794
      %v2810 = vmul.f32 %v2741, %v2794
      %v2811 = vmul.f32 %v2742, %v2794
      %v2812 = vmul.f32 %v2743, %v2794
      %v2813 = vmul.f32 %v2744, %v2794
      %v2814 = vmul.f32 %v2745, %v2794
      %v2815 = vmul.f32 %v2746, %v2794
      %v2816 = vmul.f32 %v2747, %v2794
      %v2817 = vmul.f32 %v2748, %v2794
      %v2818 = vmul.f32 %v2749, %v2794
      %v2819 = vmul.f32 %v2750, %v2794
      %v2820 = vmul.f32 %v2751, %v2794
      %v2821 = vmul.f32 %v2752, %v2794
      %v2822 = vmul.f32 %v2753, %v2794
      %v2823 = vmul.f32 %v2754, %v2794
      %v2824 = vmul.f32 %v2755, %v2794
      %v2825 = vmul.f32 %v2756, %v2794
      %v2826 = vmul.f32 %v2757, %v2794
      %v2827 = vmul.f32 %v2758, %v2794
      %v2828 = vmul.f32 %v2759, %v2794
      %v2829 = vmul.f32 %v2760, %v2794
      %v2830 = vmul.f32 %v2761, %v2794
      %v2831 = vmul.f32 %v2762, %v2794
      %v2832 = vmul.f32 %v2763, %v2794
      %v2833 = vmul.f32 %v2764, %v2794
      %v2834 = vmul.f32 %v2765, %v2794
      %v2835 = vmul.f32 %v2766, %v2794
      %v2836 = vmul.f32 %v2767, %v2794
      %v2837 = vmul.f32 %v2768, %v2794
      %v2838 = vmul.f32 %v2769, %v2794
      %v2839 = vmul.f32 %v2770, %v2794
      %v2840 = vmul.f32 %v2771, %v2794
      %v2841 = vmul.f32 %v2772, %v2794
      %v2842 = vmul.f32 %v2773, %v2794
      %v2843 = vmul.f32 %v2774, %v2794
      %v2844 = vmul.f32 %v2775, %v2794
      %v2845 = vmul.f32 %v2776, %v2794
      %v2846 = vmul.f32 %v2777, %v2794
      %v2847 = vmul.f32 %v2778, %v2794
      %v2848 = vmul.f32 %v2779, %v2794
      %v2849 = vmul.f32 %v2780, %v2794
      %v2850 = vmul.f32 %v2781, %v2794
      %v2851 = vmul.f32 %v2782, %v2794
      %v2852 = vmul.f32 %v2783, %v2794
      %v2853 = vmul.f32 %v2784, %v2794
      %v2854 = vmul.f32 %v2785, %v2794
      %v2855 = vmul.f32 %v2786, %v2794
      %v2856 = vmul.f32 %v2787, %v2794
      %v2857 = vmul.f32 %v2788, %v2794
      %v2858 = vmul.f32 %v2789, %v2794
      %v2859 = vadd.f32 %v2662, %v2795
      %v2860 = vadd.f32 %v2663, %v2796
      %v2861 = vadd.f32 %v2664, %v2797
      %v2862 = vadd.f32 %v2665, %v2798
      %v2863 = vadd.f32 %v2666, %v2799
      %v2864 = vadd.f32 %v2667, %v2800
      %v2865 = vadd.f32 %v2668, %v2801
      %v2866 = vadd.f32 %v2669, %v2802
      %v2867 = vadd.f32 %v2670, %v2803
      %v2868 = vadd.f32 %v2671, %v2804
      %v2869 = vadd.f32 %v2672, %v2805
      %v2870 = vadd.f32 %v2673, %v2806
      %v2871 = vadd.f32 %v2674, %v2807
      %v2872 = vadd.f32 %v2675, %v2808
      %v2873 = vadd.f32 %v2676, %v2809
      %v2874 = vadd.f32 %v2677, %v2810
      %v2875 = vadd.f32 %v2678, %v2811
      %v2876 = vadd.f32 %v2679, %v2812
      %v2877 = vadd.f32 %v2680, %v2813
      %v2878 = vadd.f32 %v2681, %v2814
      %v2879 = vadd.f32 %v2682, %v2815
      %v2880 = vadd.f32 %v2683, %v2816
      %v2881 = vadd.f32 %v2684, %v2817
      %v2882 = vadd.f32 %v2685, %v2818
      %v2883 = vadd.f32 %v2686, %v2819
      %v2884 = vadd.f32 %v2687, %v2820
      %v2885 = vadd.f32 %v2688, %v2821
      %v2886 = vadd.f32 %v2689, %v2822
      %v2887 = vadd.f32 %v2690, %v2823
      %v2888 = vadd.f32 %v2691, %v2824
      %v2889 = vadd.f32 %v2692, %v2825
      %v2890 = vadd.f32 %v2693, %v2826
      %v2891 = vadd.f32 %v2694, %v2827
      %v2892 = vadd.f32 %v2695, %v2828
      %v2893 = vadd.f32 %v2696, %v2829
      %v2894 = vadd.f32 %v2697, %v2830
      %v2895 = vadd.f32 %v2698, %v2831
      %v2896 = vadd.f32 %v2699, %v2832
      %v2897 = vadd.f32 %v2700, %v2833
      %v2898 = vadd.f32 %v2701, %v2834
      %v2899 = vadd.f32 %v2702, %v2835
      %v2900 = vadd.f32 %v2703, %v2836
      %v2901 = vadd.f32 %v2704, %v2837
      %v2902 = vadd.f32 %v2705, %v2838
      %v2903 = vadd.f32 %v2706, %v2839
      %v2904 = vadd.f32 %v2707, %v2840
      %v2905 = vadd.f32 %v2708, %v2841
      %v2906 = vadd.f32 %v2709, %v2842
      %v2907 = vadd.f32 %v2710, %v2843
      %v2908 = vadd.f32 %v2711, %v2844
      %v2909 = vadd.f32 %v2712, %v2845
      %v2910 = vadd.f32 %v2713, %v2846
      %v2911 = vadd.f32 %v2714, %v2847
      %v2912 = vadd.f32 %v2715, %v2848
      %v2913 = vadd.f32 %v2716, %v2849
      %v2914 = vadd.f32 %v2717, %v2850
      %v2915 = vadd.f32 %v2718, %v2851
      %v2916 = vadd.f32 %v2719, %v2852
      %v2917 = vadd.f32 %v2720, %v2853
      %v2918 = vadd.f32 %v2721, %v2854
      %v2919 = vadd.f32 %v2722, %v2855
      %v2920 = vadd.f32 %v2723, %v2856
      %v2921 = vadd.f32 %v2724, %v2857
      %v2922 = vadd.f32 %v2725, %v2858
      %v2923 = vld [vmem:[%s4] sm:$0x1]
      %v2925 = vlaneseq
      %v2926 = vshrl.u32 %v2925, 7
      %v2927 = vsub.s32 0, %v2926
      %v2928 = vrot.slane %v2923, %v2927
      %v2930 = vadd.f32 %v2859, %v2928
      %v2931 = vadd.f32 %v2860, %v2928
      %v2932 = vadd.f32 %v2861, %v2928
      %v2933 = vadd.f32 %v2862, %v2928
      %v2934 = vadd.f32 %v2863, %v2928
      %v2935 = vadd.f32 %v2864, %v2928
      %v2936 = vadd.f32 %v2865, %v2928
      %v2937 = vadd.f32 %v2866, %v2928
      %v2938 = vadd.f32 %v2867, %v2928
      %v2939 = vadd.f32 %v2868, %v2928
      %v2940 = vadd.f32 %v2869, %v2928
      %v2941 = vadd.f32 %v2870, %v2928
      %v2942 = vadd.f32 %v2871, %v2928
      %v2943 = vadd.f32 %v2872, %v2928
      %v2944 = vadd.f32 %v2873, %v2928
      %v2945 = vadd.f32 %v2874, %v2928
      %v2946 = vadd.f32 %v2875, %v2928
      %v2947 = vadd.f32 %v2876, %v2928
      %v2948 = vadd.f32 %v2877, %v2928
      %v2949 = vadd.f32 %v2878, %v2928
      %v2950 = vadd.f32 %v2879, %v2928
      %v2951 = vadd.f32 %v2880, %v2928
      %v2952 = vadd.f32 %v2881, %v2928
      %v2953 = vadd.f32 %v2882, %v2928
      %v2954 = vadd.f32 %v2883, %v2928
      %v2955 = vadd.f32 %v2884, %v2928
      %v2956 = vadd.f32 %v2885, %v2928
      %v2957 = vadd.f32 %v2886, %v2928
      %v2958 = vadd.f32 %v2887, %v2928
      %v2959 = vadd.f32 %v2888, %v2928
      %v2960 = vadd.f32 %v2889, %v2928
      %v2961 = vadd.f32 %v2890, %v2928
      %v2962 = vadd.f32 %v2891, %v2928
      %v2963 = vadd.f32 %v2892, %v2928
      %v2964 = vadd.f32 %v2893, %v2928
      %v2965 = vadd.f32 %v2894, %v2928
      %v2966 = vadd.f32 %v2895, %v2928
      %v2967 = vadd.f32 %v2896, %v2928
      %v2968 = vadd.f32 %v2897, %v2928
      %v2969 = vadd.f32 %v2898, %v2928
      %v2970 = vadd.f32 %v2899, %v2928
      %v2971 = vadd.f32 %v2900, %v2928
      %v2972 = vadd.f32 %v2901, %v2928
      %v2973 = vadd.f32 %v2902, %v2928
      %v2974 = vadd.f32 %v2903, %v2928
      %v2975 = vadd.f32 %v2904, %v2928
      %v2976 = vadd.f32 %v2905, %v2928
      %v2977 = vadd.f32 %v2906, %v2928
      %v2978 = vadd.f32 %v2907, %v2928
      %v2979 = vadd.f32 %v2908, %v2928
      %v2980 = vadd.f32 %v2909, %v2928
      %v2981 = vadd.f32 %v2910, %v2928
      %v2982 = vadd.f32 %v2911, %v2928
      %v2983 = vadd.f32 %v2912, %v2928
      %v2984 = vadd.f32 %v2913, %v2928
      %v2985 = vadd.f32 %v2914, %v2928
      %v2986 = vadd.f32 %v2915, %v2928
      %v2987 = vadd.f32 %v2916, %v2928
      %v2988 = vadd.f32 %v2917, %v2928
      %v2989 = vadd.f32 %v2918, %v2928
      %v2990 = vadd.f32 %v2919, %v2928
      %v2991 = vadd.f32 %v2920, %v2928
      %v2992 = vadd.f32 %v2921, %v2928
      %v2993 = vadd.f32 %v2922, %v2928
      %v2994 = vld [vmem:[%s5] sm:$0xf]
      %v2995 = vld [vmem:[%s6] sm:$0x1]
      %v2997 = vlaneseq
      %v2998 = vshrl.u32 %v2997, 7
      %v2999 = vsub.s32 0, %v2998
      %v3000 = vrot.slane %v2995, %v2999
      %v3003 = vsel %vm359, %v2930, 0
      %v3006 = vsel %vm359, %v2931, 0
      %v3009 = vsel %vm359, %v2932, 0
      %v3012 = vsel %vm359, %v2933, 0
      %v3015 = vsel %vm359, %v2934, 0
      %v3018 = vsel %vm359, %v2935, 0
      %v3021 = vsel %vm359, %v2936, 0
      %v3024 = vsel %vm359, %v2937, 0
      %v3027 = vsel %vm359, %v2938, 0
      %v3030 = vsel %vm359, %v2939, 0
      %v3033 = vsel %vm359, %v2940, 0
      %v3036 = vsel %vm359, %v2941, 0
      %v3039 = vsel %vm359, %v2942, 0
      %v3042 = vsel %vm359, %v2943, 0
      %v3045 = vsel %vm359, %v2944, 0
      %v3048 = vsel %vm359, %v2945, 0
      %v3051 = vsel %vm359, %v2946, 0
      %v3054 = vsel %vm359, %v2947, 0
      %v3057 = vsel %vm359, %v2948, 0
      %v3060 = vsel %vm359, %v2949, 0
      %v3063 = vsel %vm359, %v2950, 0
      %v3066 = vsel %vm359, %v2951, 0
      %v3069 = vsel %vm359, %v2952, 0
      %v3072 = vsel %vm359, %v2953, 0
      %v3075 = vsel %vm359, %v2954, 0
      %v3078 = vsel %vm359, %v2955, 0
      %v3081 = vsel %vm359, %v2956, 0
      %v3084 = vsel %vm359, %v2957, 0
      %v3087 = vsel %vm359, %v2958, 0
      %v3090 = vsel %vm359, %v2959, 0
      %v3093 = vsel %vm359, %v2960, 0
      %v3096 = vsel %vm359, %v2961, 0
      %v3099 = vsel %vm359, %v2962, 0
      %v3102 = vsel %vm359, %v2963, 0
      %v3105 = vsel %vm359, %v2964, 0
      %v3108 = vsel %vm359, %v2965, 0
      %v3111 = vsel %vm359, %v2966, 0
      %v3114 = vsel %vm359, %v2967, 0
      %v3117 = vsel %vm359, %v2968, 0
      %v3120 = vsel %vm359, %v2969, 0
      %v3123 = vsel %vm359, %v2970, 0
      %v3126 = vsel %vm359, %v2971, 0
      %v3129 = vsel %vm359, %v2972, 0
      %v3132 = vsel %vm359, %v2973, 0
      %v3135 = vsel %vm359, %v2974, 0
      %v3138 = vsel %vm359, %v2975, 0
      %v3141 = vsel %vm359, %v2976, 0
      %v3144 = vsel %vm359, %v2977, 0
      %v3147 = vsel %vm359, %v2978, 0
      %v3150 = vsel %vm359, %v2979, 0
      %v3153 = vsel %vm359, %v2980, 0
      %v3156 = vsel %vm359, %v2981, 0
      %v3159 = vsel %vm359, %v2982, 0
      %v3162 = vsel %vm359, %v2983, 0
      %v3165 = vsel %vm359, %v2984, 0
      %v3168 = vsel %vm359, %v2985, 0
      %v3171 = vsel %vm359, %v2986, 0
      %v3174 = vsel %vm359, %v2987, 0
      %v3177 = vsel %vm359, %v2988, 0
      %v3180 = vsel %vm359, %v2989, 0
      %v3183 = vsel %vm359, %v2990, 0
      %v3186 = vsel %vm359, %v2991, 0
      %v3189 = vsel %vm359, %v2992, 0
      %v3192 = vsel %vm359, %v2993, 0
      %v3195 = vsel %vm552, %v2994, 0
      %3197 = vmatprep.subr.mxu0 0.0
      %3198 = vmatpush1.msra.mxu0 0.0
      %3199 = vmatprep.subr.mxu0 0.0
      %3200 = vmatpush1.msra.mxu0 0.0
      %3201 = vmatprep.subr.mxu0 0.0
      %3202 = vmatpush1.msra.mxu0 0.0
      %3203 = vmatprep.subr.mxu0 0.0
      %3204 = vmatpush1.msra.mxu0 0.0
      %3205 = vmatprep.subr.mxu0 0.0
      %3206 = vmatpush1.msra.mxu0 0.0
      %3207 = vmatprep.subr.mxu0 0.0
      %3208 = vmatpush1.msra.mxu0 0.0
      %3209 = vmatprep.subr.mxu0 0.0
      %3210 = vmatpush1.msra.mxu0 0.0
      %3211 = vmatprep.subr.mxu0 0.0
      %3212 = vmatpush1.msra.mxu0 0.0
      %3213 = vmatprep.subr.mxu0 0.0
      %3214 = vmatpush1.msra.mxu0 0.0
      %3215 = vmatprep.subr.mxu0 0.0
      %3216 = vmatpush1.msra.mxu0 0.0
      %3217 = vmatprep.subr.mxu0 0.0
      %3218 = vmatpush1.msra.mxu0 0.0
      %3219 = vmatprep.subr.mxu0 0.0
      %3220 = vmatpush1.msra.mxu0 0.0
      %3221 = vmatprep.subr.mxu0 0.0
      %3222 = vmatpush1.msra.mxu0 0.0
      %3223 = vmatprep.subr.mxu0 0.0
      %3224 = vmatpush1.msra.mxu0 0.0
      %3225 = vmatprep.subr.mxu0 0.0
      %3226 = vmatpush1.msra.mxu0 0.0
      %3227 = vmatprep.subr.mxu0 0.0
      %3228 = vmatpush1.msra.mxu0 %v3195
      %3229 = vmatprep.subr.mxu0 0.0
      %3230 = vmatpush2.msra.mxu0 0.0
      %3231 = vmatprep.subr.mxu0 0.0
      %3232 = vmatpush2.msra.mxu0 0.0
      %3233 = vmatprep.subr.mxu0 0.0
      %3234 = vmatpush2.msra.mxu0 0.0
      %3235 = vmatprep.subr.mxu0 0.0
      %3236 = vmatpush2.msra.mxu0 0.0
      %3237 = vmatprep.subr.mxu0 0.0
      %3238 = vmatpush2.msra.mxu0 0.0
      %3239 = vmatprep.subr.mxu0 0.0
      %3240 = vmatpush2.msra.mxu0 0.0
      %3241 = vmatprep.subr.mxu0 0.0
      %3242 = vmatpush2.msra.mxu0 0.0
      %3243 = vmatprep.subr.mxu0 0.0
      %3244 = vmatpush2.msra.mxu0 0.0
      %3245 = vmatprep.subr.mxu0 0.0
      %3246 = vmatpush2.msra.mxu0 0.0
      %3247 = vmatprep.subr.mxu0 0.0
      %3248 = vmatpush2.msra.mxu0 0.0
      %3249 = vmatprep.subr.mxu0 0.0
      %3250 = vmatpush2.msra.mxu0 0.0
      %3251 = vmatprep.subr.mxu0 0.0
      %3252 = vmatpush2.msra.mxu0 0.0
      %3253 = vmatprep.subr.mxu0 0.0
      %3254 = vmatpush2.msra.mxu0 0.0
      %3255 = vmatprep.subr.mxu0 0.0
      %3256 = vmatpush2.msra.mxu0 0.0
      %3257 = vmatprep.subr.mxu0 0.0
      %3258 = vmatpush2.msra.mxu0 0.0
      %3259 = vmatprep.subr.mxu0 0.0
      %3260 = vmatpush2.msra.mxu0 0.0
      %3261 = vmatprep.mubr.f32.mxu0 0.0
      %3262 = vmatmul.mubr.f32.gmra.mxu0 %v3003
      %v3263 = vpop.f32.mrf.mxu0
      %v3264 = vadd.f32 %v3000, %v3263
      %v3265 = vpop.f32.mrf.mxu0
      %3266 = vmatprep.mubr.f32.mxu0 0.0
      %3267 = vmatmul.mubr.f32.gmra.mxu0 %v3006
      %v3268 = vpop.f32.mrf.mxu0
      %v3269 = vadd.f32 %v3000, %v3268
      %v3270 = vpop.f32.mrf.mxu0
      %3271 = vmatprep.mubr.f32.mxu0 0.0
      %3272 = vmatmul.mubr.f32.gmra.mxu0 %v3009
      %v3273 = vpop.f32.mrf.mxu0
      %v3274 = vadd.f32 %v3000, %v3273
      %v3275 = vpop.f32.mrf.mxu0
      %3276 = vmatprep.mubr.f32.mxu0 0.0
      %3277 = vmatmul.mubr.f32.gmra.mxu0 %v3012
      %v3278 = vpop.f32.mrf.mxu0
      %v3279 = vadd.f32 %v3000, %v3278
      %v3280 = vpop.f32.mrf.mxu0
      %3281 = vmatprep.mubr.f32.mxu0 0.0
      %3282 = vmatmul.mubr.f32.gmra.mxu0 %v3015
      %v3283 = vpop.f32.mrf.mxu0
      %v3284 = vadd.f32 %v3000, %v3283
      %v3285 = vpop.f32.mrf.mxu0
      %3286 = vmatprep.mubr.f32.mxu0 0.0
      %3287 = vmatmul.mubr.f32.gmra.mxu0 %v3018
      %v3288 = vpop.f32.mrf.mxu0
      %v3289 = vadd.f32 %v3000, %v3288
      %v3290 = vpop.f32.mrf.mxu0
      %3291 = vmatprep.mubr.f32.mxu0 0.0
      %3292 = vmatmul.mubr.f32.gmra.mxu0 %v3021
      %v3293 = vpop.f32.mrf.mxu0
      %v3294 = vadd.f32 %v3000, %v3293
      %v3295 = vpop.f32.mrf.mxu0
      %3296 = vmatprep.mubr.f32.mxu0 0.0
      %3297 = vmatmul.mubr.f32.gmra.mxu0 %v3024
      %v3298 = vpop.f32.mrf.mxu0
      %v3299 = vadd.f32 %v3000, %v3298
      %v3300 = vpop.f32.mrf.mxu0
      %3301 = vmatprep.mubr.f32.mxu0 0.0
      %3302 = vmatmul.mubr.f32.gmra.mxu0 %v3027
      %v3303 = vpop.f32.mrf.mxu0
      %v3304 = vadd.f32 %v3000, %v3303
      %v3305 = vpop.f32.mrf.mxu0
      %3306 = vmatprep.mubr.f32.mxu0 0.0
      %3307 = vmatmul.mubr.f32.gmra.mxu0 %v3030
      %v3308 = vpop.f32.mrf.mxu0
      %v3309 = vadd.f32 %v3000, %v3308
      %v3310 = vpop.f32.mrf.mxu0
      %3311 = vmatprep.mubr.f32.mxu0 0.0
      %3312 = vmatmul.mubr.f32.gmra.mxu0 %v3033
      %v3313 = vpop.f32.mrf.mxu0
      %v3314 = vadd.f32 %v3000, %v3313
      %v3315 = vpop.f32.mrf.mxu0
      %3316 = vmatprep.mubr.f32.mxu0 0.0
      %3317 = vmatmul.mubr.f32.gmra.mxu0 %v3036
      %v3318 = vpop.f32.mrf.mxu0
      %v3319 = vadd.f32 %v3000, %v3318
      %v3320 = vpop.f32.mrf.mxu0
      %3321 = vmatprep.mubr.f32.mxu0 0.0
      %3322 = vmatmul.mubr.f32.gmra.mxu0 %v3039
      %v3323 = vpop.f32.mrf.mxu0
      %v3324 = vadd.f32 %v3000, %v3323
      %v3325 = vpop.f32.mrf.mxu0
      %3326 = vmatprep.mubr.f32.mxu0 0.0
      %3327 = vmatmul.mubr.f32.gmra.mxu0 %v3042
      %v3328 = vpop.f32.mrf.mxu0
      %v3329 = vadd.f32 %v3000, %v3328
      %v3330 = vpop.f32.mrf.mxu0
      %3331 = vmatprep.mubr.f32.mxu0 0.0
      %3332 = vmatmul.mubr.f32.gmra.mxu0 %v3045
      %v3333 = vpop.f32.mrf.mxu0
      %v3334 = vadd.f32 %v3000, %v3333
      %v3335 = vpop.f32.mrf.mxu0
      %3336 = vmatprep.mubr.f32.mxu0 0.0
      %3337 = vmatmul.mubr.f32.gmra.mxu0 %v3048
      %v3338 = vpop.f32.mrf.mxu0
      %v3339 = vadd.f32 %v3000, %v3338
      %v3340 = vpop.f32.mrf.mxu0
      %3341 = vmatprep.mubr.f32.mxu0 0.0
      %3342 = vmatmul.mubr.f32.gmra.mxu0 %v3051
      %v3343 = vpop.f32.mrf.mxu0
      %v3344 = vadd.f32 %v3000, %v3343
      %v3345 = vpop.f32.mrf.mxu0
      %3346 = vmatprep.mubr.f32.mxu0 0.0
      %3347 = vmatmul.mubr.f32.gmra.mxu0 %v3054
      %v3348 = vpop.f32.mrf.mxu0
      %v3349 = vadd.f32 %v3000, %v3348
      %v3350 = vpop.f32.mrf.mxu0
      %3351 = vmatprep.mubr.f32.mxu0 0.0
      %3352 = vmatmul.mubr.f32.gmra.mxu0 %v3057
      %v3353 = vpop.f32.mrf.mxu0
      %v3354 = vadd.f32 %v3000, %v3353
      %v3355 = vpop.f32.mrf.mxu0
      %3356 = vmatprep.mubr.f32.mxu0 0.0
      %3357 = vmatmul.mubr.f32.gmra.mxu0 %v3060
      %v3358 = vpop.f32.mrf.mxu0
      %v3359 = vadd.f32 %v3000, %v3358
      %v3360 = vpop.f32.mrf.mxu0
      %3361 = vmatprep.mubr.f32.mxu0 0.0
      %3362 = vmatmul.mubr.f32.gmra.mxu0 %v3063
      %v3363 = vpop.f32.mrf.mxu0
      %v3364 = vadd.f32 %v3000, %v3363
      %v3365 = vpop.f32.mrf.mxu0
      %3366 = vmatprep.mubr.f32.mxu0 0.0
      %3367 = vmatmul.mubr.f32.gmra.mxu0 %v3066
      %v3368 = vpop.f32.mrf.mxu0
      %v3369 = vadd.f32 %v3000, %v3368
      %v3370 = vpop.f32.mrf.mxu0
      %3371 = vmatprep.mubr.f32.mxu0 0.0
      %3372 = vmatmul.mubr.f32.gmra.mxu0 %v3069
      %v3373 = vpop.f32.mrf.mxu0
      %v3374 = vadd.f32 %v3000, %v3373
      %v3375 = vpop.f32.mrf.mxu0
      %3376 = vmatprep.mubr.f32.mxu0 0.0
      %3377 = vmatmul.mubr.f32.gmra.mxu0 %v3072
      %v3378 = vpop.f32.mrf.mxu0
      %v3379 = vadd.f32 %v3000, %v3378
      %v3380 = vpop.f32.mrf.mxu0
      %3381 = vmatprep.mubr.f32.mxu0 0.0
      %3382 = vmatmul.mubr.f32.gmra.mxu0 %v3075
      %v3383 = vpop.f32.mrf.mxu0
      %v3384 = vadd.f32 %v3000, %v3383
      %v3385 = vpop.f32.mrf.mxu0
      %3386 = vmatprep.mubr.f32.mxu0 0.0
      %3387 = vmatmul.mubr.f32.gmra.mxu0 %v3078
      %v3388 = vpop.f32.mrf.mxu0
      %v3389 = vadd.f32 %v3000, %v3388
      %v3390 = vpop.f32.mrf.mxu0
      %3391 = vmatprep.mubr.f32.mxu0 0.0
      %3392 = vmatmul.mubr.f32.gmra.mxu0 %v3081
      %v3393 = vpop.f32.mrf.mxu0
      %v3394 = vadd.f32 %v3000, %v3393
      %v3395 = vpop.f32.mrf.mxu0
      %3396 = vmatprep.mubr.f32.mxu0 0.0
      %3397 = vmatmul.mubr.f32.gmra.mxu0 %v3084
      %v3398 = vpop.f32.mrf.mxu0
      %v3399 = vadd.f32 %v3000, %v3398
      %v3400 = vpop.f32.mrf.mxu0
      %3401 = vmatprep.mubr.f32.mxu0 0.0
      %3402 = vmatmul.mubr.f32.gmra.mxu0 %v3087
      %v3403 = vpop.f32.mrf.mxu0
      %v3404 = vadd.f32 %v3000, %v3403
      %v3405 = vpop.f32.mrf.mxu0
      %3406 = vmatprep.mubr.f32.mxu0 0.0
      %3407 = vmatmul.mubr.f32.gmra.mxu0 %v3090
      %v3408 = vpop.f32.mrf.mxu0
      %v3409 = vadd.f32 %v3000, %v3408
      %v3410 = vpop.f32.mrf.mxu0
      %3411 = vmatprep.mubr.f32.mxu0 0.0
      %3412 = vmatmul.mubr.f32.gmra.mxu0 %v3093
      %v3413 = vpop.f32.mrf.mxu0
      %v3414 = vadd.f32 %v3000, %v3413
      %v3415 = vpop.f32.mrf.mxu0
      %3416 = vmatprep.mubr.f32.mxu0 0.0
      %3417 = vmatmul.mubr.f32.gmra.mxu0 %v3096
      %v3418 = vpop.f32.mrf.mxu0
      %v3419 = vadd.f32 %v3000, %v3418
      %v3420 = vpop.f32.mrf.mxu0
      %3421 = vmatprep.mubr.f32.mxu0 0.0
      %3422 = vmatmul.mubr.f32.gmra.mxu0 %v3099
      %v3423 = vpop.f32.mrf.mxu0
      %v3424 = vadd.f32 %v3000, %v3423
      %v3425 = vpop.f32.mrf.mxu0
      %3426 = vmatprep.mubr.f32.mxu0 0.0
      %3427 = vmatmul.mubr.f32.gmra.mxu0 %v3102
      %v3428 = vpop.f32.mrf.mxu0
      %v3429 = vadd.f32 %v3000, %v3428
      %v3430 = vpop.f32.mrf.mxu0
      %3431 = vmatprep.mubr.f32.mxu0 0.0
      %3432 = vmatmul.mubr.f32.gmra.mxu0 %v3105
      %v3433 = vpop.f32.mrf.mxu0
      %v3434 = vadd.f32 %v3000, %v3433
      %v3435 = vpop.f32.mrf.mxu0
      %3436 = vmatprep.mubr.f32.mxu0 0.0
      %3437 = vmatmul.mubr.f32.gmra.mxu0 %v3108
      %v3438 = vpop.f32.mrf.mxu0
      %v3439 = vadd.f32 %v3000, %v3438
      %v3440 = vpop.f32.mrf.mxu0
      %3441 = vmatprep.mubr.f32.mxu0 0.0
      %3442 = vmatmul.mubr.f32.gmra.mxu0 %v3111
      %v3443 = vpop.f32.mrf.mxu0
      %v3444 = vadd.f32 %v3000, %v3443
      %v3445 = vpop.f32.mrf.mxu0
      %3446 = vmatprep.mubr.f32.mxu0 0.0
      %3447 = vmatmul.mubr.f32.gmra.mxu0 %v3114
      %v3448 = vpop.f32.mrf.mxu0
      %v3449 = vadd.f32 %v3000, %v3448
      %v3450 = vpop.f32.mrf.mxu0
      %3451 = vmatprep.mubr.f32.mxu0 0.0
      %3452 = vmatmul.mubr.f32.gmra.mxu0 %v3117
      %v3453 = vpop.f32.mrf.mxu0
      %v3454 = vadd.f32 %v3000, %v3453
      %v3455 = vpop.f32.mrf.mxu0
      %3456 = vmatprep.mubr.f32.mxu0 0.0
      %3457 = vmatmul.mubr.f32.gmra.mxu0 %v3120
      %v3458 = vpop.f32.mrf.mxu0
      %v3459 = vadd.f32 %v3000, %v3458
      %v3460 = vpop.f32.mrf.mxu0
      %3461 = vmatprep.mubr.f32.mxu0 0.0
      %3462 = vmatmul.mubr.f32.gmra.mxu0 %v3123
      %v3463 = vpop.f32.mrf.mxu0
      %v3464 = vadd.f32 %v3000, %v3463
      %v3465 = vpop.f32.mrf.mxu0
      %3466 = vmatprep.mubr.f32.mxu0 0.0
      %3467 = vmatmul.mubr.f32.gmra.mxu0 %v3126
      %v3468 = vpop.f32.mrf.mxu0
      %v3469 = vadd.f32 %v3000, %v3468
      %v3470 = vpop.f32.mrf.mxu0
      %3471 = vmatprep.mubr.f32.mxu0 0.0
      %3472 = vmatmul.mubr.f32.gmra.mxu0 %v3129
      %v3473 = vpop.f32.mrf.mxu0
      %v3474 = vadd.f32 %v3000, %v3473
      %v3475 = vpop.f32.mrf.mxu0
      %3476 = vmatprep.mubr.f32.mxu0 0.0
      %3477 = vmatmul.mubr.f32.gmra.mxu0 %v3132
      %v3478 = vpop.f32.mrf.mxu0
      %v3479 = vadd.f32 %v3000, %v3478
      %v3480 = vpop.f32.mrf.mxu0
      %3481 = vmatprep.mubr.f32.mxu0 0.0
      %3482 = vmatmul.mubr.f32.gmra.mxu0 %v3135
      %v3483 = vpop.f32.mrf.mxu0
      %v3484 = vadd.f32 %v3000, %v3483
      %v3485 = vpop.f32.mrf.mxu0
      %3486 = vmatprep.mubr.f32.mxu0 0.0
      %3487 = vmatmul.mubr.f32.gmra.mxu0 %v3138
      %v3488 = vpop.f32.mrf.mxu0
      %v3489 = vadd.f32 %v3000, %v3488
      %v3490 = vpop.f32.mrf.mxu0
      %3491 = vmatprep.mubr.f32.mxu0 0.0
      %3492 = vmatmul.mubr.f32.gmra.mxu0 %v3141
      %v3493 = vpop.f32.mrf.mxu0
      %v3494 = vadd.f32 %v3000, %v3493
      %v3495 = vpop.f32.mrf.mxu0
      %3496 = vmatprep.mubr.f32.mxu0 0.0
      %3497 = vmatmul.mubr.f32.gmra.mxu0 %v3144
      %v3498 = vpop.f32.mrf.mxu0
      %v3499 = vadd.f32 %v3000, %v3498
      %v3500 = vpop.f32.mrf.mxu0
      %3501 = vmatprep.mubr.f32.mxu0 0.0
      %3502 = vmatmul.mubr.f32.gmra.mxu0 %v3147
      %v3503 = vpop.f32.mrf.mxu0
      %v3504 = vadd.f32 %v3000, %v3503
      %v3505 = vpop.f32.mrf.mxu0
      %3506 = vmatprep.mubr.f32.mxu0 0.0
      %3507 = vmatmul.mubr.f32.gmra.mxu0 %v3150
      %v3508 = vpop.f32.mrf.mxu0
      %v3509 = vadd.f32 %v3000, %v3508
      %v3510 = vpop.f32.mrf.mxu0
      %3511 = vmatprep.mubr.f32.mxu0 0.0
      %3512 = vmatmul.mubr.f32.gmra.mxu0 %v3153
      %v3513 = vpop.f32.mrf.mxu0
      %v3514 = vadd.f32 %v3000, %v3513
      %v3515 = vpop.f32.mrf.mxu0
      %3516 = vmatprep.mubr.f32.mxu0 0.0
      %3517 = vmatmul.mubr.f32.gmra.mxu0 %v3156
      %v3518 = vpop.f32.mrf.mxu0
      %v3519 = vadd.f32 %v3000, %v3518
      %v3520 = vpop.f32.mrf.mxu0
      %3521 = vmatprep.mubr.f32.mxu0 0.0
      %3522 = vmatmul.mubr.f32.gmra.mxu0 %v3159
      %v3523 = vpop.f32.mrf.mxu0
      %v3524 = vadd.f32 %v3000, %v3523
      %v3525 = vpop.f32.mrf.mxu0
      %3526 = vmatprep.mubr.f32.mxu0 0.0
      %3527 = vmatmul.mubr.f32.gmra.mxu0 %v3162
      %v3528 = vpop.f32.mrf.mxu0
      %v3529 = vadd.f32 %v3000, %v3528
      %v3530 = vpop.f32.mrf.mxu0
      %3531 = vmatprep.mubr.f32.mxu0 0.0
      %3532 = vmatmul.mubr.f32.gmra.mxu0 %v3165
      %v3533 = vpop.f32.mrf.mxu0
      %v3534 = vadd.f32 %v3000, %v3533
      %v3535 = vpop.f32.mrf.mxu0
      %3536 = vmatprep.mubr.f32.mxu0 0.0
      %3537 = vmatmul.mubr.f32.gmra.mxu0 %v3168
      %v3538 = vpop.f32.mrf.mxu0
      %v3539 = vadd.f32 %v3000, %v3538
      %v3540 = vpop.f32.mrf.mxu0
      %3541 = vmatprep.mubr.f32.mxu0 0.0
      %3542 = vmatmul.mubr.f32.gmra.mxu0 %v3171
      %v3543 = vpop.f32.mrf.mxu0
      %v3544 = vadd.f32 %v3000, %v3543
      %v3545 = vpop.f32.mrf.mxu0
      %3546 = vmatprep.mubr.f32.mxu0 0.0
      %3547 = vmatmul.mubr.f32.gmra.mxu0 %v3174
      %v3548 = vpop.f32.mrf.mxu0
      %v3549 = vadd.f32 %v3000, %v3548
      %v3550 = vpop.f32.mrf.mxu0
      %3551 = vmatprep.mubr.f32.mxu0 0.0
      %3552 = vmatmul.mubr.f32.gmra.mxu0 %v3177
      %v3553 = vpop.f32.mrf.mxu0
      %v3554 = vadd.f32 %v3000, %v3553
      %v3555 = vpop.f32.mrf.mxu0
      %3556 = vmatprep.mubr.f32.mxu0 0.0
      %3557 = vmatmul.mubr.f32.gmra.mxu0 %v3180
      %v3558 = vpop.f32.mrf.mxu0
      %v3559 = vadd.f32 %v3000, %v3558
      %v3560 = vpop.f32.mrf.mxu0
      %3561 = vmatprep.mubr.f32.mxu0 0.0
      %3562 = vmatmul.mubr.f32.gmra.mxu0 %v3183
      %v3563 = vpop.f32.mrf.mxu0
      %v3564 = vadd.f32 %v3000, %v3563
      %v3565 = vpop.f32.mrf.mxu0
      %3566 = vmatprep.mubr.f32.mxu0 0.0
      %3567 = vmatmul.mubr.f32.gmra.mxu0 %v3186
      %v3568 = vpop.f32.mrf.mxu0
      %v3569 = vadd.f32 %v3000, %v3568
      %v3570 = vpop.f32.mrf.mxu0
      %3571 = vmatprep.mubr.f32.mxu0 0.0
      %3572 = vmatmul.mubr.f32.gmra.mxu0 %v3189
      %v3573 = vpop.f32.mrf.mxu0
      %v3574 = vadd.f32 %v3000, %v3573
      %v3575 = vpop.f32.mrf.mxu0
      %3576 = vmatprep.mubr.f32.mxu0 0.0
      %3577 = vmatmul.mubr.f32.gmra.mxu0 %v3192
      %v3578 = vpop.f32.mrf.mxu0
      %v3579 = vadd.f32 %v3000, %v3578
      %v3580 = vpop.f32.mrf.mxu0
      %3581 = vdwg.mxu0
      %v3582 = vadd.f32 %v3264, %v287
      %v3583 = vadd.f32 %v3269, %v288
      %v3584 = vadd.f32 %v3274, %v289
      %v3585 = vadd.f32 %v3279, %v290
      %v3586 = vadd.f32 %v3284, %v291
      %v3587 = vadd.f32 %v3289, %v292
      %v3588 = vadd.f32 %v3294, %v293
      %v3589 = vadd.f32 %v3299, %v294
      %v3590 = vadd.f32 %v3304, %v295
      %v3591 = vadd.f32 %v3309, %v296
      %v3592 = vadd.f32 %v3314, %v297
      %v3593 = vadd.f32 %v3319, %v298
      %v3594 = vadd.f32 %v3324, %v299
      %v3595 = vadd.f32 %v3329, %v300
      %v3596 = vadd.f32 %v3334, %v301
      %v3597 = vadd.f32 %v3339, %v302
      %v3598 = vadd.f32 %v3344, %v303
      %v3599 = vadd.f32 %v3349, %v304
      %v3600 = vadd.f32 %v3354, %v305
      %v3601 = vadd.f32 %v3359, %v306
      %v3602 = vadd.f32 %v3364, %v307
      %v3603 = vadd.f32 %v3369, %v308
      %v3604 = vadd.f32 %v3374, %v309
      %v3605 = vadd.f32 %v3379, %v310
      %v3606 = vadd.f32 %v3384, %v311
      %v3607 = vadd.f32 %v3389, %v312
      %v3608 = vadd.f32 %v3394, %v313
      %v3609 = vadd.f32 %v3399, %v314
      %v3610 = vadd.f32 %v3404, %v315
      %v3611 = vadd.f32 %v3409, %v316
      %v3612 = vadd.f32 %v3414, %v317
      %v3613 = vadd.f32 %v3419, %v318
      %v3614 = vadd.f32 %v3424, %v319
      %v3615 = vadd.f32 %v3429, %v320
      %v3616 = vadd.f32 %v3434, %v321
      %v3617 = vadd.f32 %v3439, %v322
      %v3618 = vadd.f32 %v3444, %v323
      %v3619 = vadd.f32 %v3449, %v324
      %v3620 = vadd.f32 %v3454, %v325
      %v3621 = vadd.f32 %v3459, %v326
      %v3622 = vadd.f32 %v3464, %v327
      %v3623 = vadd.f32 %v3469, %v328
      %v3624 = vadd.f32 %v3474, %v329
      %v3625 = vadd.f32 %v3479, %v330
      %v3626 = vadd.f32 %v3484, %v331
      %v3627 = vadd.f32 %v3489, %v332
      %v3628 = vadd.f32 %v3494, %v333
      %v3629 = vadd.f32 %v3499, %v334
      %v3630 = vadd.f32 %v3504, %v335
      %v3631 = vadd.f32 %v3509, %v336
      %v3632 = vadd.f32 %v3514, %v337
      %v3633 = vadd.f32 %v3519, %v338
      %v3634 = vadd.f32 %v3524, %v339
      %v3635 = vadd.f32 %v3529, %v340
      %v3636 = vadd.f32 %v3534, %v341
      %v3637 = vadd.f32 %v3539, %v342
      %v3638 = vadd.f32 %v3544, %v343
      %v3639 = vadd.f32 %v3549, %v344
      %v3640 = vadd.f32 %v3554, %v345
      %v3641 = vadd.f32 %v3559, %v346
      %v3642 = vadd.f32 %v3564, %v347
      %v3643 = vadd.f32 %v3569, %v348
      %v3644 = vadd.f32 %v3574, %v349
      %v3645 = vadd.f32 %v3579, %v350
      %v3646 = vmax.f32 %v3582, 0.0
      %v3647 = vmax.f32 %v3583, 0.0
      %v3648 = vmax.f32 %v3584, 0.0
      %v3649 = vmax.f32 %v3585, 0.0
      %v3650 = vmax.f32 %v3586, 0.0
      %v3651 = vmax.f32 %v3587, 0.0
      %v3652 = vmax.f32 %v3588, 0.0
      %v3653 = vmax.f32 %v3589, 0.0
      %v3654 = vmax.f32 %v3590, 0.0
      %v3655 = vmax.f32 %v3591, 0.0
      %v3656 = vmax.f32 %v3592, 0.0
      %v3657 = vmax.f32 %v3593, 0.0
      %v3658 = vmax.f32 %v3594, 0.0
      %v3659 = vmax.f32 %v3595, 0.0
      %v3660 = vmax.f32 %v3596, 0.0
      %v3661 = vmax.f32 %v3597, 0.0
      %v3662 = vmax.f32 %v3598, 0.0
      %v3663 = vmax.f32 %v3599, 0.0
      %v3664 = vmax.f32 %v3600, 0.0
      %v3665 = vmax.f32 %v3601, 0.0
      %v3666 = vmax.f32 %v3602, 0.0
      %v3667 = vmax.f32 %v3603, 0.0
      %v3668 = vmax.f32 %v3604, 0.0
      %v3669 = vmax.f32 %v3605, 0.0
      %v3670 = vmax.f32 %v3606, 0.0
      %v3671 = vmax.f32 %v3607, 0.0
      %v3672 = vmax.f32 %v3608, 0.0
      %v3673 = vmax.f32 %v3609, 0.0
      %v3674 = vmax.f32 %v3610, 0.0
      %v3675 = vmax.f32 %v3611, 0.0
      %v3676 = vmax.f32 %v3612, 0.0
      %v3677 = vmax.f32 %v3613, 0.0
      %v3678 = vmax.f32 %v3614, 0.0
      %v3679 = vmax.f32 %v3615, 0.0
      %v3680 = vmax.f32 %v3616, 0.0
      %v3681 = vmax.f32 %v3617, 0.0
      %v3682 = vmax.f32 %v3618, 0.0
      %v3683 = vmax.f32 %v3619, 0.0
      %v3684 = vmax.f32 %v3620, 0.0
      %v3685 = vmax.f32 %v3621, 0.0
      %v3686 = vmax.f32 %v3622, 0.0
      %v3687 = vmax.f32 %v3623, 0.0
      %v3688 = vmax.f32 %v3624, 0.0
      %v3689 = vmax.f32 %v3625, 0.0
      %v3690 = vmax.f32 %v3626, 0.0
      %v3691 = vmax.f32 %v3627, 0.0
      %v3692 = vmax.f32 %v3628, 0.0
      %v3693 = vmax.f32 %v3629, 0.0
      %v3694 = vmax.f32 %v3630, 0.0
      %v3695 = vmax.f32 %v3631, 0.0
      %v3696 = vmax.f32 %v3632, 0.0
      %v3697 = vmax.f32 %v3633, 0.0
      %v3698 = vmax.f32 %v3634, 0.0
      %v3699 = vmax.f32 %v3635, 0.0
      %v3700 = vmax.f32 %v3636, 0.0
      %v3701 = vmax.f32 %v3637, 0.0
      %v3702 = vmax.f32 %v3638, 0.0
      %v3703 = vmax.f32 %v3639, 0.0
      %v3704 = vmax.f32 %v3640, 0.0
      %v3705 = vmax.f32 %v3641, 0.0
      %v3706 = vmax.f32 %v3642, 0.0
      %v3707 = vmax.f32 %v3643, 0.0
      %v3708 = vmax.f32 %v3644, 0.0
      %v3709 = vmax.f32 %v3645, 0.0
      %3710 = vst.msk [vmem:[%s285] sm:$0xff] %vm359, %v3646
      %3711 = vst.msk [vmem:[%s285 + $0x8] sm:$0xff] %vm359, %v3647
      %3712 = vst.msk [vmem:[%s285 + $0x10] sm:$0xff] %vm359, %v3648
      %3713 = vst.msk [vmem:[%s285 + $0x18] sm:$0xff] %vm359, %v3649
      %3714 = vst.msk [vmem:[%s285 + $0x20] sm:$0xff] %vm359, %v3650
      %3715 = vst.msk [vmem:[%s285 + $0x28] sm:$0xff] %vm359, %v3651
      %3716 = vst.msk [vmem:[%s285 + $0x30] sm:$0xff] %vm359, %v3652
      %3717 = vst.msk [vmem:[%s285 + $0x38] sm:$0xff] %vm359, %v3653
      %3718 = vst.msk [vmem:[%s285 + $0x40] sm:$0xff] %vm359, %v3654
      %3719 = vst.msk [vmem:[%s285 + $0x48] sm:$0xff] %vm359, %v3655
      %3720 = vst.msk [vmem:[%s285 + $0x50] sm:$0xff] %vm359, %v3656
      %3721 = vst.msk [vmem:[%s285 + $0x58] sm:$0xff] %vm359, %v3657
      %3722 = vst.msk [vmem:[%s285 + $0x60] sm:$0xff] %vm359, %v3658
      %3723 = vst.msk [vmem:[%s285 + $0x68] sm:$0xff] %vm359, %v3659
      %3724 = vst.msk [vmem:[%s285 + $0x70] sm:$0xff] %vm359, %v3660
      %3725 = vst.msk [vmem:[%s285 + $0x78] sm:$0xff] %vm359, %v3661
      %3726 = vst.msk [vmem:[%s285 + $0x80] sm:$0xff] %vm359, %v3662
      %3727 = vst.msk [vmem:[%s285 + $0x88] sm:$0xff] %vm359, %v3663
      %3728 = vst.msk [vmem:[%s285 + $0x90] sm:$0xff] %vm359, %v3664
      %3729 = vst.msk [vmem:[%s285 + $0x98] sm:$0xff] %vm359, %v3665
      %3730 = vst.msk [vmem:[%s285 + $0xa0] sm:$0xff] %vm359, %v3666
      %3731 = vst.msk [vmem:[%s285 + $0xa8] sm:$0xff] %vm359, %v3667
      %3732 = vst.msk [vmem:[%s285 + $0xb0] sm:$0xff] %vm359, %v3668
      %3733 = vst.msk [vmem:[%s285 + $0xb8] sm:$0xff] %vm359, %v3669
      %3734 = vst.msk [vmem:[%s285 + $0xc0] sm:$0xff] %vm359, %v3670
      %3735 = vst.msk [vmem:[%s285 + $0xc8] sm:$0xff] %vm359, %v3671
      %3736 = vst.msk [vmem:[%s285 + $0xd0] sm:$0xff] %vm359, %v3672
      %3737 = vst.msk [vmem:[%s285 + $0xd8] sm:$0xff] %vm359, %v3673
      %3738 = vst.msk [vmem:[%s285 + $0xe0] sm:$0xff] %vm359, %v3674
      %3739 = vst.msk [vmem:[%s285 + $0xe8] sm:$0xff] %vm359, %v3675
      %3740 = vst.msk [vmem:[%s285 + $0xf0] sm:$0xff] %vm359, %v3676
      %3741 = vst.msk [vmem:[%s285 + $0xf8] sm:$0xff] %vm359, %v3677
      %3742 = vst.msk [vmem:[%s285 + $0x100] sm:$0xff] %vm359, %v3678
      %3743 = vst.msk [vmem:[%s285 + $0x108] sm:$0xff] %vm359, %v3679
      %3744 = vst.msk [vmem:[%s285 + $0x110] sm:$0xff] %vm359, %v3680
      %3745 = vst.msk [vmem:[%s285 + $0x118] sm:$0xff] %vm359, %v3681
      %3746 = vst.msk [vmem:[%s285 + $0x120] sm:$0xff] %vm359, %v3682
      %3747 = vst.msk [vmem:[%s285 + $0x128] sm:$0xff] %vm359, %v3683
      %3748 = vst.msk [vmem:[%s285 + $0x130] sm:$0xff] %vm359, %v3684
      %3749 = vst.msk [vmem:[%s285 + $0x138] sm:$0xff] %vm359, %v3685
      %3750 = vst.msk [vmem:[%s285 + $0x140] sm:$0xff] %vm359, %v3686
      %3751 = vst.msk [vmem:[%s285 + $0x148] sm:$0xff] %vm359, %v3687
      %3752 = vst.msk [vmem:[%s285 + $0x150] sm:$0xff] %vm359, %v3688
      %3753 = vst.msk [vmem:[%s285 + $0x158] sm:$0xff] %vm359, %v3689
      %3754 = vst.msk [vmem:[%s285 + $0x160] sm:$0xff] %vm359, %v3690
      %3755 = vst.msk [vmem:[%s285 + $0x168] sm:$0xff] %vm359, %v3691
      %3756 = vst.msk [vmem:[%s285 + $0x170] sm:$0xff] %vm359, %v3692
      %3757 = vst.msk [vmem:[%s285 + $0x178] sm:$0xff] %vm359, %v3693
      %3758 = vst.msk [vmem:[%s285 + $0x180] sm:$0xff] %vm359, %v3694
      %3759 = vst.msk [vmem:[%s285 + $0x188] sm:$0xff] %vm359, %v3695
      %3760 = vst.msk [vmem:[%s285 + $0x190] sm:$0xff] %vm359, %v3696
      %3761 = vst.msk [vmem:[%s285 + $0x198] sm:$0xff] %vm359, %v3697
      %3762 = vst.msk [vmem:[%s285 + $0x1a0] sm:$0xff] %vm359, %v3698
      %3763 = vst.msk [vmem:[%s285 + $0x1a8] sm:$0xff] %vm359, %v3699
      %3764 = vst.msk [vmem:[%s285 + $0x1b0] sm:$0xff] %vm359, %v3700
      %3765 = vst.msk [vmem:[%s285 + $0x1b8] sm:$0xff] %vm359, %v3701
      %3766 = vst.msk [vmem:[%s285 + $0x1c0] sm:$0xff] %vm359, %v3702
      %3767 = vst.msk [vmem:[%s285 + $0x1c8] sm:$0xff] %vm359, %v3703
      %3768 = vst.msk [vmem:[%s285 + $0x1d0] sm:$0xff] %vm359, %v3704
      %3769 = vst.msk [vmem:[%s285 + $0x1d8] sm:$0xff] %vm359, %v3705
      %3770 = vst.msk [vmem:[%s285 + $0x1e0] sm:$0xff] %vm359, %v3706
      %3771 = vst.msk [vmem:[%s285 + $0x1e8] sm:$0xff] %vm359, %v3707
      %3772 = vst.msk [vmem:[%s285 + $0x1f0] sm:$0xff] %vm359, %v3708
      %3773 = vst.msk [vmem:[%s285 + $0x1f8] sm:$0xff] %vm359, %v3709
      %s3774 = smul.u32 2, %s18
      %p3775 = scmp.lt.s32.totalorder %s3774, 3
      %s3776 = scalar_select %p3775, %s3774, 3
      %s3777 = smul.addr %s3776, 32
      %s3778 = smul.addr %s3777, 8
      %s3779 = scalar_lea.vmem %s7, %s3778
      // Predicated region
      $region49: #{tpu_custom_call.1} parent=47 // pred_check
        %p3780 = pneg %p188
      $region50: #{tpu_custom_call.1} parent=47 // pred_check_branch
        %3782 = sbr.rel (%p3780) target = $region52
      $region51: #{tpu_custom_call.1} parent=47 // pred_region
        %s3783 = smul.u32 2, %s18
      $region52: #{tpu_custom_call.1} parent=47 // pred_fallthru
        _
    $region48: #{tpu_custom_call.1} parent=5 // pred_fallthru
      _
    %p3784 = scmp.le.s32.totalorder 2, %s13
    // Predicated region
    $region53: #{tpu_custom_call.1} parent=5 // pred_check
      %p3785 = pneg %p3784
    $region54: #{tpu_custom_call.1} parent=5 // pred_check_branch
      %3787 = sbr.rel (%p3785) target = $region56
    $region55: #{tpu_custom_call.1} parent=5 // pred_region
      %s3788 = ssub.s32 %s13, 2
      // Predicated region
      $region57: #{tpu_custom_call.1} parent=55 // pred_check
        %p3789 = pneg %p194
      $region58: #{tpu_custom_call.1} parent=55 // pred_check_branch
        %3791 = sbr.rel (%p3789) target = $region60
      $region59: #{tpu_custom_call.1} parent=55 // pred_region
        %s3792 = smul.u32 2, %s19
        %p3793 = scmp.lt.s32.totalorder %s3792, 3
        %s3794 = scalar_select %p3793, %s3792, 3
        %s3795 = smul.addr %s3794, 32
        %s3796 = smul.addr %s3795, 8
        %s3797 = scalar_lea.vmem %s7, %s3796
      $region60: #{tpu_custom_call.1} parent=55 // pred_fallthru
        _
    $region56: #{tpu_custom_call.1} parent=5 // pred_fallthru
      _
  $region6: #{tpu_custom_call.1} parent=0 // loop_footer
    %s17 = sadd.s32 1, %s13
  $region7: #{tpu_custom_call.1} parent=0 // loop_footer_branch
    %12 = sbr.rel target = $region3
  $region8: #{tpu_custom_call.1} parent=0 // loop_exit
    _

</llo_original>
